<compile_context>
chip_gen: v7x
topology: tpu7x:2x2x1
jax: 0.10.0
libtpu: 0.0.40
codegen_flags: <defaults>
</compile_context>

<pallas_src>
import math

import jax
import jax.numpy as jnp
from jax.experimental import pallas as pl
from jax.experimental.pallas import tpu as pltpu

# ---------------- config (small synthetic shapes) ----------------
B, S, D = 2, 8, 32          # batch, seq, hidden_size
H = 4                       # num attention heads
HD = D // H                 # head_dim
I = 64                      # MLP intermediate size
EPS = 1e-6                  # rms_norm_eps

assert D == H * HD and HD % 2 == 0, "RoPE roll trick requires even head_dim"


# ---------------- fused block kernel ----------------
def block_kernel(x_ref, ln1_ref, wq_ref, wk_ref, wv_ref, cos_ref, sin_ref,
                 bias_ref, wo_ref, ln2_ref, wg_ref, wu_ref, wd_ref, o_ref):
    m, d = x_ref.shape
    n_heads, _, hd = wq_ref.shape
    cdt = wq_ref.dtype                      # MXU operand dtype (bf16 at real dims)

    x = x_ref[...].astype(jnp.float32)      # (M, D); elementwise math in f32

    def rmsnorm(t, w_ref):
        w = w_ref[...].astype(jnp.float32)  # (1, D)
        var = jnp.mean(t * t, axis=-1, keepdims=True)
        return t * jax.lax.rsqrt(var + EPS) * w

    # ---- attention branch ----
    normed = rmsnorm(x, ln1_ref).astype(cdt)            # matmul operand dtype

    cos = cos_ref[...].astype(jnp.float32)              # (M, HD)
    sin_s = sin_ref[...].astype(jnp.float32)            # sign-folded sin (M, HD)
    bias = bias_ref[...]                                # (M, M) additive mask

    half = hd // 2

    def rope(t):
        # rotate_half via one XLU lane roll within the head; the +/- sign of
        # the rotated half is folded into sin_s at init time.
        return t * cos + pltpu.roll(t, shift=half, axis=1) * sin_s

    scale = 1.0 / math.sqrt(hd)
    contract_last = (((1,), (1,)), ((), ()))            # q @ k^T, no explicit .T

    attn_proj = jnp.zeros((m, d), jnp.float32)
    for h in range(n_heads):                            # short unrolled loop
        # per-head projections: leading-dim ref indexing, no lane slices
        qh = rope(jnp.dot(normed, wq_ref[h], preferred_element_type=jnp.float32))
        kh = rope(jnp.dot(normed, wk_ref[h], preferred_element_type=jnp.float32))
        vh = jnp.dot(normed, wv_ref[h], preferred_element_type=jnp.float32)

        s = jax.lax.dot_general(qh.astype(cdt), kh.astype(cdt), contract_last,
                                preferred_element_type=jnp.float32)
        s = s * scale + bias                             # block-diag causal mask
        mx = jnp.max(s, axis=-1, keepdims=True)
        p = jnp.exp(s - mx)
        denom = jnp.sum(p, axis=-1, keepdims=True)
        p = p * pl.reciprocal(denom, approx=False)       # exact (accuracy)

        ah = jnp.dot(p.astype(cdt), vh.astype(cdt),
                     preferred_element_type=jnp.float32)              # (M, HD)
        # output projection accumulated per head -> no concat of head outputs
        attn_proj = attn_proj + jnp.dot(ah.astype(cdt), wo_ref[h],
                                        preferred_element_type=jnp.float32)

    h1 = x + attn_proj                                   # residual (f32)

    # ---- MLP branch (second RMSNorm + SwiGLU + residual, all fused) ----
    normed2 = rmsnorm(h1, ln2_ref).astype(cdt)
    g = jnp.dot(normed2, wg_ref[...], preferred_element_type=jnp.float32)
    u = jnp.dot(normed2, wu_ref[...], preferred_element_type=jnp.float32)
    act = (g * jax.nn.sigmoid(g) * u).astype(cdt)        # SiLU(gate) * up
    out = h1 + jnp.dot(act, wd_ref[...], preferred_element_type=jnp.float32)

    o_ref[...] = out.astype(o_ref.dtype)


# ---------------- one-time (init) preparation, hoisted out of forward ----------------
def prepare_block_inputs(params, freqs, batch, seq):
    d = params["wq"].shape[0]
    hd = d // H

    # Per-head projection weights: (H, D, HD) so the kernel indexes the leading
    # dim (free) instead of lane-slicing a fused QKV output.
    wq_h = params["wq"].reshape(d, H, hd).transpose(1, 0, 2)
    wk_h = params["wk"].reshape(d, H, hd).transpose(1, 0, 2)
    wv_h = params["wv"].reshape(d, H, hd).transpose(1, 0, 2)
    # Output projection split by head rows: (H, HD, D); summing per-head
    # products reproduces concat(heads) @ wo.
    wo_h = params["wo"].reshape(H, hd, d)

    # RoPE tables tiled over the collapsed batch dim; rotate_half sign folded
    # into the sin table (sign = -1 on the lower half, +1 on the upper half).
    cos = jnp.tile(jnp.cos(freqs), (batch, 1))                       # (B*S, HD)
    sign = jnp.where(jnp.arange(hd) >= hd // 2, 1.0, -1.0).astype(freqs.dtype)
    sin_s = jnp.tile(jnp.sin(freqs) * sign[None, :], (batch, 1))     # (B*S, HD)

    # Block-diagonal AND causal additive mask over the collapsed (B*S) tokens.
    idx = jnp.arange(batch * seq)
    same_batch = (idx[:, None] // seq) == (idx[None, :] // seq)
    causal = (idx[None, :] % seq) <= (idx[:, None] % seq)
    bias = jnp.where(same_batch & causal, 0.0, -1e30).astype(jnp.float32)

    return {
        "ln1": params["ln1_w"].reshape(1, d),
        "ln2": params["ln2_w"].reshape(1, d),
        "wq_h": wq_h, "wk_h": wk_h, "wv_h": wv_h, "wo_h": wo_h,
        "wg": params["wg"], "wu": params["wu"], "wd": params["wd"],
        "cos": cos, "sin": sin_s, "bias": bias,
    }


# ---------------- wrapper ----------------
def block_pallas(x, prep):
    b, s, d = x.shape
    m = b * s
    x2 = x.reshape(m, d)        # collapse batch into the matmul M dimension

    def full(shape):
        return pl.BlockSpec(shape, lambda i, _n=len(shape): (0,) * _n)

    out = pl.pallas_call(
        block_kernel,
        grid=(1,),
        in_specs=[
            full((m, d)),                  # x  (B*S, D)
            full((1, d)),                  # ln1_w
            full(prep["wq_h"].shape),      # (H, D, HD)
            full(prep["wk_h"].shape),      # (H, D, HD)
            full(prep["wv_h"].shape),      # (H, D, HD)
            full(prep["cos"].shape),       # (B*S, HD)
            full(prep["sin"].shape),       # (B*S, HD)
            full(prep["bias"].shape),      # (B*S, B*S)
            full(prep["wo_h"].shape),      # (H, HD, D)
            full((1, d)),                  # ln2_w
            full(prep["wg"].shape),        # (D, I)
            full(prep["wu"].shape),        # (D, I)
            full(prep["wd"].shape),        # (I, D)
        ],
        out_specs=full((m, d)),
        out_shape=jax.ShapeDtypeStruct((m, d), x.dtype),
        compiler_params=pltpu.CompilerParams(
            dimension_semantics=("arbitrary",),
            vmem_limit_bytes=32 * 1024 * 1024,
        ),
    )(x2, prep["ln1"], prep["wq_h"], prep["wk_h"], prep["wv_h"],
      prep["cos"], prep["sin"], prep["bias"], prep["wo_h"],
      prep["ln2"], prep["wg"], prep["wu"], prep["wd"])
    return out.reshape(b, s, d)


# TODO(synk): past_kv (KV cache), attn_mask and cache_position are not modeled;
# this implements the training-style forward with a causal mask only.
block_forward = jax.jit(block_pallas)


# ---------------- pure-JAX reference (for sanity check) ----------------
def ref_forward(x, freqs, params):
    def rms(t, w):
        var = jnp.mean(t * t, axis=-1, keepdims=True)
        return t * jax.lax.rsqrt(var + EPS) * w

    b, s, d = x.shape
    x2d = x.reshape(b * s, d)
    normed = rms(x2d, params["ln1_w"])
    q = (normed @ params["wq"]).reshape(b, s, H, HD).transpose(0, 2, 1, 3)
    k = (normed @ params["wk"]).reshape(b, s, H, HD).transpose(0, 2, 1, 3)
    v = (normed @ params["wv"]).reshape(b, s, H, HD).transpose(0, 2, 1, 3)

    cos, sin = jnp.cos(freqs), jnp.sin(freqs)

    def rope(t):
        t1, t2 = t[..., : HD // 2], t[..., HD // 2:]
        return t * cos + jnp.concatenate([-t2, t1], axis=-1) * sin

    q, k = rope(q), rope(k)
    scores = jnp.einsum("bhqd,bhkd->bhqk", q, k) / math.sqrt(HD)
    mask = jnp.tril(jnp.ones((s, s), dtype=bool))
    scores = jnp.where(mask, scores, -jnp.inf)
    p = jax.nn.softmax(scores, axis=-1)
    o = jnp.einsum("bhqk,bhkd->bhqd", p, v)
    o = o.transpose(0, 2, 1, 3).reshape(b * s, d) @ params["wo"]
    h = x2d + o

    hn = rms(h, params["ln2_w"])
    g = hn @ params["wg"]
    u = hn @ params["wu"]
    out = h + (g * jax.nn.sigmoid(g) * u) @ params["wd"]
    return out.reshape(b, s, d)


# ---------------- main ----------------
if __name__ == "__main__":
    key = jax.random.PRNGKey(0)
    ks = jax.random.split(key, 9)

    def w_init(k, shape, scale=0.05):
        return (scale * jax.random.normal(k, shape)).astype(jnp.float32)

    params = {
        "ln1_w": jnp.ones((D,), jnp.float32),
        "ln2_w": jnp.ones((D,), jnp.float32),
        "wq": w_init(ks[0], (D, D)),
        "wk": w_init(ks[1], (D, D)),
        "wv": w_init(ks[2], (D, D)),
        "wo": w_init(ks[3], (D, D)),
        "wg": w_init(ks[4], (D, I)),
        "wu": w_init(ks[5], (D, I)),
        "wd": w_init(ks[6], (I, D)),
    }

    x = jax.random.normal(ks[7], (B, S, D), dtype=jnp.float32)

    # RoPE angles: [S, HD] (angles duplicated across halves, Llama convention)
    pos = jnp.arange(S, dtype=jnp.float32)
    inv_freq = 1.0 / (10000.0 ** (jnp.arange(0, HD, 2, dtype=jnp.float32) / HD))
    ang = pos[:, None] * inv_freq[None, :]
    freqs = jnp.concatenate([ang, ang], axis=-1)          # [S, HD]

    # One-time init prep (hoisted out of the per-call forward path).
    prep = prepare_block_inputs(params, freqs, B, S)

    out = block_forward(x, prep)
    out = jax.block_until_ready(out)

    ref = ref_forward(x, freqs, params)
    assert out.shape == (B, S, D)
    assert jnp.allclose(out, ref, atol=2e-3, rtol=2e-3), "mismatch vs reference"

    print("KERNEL_OK")
</pallas_src>

<mosaic_0001>
module attributes {stable_mosaic.version = 11 : i64} {
  func.func @block_kernel(%arg0: i32, %arg1: memref<16x32xf32, #tpu.memory_space<vmem>>, %arg2: memref<1x32xf32, #tpu.memory_space<vmem>>, %arg3: memref<4x32x8xf32, #tpu.memory_space<vmem>>, %arg4: memref<4x32x8xf32, #tpu.memory_space<vmem>>, %arg5: memref<4x32x8xf32, #tpu.memory_space<vmem>>, %arg6: memref<16x8xf32, #tpu.memory_space<vmem>>, %arg7: memref<16x8xf32, #tpu.memory_space<vmem>>, %arg8: memref<16x16xf32, #tpu.memory_space<vmem>>, %arg9: memref<4x8x32xf32, #tpu.memory_space<vmem>>, %arg10: memref<1x32xf32, #tpu.memory_space<vmem>>, %arg11: memref<32x64xf32, #tpu.memory_space<vmem>>, %arg12: memref<32x64xf32, #tpu.memory_space<vmem>>, %arg13: memref<64x32xf32, #tpu.memory_space<vmem>>, %arg14: memref<16x32xf32, #tpu.memory_space<vmem>>) attributes {dimension_semantics = [#tpu.dimension_semantics<arbitrary>], iteration_bounds = array<i64: 1>, scalar_prefetch = 0 : i64, scratch_operands = 0 : i64, tpu.core_type = #tpu.core_type<tc>, window_params = [{pipeline_mode = #tpu.pipeline_mode<synchronous>, transform_indices = @transform_0, window_bounds = array<i64: 16, 32>}, {pipeline_mode = #tpu.pipeline_mode<synchronous>, transform_indices = @transform_1, window_bounds = array<i64: 1, 32>}, {pipeline_mode = #tpu.pipeline_mode<synchronous>, transform_indices = @transform_2, window_bounds = array<i64: 4, 32, 8>}, {pipeline_mode = #tpu.pipeline_mode<synchronous>, transform_indices = @transform_3, window_bounds = array<i64: 4, 32, 8>}, {pipeline_mode = #tpu.pipeline_mode<synchronous>, transform_indices = @transform_4, window_bounds = array<i64: 4, 32, 8>}, {pipeline_mode = #tpu.pipeline_mode<synchronous>, transform_indices = @transform_5, window_bounds = array<i64: 16, 8>}, {pipeline_mode = #tpu.pipeline_mode<synchronous>, transform_indices = @transform_6, window_bounds = array<i64: 16, 8>}, {pipeline_mode = #tpu.pipeline_mode<synchronous>, transform_indices = @transform_7, window_bounds = array<i64: 16, 16>}, {pipeline_mode = #tpu.pipeline_mode<synchronous>, transform_indices = @transform_8, window_bounds = array<i64: 4, 8, 32>}, {pipeline_mode = #tpu.pipeline_mode<synchronous>, transform_indices = @transform_9, window_bounds = array<i64: 1, 32>}, {pipeline_mode = #tpu.pipeline_mode<synchronous>, transform_indices = @transform_10, window_bounds = array<i64: 32, 64>}, {pipeline_mode = #tpu.pipeline_mode<synchronous>, transform_indices = @transform_11, window_bounds = array<i64: 32, 64>}, {pipeline_mode = #tpu.pipeline_mode<synchronous>, transform_indices = @transform_12, window_bounds = array<i64: 64, 32>}, {pipeline_mode = #tpu.pipeline_mode<synchronous>, transform_indices = @transform_13, window_bounds = array<i64: 16, 32>}]} {
    %c0 = arith.constant 0 : index
    %c0_0 = arith.constant 0 : index
    %0 = vector.load %arg1[%c0, %c0_0] : memref<16x32xf32, #tpu.memory_space<vmem>>, vector<16x32xf32>
    %c0_1 = arith.constant 0 : index
    %c0_2 = arith.constant 0 : index
    %1 = vector.load %arg2[%c0_1, %c0_2] : memref<1x32xf32, #tpu.memory_space<vmem>>, vector<1x32xf32>
    %2 = arith.mulf %0, %0 : vector<16x32xf32>
    %cst = arith.constant dense<0.000000e+00> : vector<16xf32>
    %3 = vector.multi_reduction <add>, %2, %cst [1] : vector<16x32xf32> to vector<16xf32>
    %4 = vector.shape_cast %3 : vector<16xf32> to vector<16x1xf32>
    %cst_3 = arith.constant 3.200000e+01 : f32
    %5 = vector.broadcast %cst_3 : f32 to vector<16x1xf32>
    %6 = arith.divf %4, %5 : vector<16x1xf32>
    %cst_4 = arith.constant 9.99999997E-7 : f32
    %7 = vector.broadcast %cst_4 : f32 to vector<16x1xf32>
    %8 = arith.addf %6, %7 : vector<16x1xf32>
    %9 = math.rsqrt %8 : vector<16x1xf32>
    %10 = vector.broadcast %9 : vector<16x1xf32> to vector<16x32xf32>
    %11 = arith.mulf %0, %10 : vector<16x32xf32>
    %12 = vector.broadcast %1 : vector<1x32xf32> to vector<16x32xf32>
    %13 = arith.mulf %11, %12 : vector<16x32xf32>
    %c0_5 = arith.constant 0 : index
    %c0_6 = arith.constant 0 : index
    %14 = vector.load %arg6[%c0_5, %c0_6] : memref<16x8xf32, #tpu.memory_space<vmem>>, vector<16x8xf32>
    %c0_7 = arith.constant 0 : index
    %c0_8 = arith.constant 0 : index
    %15 = vector.load %arg7[%c0_7, %c0_8] : memref<16x8xf32, #tpu.memory_space<vmem>>, vector<16x8xf32>
    %c0_9 = arith.constant 0 : index
    %c0_10 = arith.constant 0 : index
    %16 = vector.load %arg8[%c0_9, %c0_10] : memref<16x16xf32, #tpu.memory_space<vmem>>, vector<16x16xf32>
    %cst_11 = arith.constant 0.000000e+00 : f32
    %17 = vector.broadcast %cst_11 : f32 to vector<16x32xf32>
    %c0_12 = arith.constant 0 : index
    %c0_13 = arith.constant 0 : index
    %c0_14 = arith.constant 0 : index
    %18 = vector.load %arg3[%c0_12, %c0_13, %c0_14] : memref<4x32x8xf32, #tpu.memory_space<vmem>>, vector<1x32x8xf32>
    %19 = vector.shape_cast %18 : vector<1x32x8xf32> to vector<32x8xf32>
    %cst_15 = arith.constant dense<0.000000e+00> : vector<16x8xf32>
    %20 = tpu.matmul %13, %19, %cst_15 {dimension_numbers = #tpu.dot_dimension_numbers<[1], [0], [0], [1], [0, 0, 1, 1], [], []>} : vector<16x32xf32>, vector<32x8xf32>, vector<16x8xf32> -> vector<16x8xf32>
    %21 = arith.mulf %20, %14 : vector<16x8xf32>
    %c4_i32 = arith.constant 4 : i32
    %22 = tpu.dynamic_rotate %20 by %c4_i32 dim 1 : vector<16x8xf32>, i32 -> vector<16x8xf32>
    %23 = arith.mulf %22, %15 : vector<16x8xf32>
    %24 = arith.addf %21, %23 : vector<16x8xf32>
    %c0_16 = arith.constant 0 : index
    %c0_17 = arith.constant 0 : index
    %c0_18 = arith.constant 0 : index
    %25 = vector.load %arg4[%c0_16, %c0_17, %c0_18] : memref<4x32x8xf32, #tpu.memory_space<vmem>>, vector<1x32x8xf32>
    %26 = vector.shape_cast %25 : vector<1x32x8xf32> to vector<32x8xf32>
    %cst_19 = arith.constant dense<0.000000e+00> : vector<16x8xf32>
    %27 = tpu.matmul %13, %26, %cst_19 {dimension_numbers = #tpu.dot_dimension_numbers<[1], [0], [0], [1], [0, 0, 1, 1], [], []>} : vector<16x32xf32>, vector<32x8xf32>, vector<16x8xf32> -> vector<16x8xf32>
    %28 = arith.mulf %27, %14 : vector<16x8xf32>
    %c4_i32_20 = arith.constant 4 : i32
    %29 = tpu.dynamic_rotate %27 by %c4_i32_20 dim 1 : vector<16x8xf32>, i32 -> vector<16x8xf32>
    %30 = arith.mulf %29, %15 : vector<16x8xf32>
    %31 = arith.addf %28, %30 : vector<16x8xf32>
    %c0_21 = arith.constant 0 : index
    %c0_22 = arith.constant 0 : index
    %c0_23 = arith.constant 0 : index
    %32 = vector.load %arg5[%c0_21, %c0_22, %c0_23] : memref<4x32x8xf32, #tpu.memory_space<vmem>>, vector<1x32x8xf32>
    %33 = vector.shape_cast %32 : vector<1x32x8xf32> to vector<32x8xf32>
    %cst_24 = arith.constant dense<0.000000e+00> : vector<16x8xf32>
    %34 = tpu.matmul %13, %33, %cst_24 {dimension_numbers = #tpu.dot_dimension_numbers<[1], [0], [0], [1], [0, 0, 1, 1], [], []>} : vector<16x32xf32>, vector<32x8xf32>, vector<16x8xf32> -> vector<16x8xf32>
    %cst_25 = arith.constant dense<0.000000e+00> : vector<16x16xf32>
    %35 = tpu.matmul %24, %31, %cst_25 {dimension_numbers = #tpu.dot_dimension_numbers<[1], [1], [0], [0], [0, 0, 1, 0], [], []>} : vector<16x8xf32>, vector<16x8xf32>, vector<16x16xf32> -> vector<16x16xf32>
    %cst_26 = arith.constant 0.353553385 : f32
    %36 = vector.broadcast %cst_26 : f32 to vector<16x16xf32>
    %37 = arith.mulf %35, %36 : vector<16x16xf32>
    %38 = arith.addf %37, %16 : vector<16x16xf32>
    %cst_27 = arith.constant dense<0xFF800000> : vector<16xf32>
    %39 = vector.multi_reduction <maximumf>, %38, %cst_27 [1] : vector<16x16xf32> to vector<16xf32>
    %40 = vector.shape_cast %39 : vector<16xf32> to vector<16x1xf32>
    %41 = vector.broadcast %40 : vector<16x1xf32> to vector<16x16xf32>
    %42 = arith.subf %38, %41 : vector<16x16xf32>
    %43 = math.exp %42 : vector<16x16xf32>
    %cst_28 = arith.constant dense<0.000000e+00> : vector<16xf32>
    %44 = vector.multi_reduction <add>, %43, %cst_28 [1] : vector<16x16xf32> to vector<16xf32>
    %45 = vector.shape_cast %44 : vector<16xf32> to vector<16x1xf32>
    %46 = tpu.reciprocal %45 : vector<16x1xf32> -> vector<16x1xf32>
    %47 = vector.broadcast %46 : vector<16x1xf32> to vector<16x16xf32>
    %48 = arith.mulf %43, %47 : vector<16x16xf32>
    %cst_29 = arith.constant dense<0.000000e+00> : vector<16x8xf32>
    %49 = tpu.matmul %48, %34, %cst_29 {dimension_numbers = #tpu.dot_dimension_numbers<[1], [0], [0], [1], [0, 0, 1, 1], [], []>} : vector<16x16xf32>, vector<16x8xf32>, vector<16x8xf32> -> vector<16x8xf32>
    %c0_30 = arith.constant 0 : index
    %c0_31 = arith.constant 0 : index
    %c0_32 = arith.constant 0 : index
    %50 = vector.load %arg9[%c0_30, %c0_31, %c0_32] : memref<4x8x32xf32, #tpu.memory_space<vmem>>, vector<1x8x32xf32>
    %51 = vector.shape_cast %50 : vector<1x8x32xf32> to vector<8x32xf32>
    %cst_33 = arith.constant dense<0.000000e+00> : vector<16x32xf32>
    %52 = tpu.matmul %49, %51, %cst_33 {dimension_numbers = #tpu.dot_dimension_numbers<[1], [0], [0], [1], [0, 0, 1, 1], [], []>} : vector<16x8xf32>, vector<8x32xf32>, vector<16x32xf32> -> vector<16x32xf32>
    %53 = arith.addf %17, %52 : vector<16x32xf32>
    %c1 = arith.constant 1 : index
    %c0_34 = arith.constant 0 : index
    %c0_35 = arith.constant 0 : index
    %54 = vector.load %arg3[%c1, %c0_34, %c0_35] : memref<4x32x8xf32, #tpu.memory_space<vmem>>, vector<1x32x8xf32>
    %55 = vector.shape_cast %54 : vector<1x32x8xf32> to vector<32x8xf32>
    %cst_36 = arith.constant dense<0.000000e+00> : vector<16x8xf32>
    %56 = tpu.matmul %13, %55, %cst_36 {dimension_numbers = #tpu.dot_dimension_numbers<[1], [0], [0], [1], [0, 0, 1, 1], [], []>} : vector<16x32xf32>, vector<32x8xf32>, vector<16x8xf32> -> vector<16x8xf32>
    %57 = arith.mulf %56, %14 : vector<16x8xf32>
    %c4_i32_37 = arith.constant 4 : i32
    %58 = tpu.dynamic_rotate %56 by %c4_i32_37 dim 1 : vector<16x8xf32>, i32 -> vector<16x8xf32>
    %59 = arith.mulf %58, %15 : vector<16x8xf32>
    %60 = arith.addf %57, %59 : vector<16x8xf32>
    %c1_38 = arith.constant 1 : index
    %c0_39 = arith.constant 0 : index
    %c0_40 = arith.constant 0 : index
    %61 = vector.load %arg4[%c1_38, %c0_39, %c0_40] : memref<4x32x8xf32, #tpu.memory_space<vmem>>, vector<1x32x8xf32>
    %62 = vector.shape_cast %61 : vector<1x32x8xf32> to vector<32x8xf32>
    %cst_41 = arith.constant dense<0.000000e+00> : vector<16x8xf32>
    %63 = tpu.matmul %13, %62, %cst_41 {dimension_numbers = #tpu.dot_dimension_numbers<[1], [0], [0], [1], [0, 0, 1, 1], [], []>} : vector<16x32xf32>, vector<32x8xf32>, vector<16x8xf32> -> vector<16x8xf32>
    %64 = arith.mulf %63, %14 : vector<16x8xf32>
    %c4_i32_42 = arith.constant 4 : i32
    %65 = tpu.dynamic_rotate %63 by %c4_i32_42 dim 1 : vector<16x8xf32>, i32 -> vector<16x8xf32>
    %66 = arith.mulf %65, %15 : vector<16x8xf32>
    %67 = arith.addf %64, %66 : vector<16x8xf32>
    %c1_43 = arith.constant 1 : index
    %c0_44 = arith.constant 0 : index
    %c0_45 = arith.constant 0 : index
    %68 = vector.load %arg5[%c1_43, %c0_44, %c0_45] : memref<4x32x8xf32, #tpu.memory_space<vmem>>, vector<1x32x8xf32>
    %69 = vector.shape_cast %68 : vector<1x32x8xf32> to vector<32x8xf32>
    %cst_46 = arith.constant dense<0.000000e+00> : vector<16x8xf32>
    %70 = tpu.matmul %13, %69, %cst_46 {dimension_numbers = #tpu.dot_dimension_numbers<[1], [0], [0], [1], [0, 0, 1, 1], [], []>} : vector<16x32xf32>, vector<32x8xf32>, vector<16x8xf32> -> vector<16x8xf32>
    %cst_47 = arith.constant dense<0.000000e+00> : vector<16x16xf32>
    %71 = tpu.matmul %60, %67, %cst_47 {dimension_numbers = #tpu.dot_dimension_numbers<[1], [1], [0], [0], [0, 0, 1, 0], [], []>} : vector<16x8xf32>, vector<16x8xf32>, vector<16x16xf32> -> vector<16x16xf32>
    %cst_48 = arith.constant 0.353553385 : f32
    %72 = vector.broadcast %cst_48 : f32 to vector<16x16xf32>
    %73 = arith.mulf %71, %72 : vector<16x16xf32>
    %74 = arith.addf %73, %16 : vector<16x16xf32>
    %cst_49 = arith.constant dense<0xFF800000> : vector<16xf32>
    %75 = vector.multi_reduction <maximumf>, %74, %cst_49 [1] : vector<16x16xf32> to vector<16xf32>
    %76 = vector.shape_cast %75 : vector<16xf32> to vector<16x1xf32>
    %77 = vector.broadcast %76 : vector<16x1xf32> to vector<16x16xf32>
    %78 = arith.subf %74, %77 : vector<16x16xf32>
    %79 = math.exp %78 : vector<16x16xf32>
    %cst_50 = arith.constant dense<0.000000e+00> : vector<16xf32>
    %80 = vector.multi_reduction <add>, %79, %cst_50 [1] : vector<16x16xf32> to vector<16xf32>
    %81 = vector.shape_cast %80 : vector<16xf32> to vector<16x1xf32>
    %82 = tpu.reciprocal %81 : vector<16x1xf32> -> vector<16x1xf32>
    %83 = vector.broadcast %82 : vector<16x1xf32> to vector<16x16xf32>
    %84 = arith.mulf %79, %83 : vector<16x16xf32>
    %cst_51 = arith.constant dense<0.000000e+00> : vector<16x8xf32>
    %85 = tpu.matmul %84, %70, %cst_51 {dimension_numbers = #tpu.dot_dimension_numbers<[1], [0], [0], [1], [0, 0, 1, 1], [], []>} : vector<16x16xf32>, vector<16x8xf32>, vector<16x8xf32> -> vector<16x8xf32>
    %c1_52 = arith.constant 1 : index
    %c0_53 = arith.constant 0 : index
    %c0_54 = arith.constant 0 : index
    %86 = vector.load %arg9[%c1_52, %c0_53, %c0_54] : memref<4x8x32xf32, #tpu.memory_space<vmem>>, vector<1x8x32xf32>
    %87 = vector.shape_cast %86 : vector<1x8x32xf32> to vector<8x32xf32>
    %cst_55 = arith.constant dense<0.000000e+00> : vector<16x32xf32>
    %88 = tpu.matmul %85, %87, %cst_55 {dimension_numbers = #tpu.dot_dimension_numbers<[1], [0], [0], [1], [0, 0, 1, 1], [], []>} : vector<16x8xf32>, vector<8x32xf32>, vector<16x32xf32> -> vector<16x32xf32>
    %89 = arith.addf %53, %88 : vector<16x32xf32>
    %c2 = arith.constant 2 : index
    %c0_56 = arith.constant 0 : index
    %c0_57 = arith.constant 0 : index
    %90 = vector.load %arg3[%c2, %c0_56, %c0_57] : memref<4x32x8xf32, #tpu.memory_space<vmem>>, vector<1x32x8xf32>
    %91 = vector.shape_cast %90 : vector<1x32x8xf32> to vector<32x8xf32>
    %cst_58 = arith.constant dense<0.000000e+00> : vector<16x8xf32>
    %92 = tpu.matmul %13, %91, %cst_58 {dimension_numbers = #tpu.dot_dimension_numbers<[1], [0], [0], [1], [0, 0, 1, 1], [], []>} : vector<16x32xf32>, vector<32x8xf32>, vector<16x8xf32> -> vector<16x8xf32>
    %93 = arith.mulf %92, %14 : vector<16x8xf32>
    %c4_i32_59 = arith.constant 4 : i32
    %94 = tpu.dynamic_rotate %92 by %c4_i32_59 dim 1 : vector<16x8xf32>, i32 -> vector<16x8xf32>
    %95 = arith.mulf %94, %15 : vector<16x8xf32>
    %96 = arith.addf %93, %95 : vector<16x8xf32>
    %c2_60 = arith.constant 2 : index
    %c0_61 = arith.constant 0 : index
    %c0_62 = arith.constant 0 : index
    %97 = vector.load %arg4[%c2_60, %c0_61, %c0_62] : memref<4x32x8xf32, #tpu.memory_space<vmem>>, vector<1x32x8xf32>
    %98 = vector.shape_cast %97 : vector<1x32x8xf32> to vector<32x8xf32>
    %cst_63 = arith.constant dense<0.000000e+00> : vector<16x8xf32>
    %99 = tpu.matmul %13, %98, %cst_63 {dimension_numbers = #tpu.dot_dimension_numbers<[1], [0], [0], [1], [0, 0, 1, 1], [], []>} : vector<16x32xf32>, vector<32x8xf32>, vector<16x8xf32> -> vector<16x8xf32>
    %100 = arith.mulf %99, %14 : vector<16x8xf32>
    %c4_i32_64 = arith.constant 4 : i32
    %101 = tpu.dynamic_rotate %99 by %c4_i32_64 dim 1 : vector<16x8xf32>, i32 -> vector<16x8xf32>
    %102 = arith.mulf %101, %15 : vector<16x8xf32>
    %103 = arith.addf %100, %102 : vector<16x8xf32>
    %c2_65 = arith.constant 2 : index
    %c0_66 = arith.constant 0 : index
    %c0_67 = arith.constant 0 : index
    %104 = vector.load %arg5[%c2_65, %c0_66, %c0_67] : memref<4x32x8xf32, #tpu.memory_space<vmem>>, vector<1x32x8xf32>
    %105 = vector.shape_cast %104 : vector<1x32x8xf32> to vector<32x8xf32>
    %cst_68 = arith.constant dense<0.000000e+00> : vector<16x8xf32>
    %106 = tpu.matmul %13, %105, %cst_68 {dimension_numbers = #tpu.dot_dimension_numbers<[1], [0], [0], [1], [0, 0, 1, 1], [], []>} : vector<16x32xf32>, vector<32x8xf32>, vector<16x8xf32> -> vector<16x8xf32>
    %cst_69 = arith.constant dense<0.000000e+00> : vector<16x16xf32>
    %107 = tpu.matmul %96, %103, %cst_69 {dimension_numbers = #tpu.dot_dimension_numbers<[1], [1], [0], [0], [0, 0, 1, 0], [], []>} : vector<16x8xf32>, vector<16x8xf32>, vector<16x16xf32> -> vector<16x16xf32>
    %cst_70 = arith.constant 0.353553385 : f32
    %108 = vector.broadcast %cst_70 : f32 to vector<16x16xf32>
    %109 = arith.mulf %107, %108 : vector<16x16xf32>
    %110 = arith.addf %109, %16 : vector<16x16xf32>
    %cst_71 = arith.constant dense<0xFF800000> : vector<16xf32>
    %111 = vector.multi_reduction <maximumf>, %110, %cst_71 [1] : vector<16x16xf32> to vector<16xf32>
    %112 = vector.shape_cast %111 : vector<16xf32> to vector<16x1xf32>
    %113 = vector.broadcast %112 : vector<16x1xf32> to vector<16x16xf32>
    %114 = arith.subf %110, %113 : vector<16x16xf32>
    %115 = math.exp %114 : vector<16x16xf32>
    %cst_72 = arith.constant dense<0.000000e+00> : vector<16xf32>
    %116 = vector.multi_reduction <add>, %115, %cst_72 [1] : vector<16x16xf32> to vector<16xf32>
    %117 = vector.shape_cast %116 : vector<16xf32> to vector<16x1xf32>
    %118 = tpu.reciprocal %117 : vector<16x1xf32> -> vector<16x1xf32>
    %119 = vector.broadcast %118 : vector<16x1xf32> to vector<16x16xf32>
    %120 = arith.mulf %115, %119 : vector<16x16xf32>
    %cst_73 = arith.constant dense<0.000000e+00> : vector<16x8xf32>
    %121 = tpu.matmul %120, %106, %cst_73 {dimension_numbers = #tpu.dot_dimension_numbers<[1], [0], [0], [1], [0, 0, 1, 1], [], []>} : vector<16x16xf32>, vector<16x8xf32>, vector<16x8xf32> -> vector<16x8xf32>
    %c2_74 = arith.constant 2 : index
    %c0_75 = arith.constant 0 : index
    %c0_76 = arith.constant 0 : index
    %122 = vector.load %arg9[%c2_74, %c0_75, %c0_76] : memref<4x8x32xf32, #tpu.memory_space<vmem>>, vector<1x8x32xf32>
    %123 = vector.shape_cast %122 : vector<1x8x32xf32> to vector<8x32xf32>
    %cst_77 = arith.constant dense<0.000000e+00> : vector<16x32xf32>
    %124 = tpu.matmul %121, %123, %cst_77 {dimension_numbers = #tpu.dot_dimension_numbers<[1], [0], [0], [1], [0, 0, 1, 1], [], []>} : vector<16x8xf32>, vector<8x32xf32>, vector<16x32xf32> -> vector<16x32xf32>
    %125 = arith.addf %89, %124 : vector<16x32xf32>
    %c3 = arith.constant 3 : index
    %c0_78 = arith.constant 0 : index
    %c0_79 = arith.constant 0 : index
    %126 = vector.load %arg3[%c3, %c0_78, %c0_79] : memref<4x32x8xf32, #tpu.memory_space<vmem>>, vector<1x32x8xf32>
    %127 = vector.shape_cast %126 : vector<1x32x8xf32> to vector<32x8xf32>
    %cst_80 = arith.constant dense<0.000000e+00> : vector<16x8xf32>
    %128 = tpu.matmul %13, %127, %cst_80 {dimension_numbers = #tpu.dot_dimension_numbers<[1], [0], [0], [1], [0, 0, 1, 1], [], []>} : vector<16x32xf32>, vector<32x8xf32>, vector<16x8xf32> -> vector<16x8xf32>
    %129 = arith.mulf %128, %14 : vector<16x8xf32>
    %c4_i32_81 = arith.constant 4 : i32
    %130 = tpu.dynamic_rotate %128 by %c4_i32_81 dim 1 : vector<16x8xf32>, i32 -> vector<16x8xf32>
    %131 = arith.mulf %130, %15 : vector<16x8xf32>
    %132 = arith.addf %129, %131 : vector<16x8xf32>
    %c3_82 = arith.constant 3 : index
    %c0_83 = arith.constant 0 : index
    %c0_84 = arith.constant 0 : index
    %133 = vector.load %arg4[%c3_82, %c0_83, %c0_84] : memref<4x32x8xf32, #tpu.memory_space<vmem>>, vector<1x32x8xf32>
    %134 = vector.shape_cast %133 : vector<1x32x8xf32> to vector<32x8xf32>
    %cst_85 = arith.constant dense<0.000000e+00> : vector<16x8xf32>
    %135 = tpu.matmul %13, %134, %cst_85 {dimension_numbers = #tpu.dot_dimension_numbers<[1], [0], [0], [1], [0, 0, 1, 1], [], []>} : vector<16x32xf32>, vector<32x8xf32>, vector<16x8xf32> -> vector<16x8xf32>
    %136 = arith.mulf %135, %14 : vector<16x8xf32>
    %c4_i32_86 = arith.constant 4 : i32
    %137 = tpu.dynamic_rotate %135 by %c4_i32_86 dim 1 : vector<16x8xf32>, i32 -> vector<16x8xf32>
    %138 = arith.mulf %137, %15 : vector<16x8xf32>
    %139 = arith.addf %136, %138 : vector<16x8xf32>
    %c3_87 = arith.constant 3 : index
    %c0_88 = arith.constant 0 : index
    %c0_89 = arith.constant 0 : index
    %140 = vector.load %arg5[%c3_87, %c0_88, %c0_89] : memref<4x32x8xf32, #tpu.memory_space<vmem>>, vector<1x32x8xf32>
    %141 = vector.shape_cast %140 : vector<1x32x8xf32> to vector<32x8xf32>
    %cst_90 = arith.constant dense<0.000000e+00> : vector<16x8xf32>
    %142 = tpu.matmul %13, %141, %cst_90 {dimension_numbers = #tpu.dot_dimension_numbers<[1], [0], [0], [1], [0, 0, 1, 1], [], []>} : vector<16x32xf32>, vector<32x8xf32>, vector<16x8xf32> -> vector<16x8xf32>
    %cst_91 = arith.constant dense<0.000000e+00> : vector<16x16xf32>
    %143 = tpu.matmul %132, %139, %cst_91 {dimension_numbers = #tpu.dot_dimension_numbers<[1], [1], [0], [0], [0, 0, 1, 0], [], []>} : vector<16x8xf32>, vector<16x8xf32>, vector<16x16xf32> -> vector<16x16xf32>
    %cst_92 = arith.constant 0.353553385 : f32
    %144 = vector.broadcast %cst_92 : f32 to vector<16x16xf32>
    %145 = arith.mulf %143, %144 : vector<16x16xf32>
    %146 = arith.addf %145, %16 : vector<16x16xf32>
    %cst_93 = arith.constant dense<0xFF800000> : vector<16xf32>
    %147 = vector.multi_reduction <maximumf>, %146, %cst_93 [1] : vector<16x16xf32> to vector<16xf32>
    %148 = vector.shape_cast %147 : vector<16xf32> to vector<16x1xf32>
    %149 = vector.broadcast %148 : vector<16x1xf32> to vector<16x16xf32>
    %150 = arith.subf %146, %149 : vector<16x16xf32>
    %151 = math.exp %150 : vector<16x16xf32>
    %cst_94 = arith.constant dense<0.000000e+00> : vector<16xf32>
    %152 = vector.multi_reduction <add>, %151, %cst_94 [1] : vector<16x16xf32> to vector<16xf32>
    %153 = vector.shape_cast %152 : vector<16xf32> to vector<16x1xf32>
    %154 = tpu.reciprocal %153 : vector<16x1xf32> -> vector<16x1xf32>
    %155 = vector.broadcast %154 : vector<16x1xf32> to vector<16x16xf32>
    %156 = arith.mulf %151, %155 : vector<16x16xf32>
    %cst_95 = arith.constant dense<0.000000e+00> : vector<16x8xf32>
    %157 = tpu.matmul %156, %142, %cst_95 {dimension_numbers = #tpu.dot_dimension_numbers<[1], [0], [0], [1], [0, 0, 1, 1], [], []>} : vector<16x16xf32>, vector<16x8xf32>, vector<16x8xf32> -> vector<16x8xf32>
    %c3_96 = arith.constant 3 : index
    %c0_97 = arith.constant 0 : index
    %c0_98 = arith.constant 0 : index
    %158 = vector.load %arg9[%c3_96, %c0_97, %c0_98] : memref<4x8x32xf32, #tpu.memory_space<vmem>>, vector<1x8x32xf32>
    %159 = vector.shape_cast %158 : vector<1x8x32xf32> to vector<8x32xf32>
    %cst_99 = arith.constant dense<0.000000e+00> : vector<16x32xf32>
    %160 = tpu.matmul %157, %159, %cst_99 {dimension_numbers = #tpu.dot_dimension_numbers<[1], [0], [0], [1], [0, 0, 1, 1], [], []>} : vector<16x8xf32>, vector<8x32xf32>, vector<16x32xf32> -> vector<16x32xf32>
    %161 = arith.addf %125, %160 : vector<16x32xf32>
    %162 = arith.addf %0, %161 : vector<16x32xf32>
    %c0_100 = arith.constant 0 : index
    %c0_101 = arith.constant 0 : index
    %163 = vector.load %arg10[%c0_100, %c0_101] : memref<1x32xf32, #tpu.memory_space<vmem>>, vector<1x32xf32>
    %164 = arith.mulf %162, %162 : vector<16x32xf32>
    %cst_102 = arith.constant dense<0.000000e+00> : vector<16xf32>
    %165 = vector.multi_reduction <add>, %164, %cst_102 [1] : vector<16x32xf32> to vector<16xf32>
    %166 = vector.shape_cast %165 : vector<16xf32> to vector<16x1xf32>
    %cst_103 = arith.constant 3.200000e+01 : f32
    %167 = vector.broadcast %cst_103 : f32 to vector<16x1xf32>
    %168 = arith.divf %166, %167 : vector<16x1xf32>
    %cst_104 = arith.constant 9.99999997E-7 : f32
    %169 = vector.broadcast %cst_104 : f32 to vector<16x1xf32>
    %170 = arith.addf %168, %169 : vector<16x1xf32>
    %171 = math.rsqrt %170 : vector<16x1xf32>
    %172 = vector.broadcast %171 : vector<16x1xf32> to vector<16x32xf32>
    %173 = arith.mulf %162, %172 : vector<16x32xf32>
    %174 = vector.broadcast %163 : vector<1x32xf32> to vector<16x32xf32>
    %175 = arith.mulf %173, %174 : vector<16x32xf32>
    %c0_105 = arith.constant 0 : index
    %c0_106 = arith.constant 0 : index
    %176 = vector.load %arg11[%c0_105, %c0_106] : memref<32x64xf32, #tpu.memory_space<vmem>>, vector<32x64xf32>
    %cst_107 = arith.constant dense<0.000000e+00> : vector<16x64xf32>
    %177 = tpu.matmul %175, %176, %cst_107 {dimension_numbers = #tpu.dot_dimension_numbers<[1], [0], [0], [1], [0, 0, 1, 1], [], []>} : vector<16x32xf32>, vector<32x64xf32>, vector<16x64xf32> -> vector<16x64xf32>
    %c0_108 = arith.constant 0 : index
    %c0_109 = arith.constant 0 : index
    %178 = vector.load %arg12[%c0_108, %c0_109] : memref<32x64xf32, #tpu.memory_space<vmem>>, vector<32x64xf32>
    %cst_110 = arith.constant dense<0.000000e+00> : vector<16x64xf32>
    %179 = tpu.matmul %175, %178, %cst_110 {dimension_numbers = #tpu.dot_dimension_numbers<[1], [0], [0], [1], [0, 0, 1, 1], [], []>} : vector<16x32xf32>, vector<32x64xf32>, vector<16x64xf32> -> vector<16x64xf32>
    %180 = arith.negf %177 : vector<16x64xf32>
    %181 = math.exp %180 : vector<16x64xf32>
    %cst_111 = arith.constant 1.000000e+00 : f32
    %182 = vector.broadcast %cst_111 : f32 to vector<16x64xf32>
    %183 = arith.addf %182, %181 : vector<16x64xf32>
    %184 = arith.divf %182, %183 : vector<16x64xf32>
    %185 = arith.mulf %177, %184 : vector<16x64xf32>
    %186 = arith.mulf %185, %179 : vector<16x64xf32>
    %c0_112 = arith.constant 0 : index
    %c0_113 = arith.constant 0 : index
    %187 = vector.load %arg13[%c0_112, %c0_113] : memref<64x32xf32, #tpu.memory_space<vmem>>, vector<64x32xf32>
    %cst_114 = arith.constant dense<0.000000e+00> : vector<16x32xf32>
    %188 = tpu.matmul %186, %187, %cst_114 {dimension_numbers = #tpu.dot_dimension_numbers<[1], [0], [0], [1], [0, 0, 1, 1], [], []>} : vector<16x64xf32>, vector<64x32xf32>, vector<16x32xf32> -> vector<16x32xf32>
    %189 = arith.addf %162, %188 : vector<16x32xf32>
    %c0_115 = arith.constant 0 : index
    %c0_116 = arith.constant 0 : index
    %190 = vector.load %arg14[%c0_115, %c0_116] : memref<16x32xf32, #tpu.memory_space<vmem>>, vector<16x32xf32>
    tpu.vector_store %arg14[%c0_115, %c0_116], %189 {strides = array<i32>} : memref<16x32xf32, #tpu.memory_space<vmem>>, vector<16x32xf32>,
    return
  }
  func.func @transform_0(%arg0: i32) -> (i32, i32) {
    %c0_i32 = arith.constant 0 : i32
    %c0_i32_0 = arith.constant 0 : i32
    %c0_i32_1 = arith.constant 0 : i32
    return %c0_i32, %c0_i32_0 : i32, i32
  }
  func.func @transform_1(%arg0: i32) -> (i32, i32) {
    %c0_i32 = arith.constant 0 : i32
    %c0_i32_0 = arith.constant 0 : i32
    %c0_i32_1 = arith.constant 0 : i32
    return %c0_i32, %c0_i32_0 : i32, i32
  }
  func.func @transform_2(%arg0: i32) -> (i32, i32, i32) {
    %c0_i32 = arith.constant 0 : i32
    %c0_i32_0 = arith.constant 0 : i32
    %c0_i32_1 = arith.constant 0 : i32
    %c0_i32_2 = arith.constant 0 : i32
    return %c0_i32, %c0_i32_0, %c0_i32_1 : i32, i32, i32
  }
  func.func @transform_3(%arg0: i32) -> (i32, i32, i32) {
    %c0_i32 = arith.constant 0 : i32
    %c0_i32_0 = arith.constant 0 : i32
    %c0_i32_1 = arith.constant 0 : i32
    %c0_i32_2 = arith.constant 0 : i32
    return %c0_i32, %c0_i32_0, %c0_i32_1 : i32, i32, i32
  }
  func.func @transform_4(%arg0: i32) -> (i32, i32, i32) {
    %c0_i32 = arith.constant 0 : i32
    %c0_i32_0 = arith.constant 0 : i32
    %c0_i32_1 = arith.constant 0 : i32
    %c0_i32_2 = arith.constant 0 : i32
    return %c0_i32, %c0_i32_0, %c0_i32_1 : i32, i32, i32
  }
  func.func @transform_5(%arg0: i32) -> (i32, i32) {
    %c0_i32 = arith.constant 0 : i32
    %c0_i32_0 = arith.constant 0 : i32
    %c0_i32_1 = arith.constant 0 : i32
    return %c0_i32, %c0_i32_0 : i32, i32
  }
  func.func @transform_6(%arg0: i32) -> (i32, i32) {
    %c0_i32 = arith.constant 0 : i32
    %c0_i32_0 = arith.constant 0 : i32
    %c0_i32_1 = arith.constant 0 : i32
    return %c0_i32, %c0_i32_0 : i32, i32
  }
  func.func @transform_7(%arg0: i32) -> (i32, i32) {
    %c0_i32 = arith.constant 0 : i32
    %c0_i32_0 = arith.constant 0 : i32
    %c0_i32_1 = arith.constant 0 : i32
    return %c0_i32, %c0_i32_0 : i32, i32
  }
  func.func @transform_8(%arg0: i32) -> (i32, i32, i32) {
    %c0_i32 = arith.constant 0 : i32
    %c0_i32_0 = arith.constant 0 : i32
    %c0_i32_1 = arith.constant 0 : i32
    %c0_i32_2 = arith.constant 0 : i32
    return %c0_i32, %c0_i32_0, %c0_i32_1 : i32, i32, i32
  }
  func.func @transform_9(%arg0: i32) -> (i32, i32) {
    %c0_i32 = arith.constant 0 : i32
    %c0_i32_0 = arith.constant 0 : i32
    %c0_i32_1 = arith.constant 0 : i32
    return %c0_i32, %c0_i32_0 : i32, i32
  }
  func.func @transform_10(%arg0: i32) -> (i32, i32) {
    %c0_i32 = arith.constant 0 : i32
    %c0_i32_0 = arith.constant 0 : i32
    %c0_i32_1 = arith.constant 0 : i32
    return %c0_i32, %c0_i32_0 : i32, i32
  }
  func.func @transform_11(%arg0: i32) -> (i32, i32) {
    %c0_i32 = arith.constant 0 : i32
    %c0_i32_0 = arith.constant 0 : i32
    %c0_i32_1 = arith.constant 0 : i32
    return %c0_i32, %c0_i32_0 : i32, i32
  }
  func.func @transform_12(%arg0: i32) -> (i32, i32) {
    %c0_i32 = arith.constant 0 : i32
    %c0_i32_0 = arith.constant 0 : i32
    %c0_i32_1 = arith.constant 0 : i32
    return %c0_i32, %c0_i32_0 : i32, i32
  }
  func.func @transform_13(%arg0: i32) -> (i32, i32) {
    %c0_i32 = arith.constant 0 : i32
    %c0_i32_0 = arith.constant 0 : i32
    %c0_i32_1 = arith.constant 0 : i32
    return %c0_i32, %c0_i32_0 : i32, i32
  }
}

</mosaic_0001>

<llo_original>
// kernel: block_pallas.1
$region0: #{block_pallas.1}
  #allocation0 [shape = 'u32[]', space=smem, size = 0x4, offset = 0x4, fixed_abs, tag = 'smem constant byte address 0x4 - core index']
  #allocation1 [shape = 'u32[144,128]{1,0:T(1,128)}', space=vmem, size = 0x12000, scoped, tag = 'internal scratch']
  %s0 = inlined_call_operand.vmem [shape: f32[16,32], index: 0, kind: input, shape index: {}]
  %s1 = inlined_call_operand.vmem [shape: f32[1,32], index: 1, kind: input, shape index: {}]
  %s2 = inlined_call_operand.vmem [shape: f32[4,32,8], index: 2, kind: input, shape index: {}]
  %s3 = inlined_call_operand.vmem [shape: f32[4,32,8], index: 3, kind: input, shape index: {}]
  %s4 = inlined_call_operand.vmem [shape: f32[4,32,8], index: 4, kind: input, shape index: {}]
  %s5 = inlined_call_operand.vmem [shape: f32[16,8], index: 5, kind: input, shape index: {}]
  %s6 = inlined_call_operand.vmem [shape: f32[16,8], index: 6, kind: input, shape index: {}]
  %s7 = inlined_call_operand.vmem [shape: f32[16,16], index: 7, kind: input, shape index: {}]
  %s8 = inlined_call_operand.vmem [shape: f32[4,8,32], index: 8, kind: input, shape index: {}]
  %s9 = inlined_call_operand.vmem [shape: f32[1,32], index: 9, kind: input, shape index: {}]
  %s10 = inlined_call_operand.vmem [shape: f32[32,64], index: 10, kind: input, shape index: {}]
  %s11 = inlined_call_operand.vmem [shape: f32[32,64], index: 11, kind: input, shape index: {}]
  %s12 = inlined_call_operand.vmem [shape: f32[64,32], index: 12, kind: input, shape index: {}]
  %s13 = inlined_call_operand.hbm [shape: f32[16,32], index: 13, kind: output, shape index: {}]
  %s14 = sld [smem:[#allocation0]]
  $region62: #{block_pallas.1} parent=0
    _
  %s16 = ssub.s32 1, %s14
  %s17 = scalar_select 0, %s16, %s14
  $region1: #{block_pallas.1} parent=0
    #allocation2 [shape = 'u8[8192]{0}', space=vmem, size = 0x2000, scoped, tag = 'output window, operand 0, single buffered']
    #allocation3 [shape = 's32[1]{0}', space=sflag, size = 0x4, scoped, tag = 'scoped memory for block_pallas.1']
    %18 = vsyncpa [#allocation3], 0
    // Predicated region
    $region2: #{block_pallas.1} parent=1 // pred_check
      _
    $region3: #{block_pallas.1} parent=1 // pred_check_branch
      %20 = sbr.rel (0) target = $region5
    $region4: #{block_pallas.1} parent=1 // pred_region
      _
    $region5: #{block_pallas.1} parent=1 // pred_fallthru
      _
    // Predicated region
    $region6: #{block_pallas.1} parent=1 // pred_check
      _
    $region7: #{block_pallas.1} parent=1 // pred_check_branch
      %22 = sbr.rel (0) target = $region9
    $region8: #{block_pallas.1} parent=1 // pred_region
      _
    $region9: #{block_pallas.1} parent=1 // pred_fallthru
      _
    // Predicated region
    $region10: #{block_pallas.1} parent=1 // pred_check
      _
    $region11: #{block_pallas.1} parent=1 // pred_check_branch
      %24 = sbr.rel (0) target = $region13
    $region12: #{block_pallas.1} parent=1 // pred_region
      _
    $region13: #{block_pallas.1} parent=1 // pred_fallthru
      _
    // Predicated region
    $region14: #{block_pallas.1} parent=1 // pred_check
      _
    $region15: #{block_pallas.1} parent=1 // pred_check_branch
      %26 = sbr.rel (0) target = $region17
    $region16: #{block_pallas.1} parent=1 // pred_region
      _
    $region17: #{block_pallas.1} parent=1 // pred_fallthru
      _
    // Predicated region
    $region18: #{block_pallas.1} parent=1 // pred_check
      _
    $region19: #{block_pallas.1} parent=1 // pred_check_branch
      %28 = sbr.rel (0) target = $region21
    $region20: #{block_pallas.1} parent=1 // pred_region
      _
    $region21: #{block_pallas.1} parent=1 // pred_fallthru
      _
    // Predicated region
    $region22: #{block_pallas.1} parent=1 // pred_check
      _
    $region23: #{block_pallas.1} parent=1 // pred_check_branch
      %30 = sbr.rel (0) target = $region25
    $region24: #{block_pallas.1} parent=1 // pred_region
      _
    $region25: #{block_pallas.1} parent=1 // pred_fallthru
      _
    // Predicated region
    $region26: #{block_pallas.1} parent=1 // pred_check
      _
    $region27: #{block_pallas.1} parent=1 // pred_check_branch
      %32 = sbr.rel (0) target = $region29
    $region28: #{block_pallas.1} parent=1 // pred_region
      _
    $region29: #{block_pallas.1} parent=1 // pred_fallthru
      _
    // Predicated region
    $region30: #{block_pallas.1} parent=1 // pred_check
      _
    $region31: #{block_pallas.1} parent=1 // pred_check_branch
      %34 = sbr.rel (0) target = $region33
    $region32: #{block_pallas.1} parent=1 // pred_region
      _
    $region33: #{block_pallas.1} parent=1 // pred_fallthru
      _
    // Predicated region
    $region34: #{block_pallas.1} parent=1 // pred_check
      _
    $region35: #{block_pallas.1} parent=1 // pred_check_branch
      %36 = sbr.rel (0) target = $region37
    $region36: #{block_pallas.1} parent=1 // pred_region
      _
    $region37: #{block_pallas.1} parent=1 // pred_fallthru
      _
    // Predicated region
    $region38: #{block_pallas.1} parent=1 // pred_check
      _
    $region39: #{block_pallas.1} parent=1 // pred_check_branch
      %38 = sbr.rel (0) target = $region41
    $region40: #{block_pallas.1} parent=1 // pred_region
      _
    $region41: #{block_pallas.1} parent=1 // pred_fallthru
      _
    // Predicated region
    $region42: #{block_pallas.1} parent=1 // pred_check
      _
    $region43: #{block_pallas.1} parent=1 // pred_check_branch
      %40 = sbr.rel (0) target = $region45
    $region44: #{block_pallas.1} parent=1 // pred_region
      _
    $region45: #{block_pallas.1} parent=1 // pred_fallthru
      _
    // Predicated region
    $region46: #{block_pallas.1} parent=1 // pred_check
      _
    $region47: #{block_pallas.1} parent=1 // pred_check_branch
      %42 = sbr.rel (0) target = $region49
    $region48: #{block_pallas.1} parent=1 // pred_region
      _
    $region49: #{block_pallas.1} parent=1 // pred_fallthru
      _
    // Predicated region
    $region50: #{block_pallas.1} parent=1 // pred_check
      _
    $region51: #{block_pallas.1} parent=1 // pred_check_branch
      %44 = sbr.rel (0) target = $region53
    $region52: #{block_pallas.1} parent=1 // pred_region
      _
    $region53: #{block_pallas.1} parent=1 // pred_fallthru
      _
    %v45 = vld [vmem:[%s0] sm:$0xff]
    %v46 = vld [vmem:[%s0 + $0x8] sm:$0xff]
    %v47 = vld [vmem:[%s1] sm:$0x1]
    %v48 = vmul.f32 %v45, %v45
    %v49 = vmul.f32 %v46, %v46
    %vm50 = vcmask 261120
    %v51 = vsel %vm50, %v48, 0.0
    %52 = vadd.xlane.f32.xlu0 %v51
    %v53 = vpop.xlane.xlu0 %52
    %v54 = vsel %vm50, %v49, 0.0
    %55 = vadd.xlane.f32.xlu0 %v54
    %v56 = vpop.xlane.xlu0 %55
    %v57 = vrcp.pop 32.0
    %v58 = vmul.f32 %v53, %v57
    %v59 = vmul.f32 %v56, %v57
    %v60 = vadd.f32 %v58, 1e-06
    %v61 = vadd.f32 %v59, 1e-06
    %v62 = vrsqrt.pop %v60
    %v63 = vrsqrt.pop %v61
    %v64 = vmul.f32 %v45, %v62
    %v65 = vmul.f32 %v46, %v63
    %v67 = vlaneseq
    %v68 = vshrl.u32 %v67, 7
    %v69 = vsub.s32 0, %v68
    %v70 = vrot.slane %v47, %v69
    %v72 = vmul.f32 %v64, %v70
    %v73 = vmul.f32 %v65, %v70
    %v74 = vld [vmem:[%s5] sm:$0xff]
    %v75 = vld [vmem:[%s5 + $0x8] sm:$0xff]
    %v76 = vld [vmem:[%s6] sm:$0xff]
    %v77 = vld [vmem:[%s6 + $0x8] sm:$0xff]
    %v78 = vld [vmem:[%s7] sm:$0xff]
    %v79 = vld [vmem:[%s7 + $0x8] sm:$0xff]
    %v80 = vld [vmem:[%s2] sm:$0xff]
    %v81 = vld [vmem:[%s2 + $0x8] sm:$0xff]
    %v82 = vld [vmem:[%s2 + $0x10] sm:$0xff]
    %v83 = vld [vmem:[%s2 + $0x18] sm:$0xff]
    %v85 = vsel %vm50, %v72, 0
    %v88 = vsel %vm50, %v73, 0
    %90 = vmatprep.subr.mxu0 0.0
    %91 = vmatpush1.msra.mxu0 %v80
    %92 = vmatprep.subr.mxu0 0.0
    %93 = vmatpush1.msra.mxu0 %v81
    %94 = vmatprep.subr.mxu0 0.0
    %95 = vmatpush1.msra.mxu0 %v82
    %96 = vmatprep.subr.mxu0 0.0
    %97 = vmatpush1.msra.mxu0 %v83
    %98 = vmatprep.subr.mxu0 0.0
    %99 = vmatpush1.msra.mxu0 0.0
    %100 = vmatprep.subr.mxu0 0.0
    %101 = vmatpush1.msra.mxu0 0.0
    %102 = vmatprep.subr.mxu0 0.0
    %103 = vmatpush1.msra.mxu0 0.0
    %104 = vmatprep.subr.mxu0 0.0
    %105 = vmatpush1.msra.mxu0 0.0
    %106 = vmatprep.subr.mxu0 0.0
    %107 = vmatpush1.msra.mxu0 0.0
    %108 = vmatprep.subr.mxu0 0.0
    %109 = vmatpush1.msra.mxu0 0.0
    %110 = vmatprep.subr.mxu0 0.0
    %111 = vmatpush1.msra.mxu0 0.0
    %112 = vmatprep.subr.mxu0 0.0
    %113 = vmatpush1.msra.mxu0 0.0
    %114 = vmatprep.subr.mxu0 0.0
    %115 = vmatpush1.msra.mxu0 0.0
    %116 = vmatprep.subr.mxu0 0.0
    %117 = vmatpush1.msra.mxu0 0.0
    %118 = vmatprep.subr.mxu0 0.0
    %119 = vmatpush1.msra.mxu0 0.0
    %120 = vmatprep.subr.mxu0 0.0
    %121 = vmatpush1.msra.mxu0 0.0
    %122 = vmatprep.subr.mxu0 0.0
    %123 = vmatpush1.msra.mxu0 0.0
    %124 = vmatprep.subr.mxu0 0.0
    %125 = vmatpush1.msra.mxu0 0.0
    %126 = vmatprep.subr.mxu0 0.0
    %127 = vmatpush1.msra.mxu0 0.0
    %128 = vmatprep.subr.mxu0 0.0
    %129 = vmatpush1.msra.mxu0 0.0
    %130 = vmatprep.subr.mxu0 0.0
    %131 = vmatpush1.msra.mxu0 0.0
    %132 = vmatprep.subr.mxu0 0.0
    %133 = vmatpush1.msra.mxu0 0.0
    %134 = vmatprep.subr.mxu0 0.0
    %135 = vmatpush1.msra.mxu0 0.0
    %136 = vmatprep.subr.mxu0 0.0
    %137 = vmatpush1.msra.mxu0 0.0
    %138 = vmatprep.subr.mxu0 0.0
    %139 = vmatpush1.msra.mxu0 0.0
    %140 = vmatprep.subr.mxu0 0.0
    %141 = vmatpush1.msra.mxu0 0.0
    %142 = vmatprep.subr.mxu0 0.0
    %143 = vmatpush1.msra.mxu0 0.0
    %144 = vmatprep.subr.mxu0 0.0
    %145 = vmatpush1.msra.mxu0 0.0
    %146 = vmatprep.subr.mxu0 0.0
    %147 = vmatpush1.msra.mxu0 0.0
    %148 = vmatprep.subr.mxu0 0.0
    %149 = vmatpush1.msra.mxu0 0.0
    %150 = vmatprep.subr.mxu0 0.0
    %151 = vmatpush1.msra.mxu0 0.0
    %152 = vmatprep.subr.mxu0 0.0
    %153 = vmatpush1.msra.mxu0 0.0
    %154 = vmatprep.mubr.f32.mxu0 0.0
    %155 = vmatmul.mubr.f32.gmra.mrb[0].mxu0 %v85
    %v156 = vpop.f32.mrb[0].mxu0
    %v157 = vadd.f32 0.0, %v156
    %v158 = vpop.f32.mrb[0].mxu0
    %159 = vmatprep.mubr.f32.mxu0 0.0
    %160 = vmatmul.mubr.f32.gmra.mrb[0].mxu0 %v88
    %v161 = vpop.f32.mrb[0].mxu0
    %v162 = vadd.f32 0.0, %v161
    %v163 = vpop.f32.mrb[0].mxu0
    %164 = vdwg.mxu0
    %v165 = vmul.f32 %v157, %v74
    %v166 = vmul.f32 %v162, %v75
    %vm167 = vcmask 1047616
    %168 = vrot.lane.b32.xlu0 %v157, 8
    %v169 = vpop.permute.xlu0 %168
    %v170 = vsel %vm167, %v169, %v157
    %171 = vrot.lane.b32.xlu0 %v162, 8
    %v172 = vpop.permute.xlu0 %171
    %v173 = vsel %vm167, %v172, %v162
    %174 = vrot.lane.b32.xlu0 %v170, 8
    %v175 = vpop.permute.xlu0 %174
    %176 = vrot.lane.b32.xlu0 %v173, 8
    %v177 = vpop.permute.xlu0 %176
    %v178 = vsel %vm167, %v175, %v157
    %v179 = vsel %vm167, %v177, %v162
    %182 = vrot.lane.b32.xlu0 %v76, 4
    %v183 = vpop.permute.xlu0 %182
    %184 = vrot.lane.b32.xlu0 %v77, 4
    %v185 = vpop.permute.xlu0 %184
    %v188 = vmul.f32 %v178, %v183
    %v189 = vmul.f32 %v179, %v185
    %192 = vrot.lane.b32.xlu0 %v188, 124
    %v193 = vpop.permute.xlu0 %192
    %194 = vrot.lane.b32.xlu0 %v189, 124
    %v195 = vpop.permute.xlu0 %194
    %v198 = vadd.f32 %v165, %v193
    %v199 = vadd.f32 %v166, %v195
    %v200 = vld [vmem:[%s3] sm:$0xff]
    %v201 = vld [vmem:[%s3 + $0x8] sm:$0xff]
    %v202 = vld [vmem:[%s3 + $0x10] sm:$0xff]
    %v203 = vld [vmem:[%s3 + $0x18] sm:$0xff]
    %204 = vmatprep.subr.mxu0 0.0
    %205 = vmatpush1.msra.mxu0 %v200
    %206 = vmatprep.subr.mxu0 0.0
    %207 = vmatpush1.msra.mxu0 %v201
    %208 = vmatprep.subr.mxu0 0.0
    %209 = vmatpush1.msra.mxu0 %v202
    %210 = vmatprep.subr.mxu0 0.0
    %211 = vmatpush1.msra.mxu0 %v203
    %212 = vmatprep.subr.mxu0 0.0
    %213 = vmatpush1.msra.mxu0 0.0
    %214 = vmatprep.subr.mxu0 0.0
    %215 = vmatpush1.msra.mxu0 0.0
    %216 = vmatprep.subr.mxu0 0.0
    %217 = vmatpush1.msra.mxu0 0.0
    %218 = vmatprep.subr.mxu0 0.0
    %219 = vmatpush1.msra.mxu0 0.0
    %220 = vmatprep.subr.mxu0 0.0
    %221 = vmatpush1.msra.mxu0 0.0
    %222 = vmatprep.subr.mxu0 0.0
    %223 = vmatpush1.msra.mxu0 0.0
    %224 = vmatprep.subr.mxu0 0.0
    %225 = vmatpush1.msra.mxu0 0.0
    %226 = vmatprep.subr.mxu0 0.0
    %227 = vmatpush1.msra.mxu0 0.0
    %228 = vmatprep.subr.mxu0 0.0
    %229 = vmatpush1.msra.mxu0 0.0
    %230 = vmatprep.subr.mxu0 0.0
    %231 = vmatpush1.msra.mxu0 0.0
    %232 = vmatprep.subr.mxu0 0.0
    %233 = vmatpush1.msra.mxu0 0.0
    %234 = vmatprep.subr.mxu0 0.0
    %235 = vmatpush1.msra.mxu0 0.0
    %236 = vmatprep.subr.mxu0 0.0
    %237 = vmatpush1.msra.mxu0 0.0
    %238 = vmatprep.subr.mxu0 0.0
    %239 = vmatpush1.msra.mxu0 0.0
    %240 = vmatprep.subr.mxu0 0.0
    %241 = vmatpush1.msra.mxu0 0.0
    %242 = vmatprep.subr.mxu0 0.0
    %243 = vmatpush1.msra.mxu0 0.0
    %244 = vmatprep.subr.mxu0 0.0
    %245 = vmatpush1.msra.mxu0 0.0
    %246 = vmatprep.subr.mxu0 0.0
    %247 = vmatpush1.msra.mxu0 0.0
    %248 = vmatprep.subr.mxu0 0.0
    %249 = vmatpush1.msra.mxu0 0.0
    %250 = vmatprep.subr.mxu0 0.0
    %251 = vmatpush1.msra.mxu0 0.0
    %252 = vmatprep.subr.mxu0 0.0
    %253 = vmatpush1.msra.mxu0 0.0
    %254 = vmatprep.subr.mxu0 0.0
    %255 = vmatpush1.msra.mxu0 0.0
    %256 = vmatprep.subr.mxu0 0.0
    %257 = vmatpush1.msra.mxu0 0.0
    %258 = vmatprep.subr.mxu0 0.0
    %259 = vmatpush1.msra.mxu0 0.0
    %260 = vmatprep.subr.mxu0 0.0
    %261 = vmatpush1.msra.mxu0 0.0
    %262 = vmatprep.subr.mxu0 0.0
    %263 = vmatpush1.msra.mxu0 0.0
    %264 = vmatprep.subr.mxu0 0.0
    %265 = vmatpush1.msra.mxu0 0.0
    %266 = vmatprep.subr.mxu0 0.0
    %267 = vmatpush1.msra.mxu0 0.0
    %268 = vmatprep.mubr.f32.mxu0 0.0
    %269 = vmatmul.mubr.f32.gmra.mrb[0].mxu0 %v85
    %v270 = vpop.f32.mrb[0].mxu0
    %v271 = vadd.f32 0.0, %v270
    %v272 = vpop.f32.mrb[0].mxu0
    %273 = vmatprep.mubr.f32.mxu0 0.0
    %274 = vmatmul.mubr.f32.gmra.mrb[0].mxu0 %v88
    %v275 = vpop.f32.mrb[0].mxu0
    %v276 = vadd.f32 0.0, %v275
    %v277 = vpop.f32.mrb[0].mxu0
    %278 = vdwg.mxu0
    %v279 = vmul.f32 %v271, %v74
    %v280 = vmul.f32 %v276, %v75
    %281 = vrot.lane.b32.xlu0 %v271, 8
    %v282 = vpop.permute.xlu0 %281
    %v283 = vsel %vm167, %v282, %v271
    %284 = vrot.lane.b32.xlu0 %v276, 8
    %v285 = vpop.permute.xlu0 %284
    %v286 = vsel %vm167, %v285, %v276
    %287 = vrot.lane.b32.xlu0 %v283, 8
    %v288 = vpop.permute.xlu0 %287
    %289 = vrot.lane.b32.xlu0 %v286, 8
    %v290 = vpop.permute.xlu0 %289
    %v291 = vsel %vm167, %v288, %v271
    %v292 = vsel %vm167, %v290, %v276
    %v293 = vmul.f32 %v291, %v183
    %v294 = vmul.f32 %v292, %v185
    %297 = vrot.lane.b32.xlu0 %v293, 124
    %v298 = vpop.permute.xlu0 %297
    %299 = vrot.lane.b32.xlu0 %v294, 124
    %v300 = vpop.permute.xlu0 %299
    %v303 = vadd.f32 %v279, %v298
    %v304 = vadd.f32 %v280, %v300
    %v305 = vld [vmem:[%s4] sm:$0xff]
    %v306 = vld [vmem:[%s4 + $0x8] sm:$0xff]
    %v307 = vld [vmem:[%s4 + $0x10] sm:$0xff]
    %v308 = vld [vmem:[%s4 + $0x18] sm:$0xff]
    %309 = vmatprep.subr.mxu0 0.0
    %310 = vmatpush1.msra.mxu0 %v305
    %311 = vmatprep.subr.mxu0 0.0
    %312 = vmatpush1.msra.mxu0 %v306
    %313 = vmatprep.subr.mxu0 0.0
    %314 = vmatpush1.msra.mxu0 %v307
    %315 = vmatprep.subr.mxu0 0.0
    %316 = vmatpush1.msra.mxu0 %v308
    %317 = vmatprep.subr.mxu0 0.0
    %318 = vmatpush1.msra.mxu0 0.0
    %319 = vmatprep.subr.mxu0 0.0
    %320 = vmatpush1.msra.mxu0 0.0
    %321 = vmatprep.subr.mxu0 0.0
    %322 = vmatpush1.msra.mxu0 0.0
    %323 = vmatprep.subr.mxu0 0.0
    %324 = vmatpush1.msra.mxu0 0.0
    %325 = vmatprep.subr.mxu0 0.0
    %326 = vmatpush1.msra.mxu0 0.0
    %327 = vmatprep.subr.mxu0 0.0
    %328 = vmatpush1.msra.mxu0 0.0
    %329 = vmatprep.subr.mxu0 0.0
    %330 = vmatpush1.msra.mxu0 0.0
    %331 = vmatprep.subr.mxu0 0.0
    %332 = vmatpush1.msra.mxu0 0.0
    %333 = vmatprep.subr.mxu0 0.0
    %334 = vmatpush1.msra.mxu0 0.0
    %335 = vmatprep.subr.mxu0 0.0
    %336 = vmatpush1.msra.mxu0 0.0
    %337 = vmatprep.subr.mxu0 0.0
    %338 = vmatpush1.msra.mxu0 0.0
    %339 = vmatprep.subr.mxu0 0.0
    %340 = vmatpush1.msra.mxu0 0.0
    %341 = vmatprep.subr.mxu0 0.0
    %342 = vmatpush1.msra.mxu0 0.0
    %343 = vmatprep.subr.mxu0 0.0
    %344 = vmatpush1.msra.mxu0 0.0
    %345 = vmatprep.subr.mxu0 0.0
    %346 = vmatpush1.msra.mxu0 0.0
    %347 = vmatprep.subr.mxu0 0.0
    %348 = vmatpush1.msra.mxu0 0.0
    %349 = vmatprep.subr.mxu0 0.0
    %350 = vmatpush1.msra.mxu0 0.0
    %351 = vmatprep.subr.mxu0 0.0
    %352 = vmatpush1.msra.mxu0 0.0
    %353 = vmatprep.subr.mxu0 0.0
    %354 = vmatpush1.msra.mxu0 0.0
    %355 = vmatprep.subr.mxu0 0.0
    %356 = vmatpush1.msra.mxu0 0.0
    %357 = vmatprep.subr.mxu0 0.0
    %358 = vmatpush1.msra.mxu0 0.0
    %359 = vmatprep.subr.mxu0 0.0
    %360 = vmatpush1.msra.mxu0 0.0
    %361 = vmatprep.subr.mxu0 0.0
    %362 = vmatpush1.msra.mxu0 0.0
    %363 = vmatprep.subr.mxu0 0.0
    %364 = vmatpush1.msra.mxu0 0.0
    %365 = vmatprep.subr.mxu0 0.0
    %366 = vmatpush1.msra.mxu0 0.0
    %367 = vmatprep.subr.mxu0 0.0
    %368 = vmatpush1.msra.mxu0 0.0
    %369 = vmatprep.subr.mxu0 0.0
    %370 = vmatpush1.msra.mxu0 0.0
    %371 = vmatprep.subr.mxu0 0.0
    %372 = vmatpush1.msra.mxu0 0.0
    %373 = vmatprep.mubr.f32.mxu0 0.0
    %374 = vmatmul.mubr.f32.gmra.mrb[0].mxu0 %v85
    %v375 = vpop.f32.mrb[0].mxu0
    %v376 = vadd.f32 0.0, %v375
    %v377 = vpop.f32.mrb[0].mxu0
    %378 = vmatprep.mubr.f32.mxu0 0.0
    %379 = vmatmul.mubr.f32.gmra.mrb[0].mxu0 %v88
    %v380 = vpop.f32.mrb[0].mxu0
    %v381 = vadd.f32 0.0, %v380
    %v382 = vpop.f32.mrb[0].mxu0
    %383 = vdwg.mxu0
    %vm384 = vcmask 64512
    %v386 = vsel %vm384, %v198, 0
    %v389 = vsel %vm384, %v199, 0
    %v392 = vsel %vm384, %v303, 0
    %v395 = vsel %vm384, %v304, 0
    %397 = vmatprep.subr.mxu0 0.0
    %398 = vmatpush1.xpose.msra.mxu0 %v392
    %399 = vmatprep.subr.mxu0 0.0
    %400 = vmatpush1.xpose.msra.mxu0 %v395
    %401 = vmatprep.subr.mxu0 0.0
    %402 = vmatpush1.xpose.msra.mxu0 0.0
    %403 = vmatprep.subr.mxu0 0.0
    %404 = vmatpush1.xpose.msra.mxu0 0.0
    %405 = vmatprep.subr.mxu0 0.0
    %406 = vmatpush1.xpose.msra.mxu0 0.0
    %407 = vmatprep.subr.mxu0 0.0
    %408 = vmatpush1.xpose.msra.mxu0 0.0
    %409 = vmatprep.subr.mxu0 0.0
    %410 = vmatpush1.xpose.msra.mxu0 0.0
    %411 = vmatprep.subr.mxu0 0.0
    %412 = vmatpush1.xpose.msra.mxu0 0.0
    %413 = vmatprep.subr.mxu0 0.0
    %414 = vmatpush1.xpose.msra.mxu0 0.0
    %415 = vmatprep.subr.mxu0 0.0
    %416 = vmatpush1.xpose.msra.mxu0 0.0
    %417 = vmatprep.subr.mxu0 0.0
    %418 = vmatpush1.xpose.msra.mxu0 0.0
    %419 = vmatprep.subr.mxu0 0.0
    %420 = vmatpush1.xpose.msra.mxu0 0.0
    %421 = vmatprep.subr.mxu0 0.0
    %422 = vmatpush1.xpose.msra.mxu0 0.0
    %423 = vmatprep.subr.mxu0 0.0
    %424 = vmatpush1.xpose.msra.mxu0 0.0
    %425 = vmatprep.subr.mxu0 0.0
    %426 = vmatpush1.xpose.msra.mxu0 0.0
    %427 = vmatprep.subr.mxu0 0.0
    %428 = vmatpush1.xpose.msra.mxu0 0.0
    %429 = vmatprep.subr.mxu0 0.0
    %430 = vmatpush1.xpose.msra.mxu0 0.0
    %431 = vmatprep.subr.mxu0 0.0
    %432 = vmatpush1.xpose.msra.mxu0 0.0
    %433 = vmatprep.subr.mxu0 0.0
    %434 = vmatpush1.xpose.msra.mxu0 0.0
    %435 = vmatprep.subr.mxu0 0.0
    %436 = vmatpush1.xpose.msra.mxu0 0.0
    %437 = vmatprep.subr.mxu0 0.0
    %438 = vmatpush1.xpose.msra.mxu0 0.0
    %439 = vmatprep.subr.mxu0 0.0
    %440 = vmatpush1.xpose.msra.mxu0 0.0
    %441 = vmatprep.subr.mxu0 0.0
    %442 = vmatpush1.xpose.msra.mxu0 0.0
    %443 = vmatprep.subr.mxu0 0.0
    %444 = vmatpush1.xpose.msra.mxu0 0.0
    %445 = vmatprep.subr.mxu0 0.0
    %446 = vmatpush1.xpose.msra.mxu0 0.0
    %447 = vmatprep.subr.mxu0 0.0
    %448 = vmatpush1.xpose.msra.mxu0 0.0
    %449 = vmatprep.subr.mxu0 0.0
    %450 = vmatpush1.xpose.msra.mxu0 0.0
    %451 = vmatprep.subr.mxu0 0.0
    %452 = vmatpush1.xpose.msra.mxu0 0.0
    %453 = vmatprep.subr.mxu0 0.0
    %454 = vmatpush1.xpose.msra.mxu0 0.0
    %455 = vmatprep.subr.mxu0 0.0
    %456 = vmatpush1.xpose.msra.mxu0 0.0
    %457 = vmatprep.subr.mxu0 0.0
    %458 = vmatpush1.xpose.msra.mxu0 0.0
    %459 = vmatprep.subr.mxu0 0.0
    %460 = vmatpush1.xpose.msra.mxu0 0.0
    %461 = vmatprep.mubr.f32.mxu0 0.0
    %462 = vmatmul.mubr.f32.gmra.mrb[0].mxu0 %v386
    %v463 = vpop.f32.mrb[0].mxu0
    %v464 = vadd.f32 0.0, %v463
    %v465 = vpop.f32.mrb[0].mxu0
    %466 = vmatprep.mubr.f32.mxu0 0.0
    %467 = vmatmul.mubr.f32.gmra.mrb[0].mxu0 %v389
    %v468 = vpop.f32.mrb[0].mxu0
    %v469 = vadd.f32 0.0, %v468
    %v470 = vpop.f32.mrb[0].mxu0
    %471 = vdwg.mxu0
    %v472 = vmul.f32 %v464, 0.35355338
    %v473 = vmul.f32 %v469, 0.35355338
    %v474 = vadd.f32 %v472, %v78
    %v475 = vadd.f32 %v473, %v79
    %vm476 = vcmask 130048
    %v477 = vsel %vm476, %v474, -inf
    %478 = vmax.xlane.f32.xlu0 %v477
    %v479 = vpop.xlane.xlu0 %478
    %v480 = vsel %vm476, %v475, -inf
    %481 = vmax.xlane.f32.xlu0 %v480
    %v482 = vpop.xlane.xlu0 %481
    %v483 = vsub.f32 %v474, %v479
    %v484 = vsub.f32 %v475, %v482
    %v485 = vmul.f32 %v483, 1.442695
    %v486 = vpow.pop %v485
    %v487 = vmul.f32 %v484, 1.442695
    %v488 = vpow.pop %v487
    %v489 = vsel %vm476, %v486, 0.0
    %490 = vadd.xlane.f32.xlu0 %v489
    %v491 = vpop.xlane.xlu0 %490
    %v492 = vsel %vm476, %v488, 0.0
    %493 = vadd.xlane.f32.xlu0 %v492
    %v494 = vpop.xlane.xlu0 %493
    %v495 = vrcp.pop %v491
    %v496 = vrcp.pop %v494
    %v497 = vmul.f32 %v486, %v495
    %v498 = vmul.f32 %v488, %v496
    %v500 = vsel %vm476, %v497, 0
    %v503 = vsel %vm476, %v498, 0
    %505 = vmatprep.subr.mxu0 0.0
    %506 = vmatpush1.msra.mxu0 %v376
    %507 = vmatprep.subr.mxu0 0.0
    %508 = vmatpush1.msra.mxu0 %v381
    %509 = vmatprep.subr.mxu0 0.0
    %510 = vmatpush1.msra.mxu0 0.0
    %511 = vmatprep.subr.mxu0 0.0
    %512 = vmatpush1.msra.mxu0 0.0
    %513 = vmatprep.subr.mxu0 0.0
    %514 = vmatpush1.msra.mxu0 0.0
    %515 = vmatprep.subr.mxu0 0.0
    %516 = vmatpush1.msra.mxu0 0.0
    %517 = vmatprep.subr.mxu0 0.0
    %518 = vmatpush1.msra.mxu0 0.0
    %519 = vmatprep.subr.mxu0 0.0
    %520 = vmatpush1.msra.mxu0 0.0
    %521 = vmatprep.subr.mxu0 0.0
    %522 = vmatpush1.msra.mxu0 0.0
    %523 = vmatprep.subr.mxu0 0.0
    %524 = vmatpush1.msra.mxu0 0.0
    %525 = vmatprep.subr.mxu0 0.0
    %526 = vmatpush1.msra.mxu0 0.0
    %527 = vmatprep.subr.mxu0 0.0
    %528 = vmatpush1.msra.mxu0 0.0
    %529 = vmatprep.subr.mxu0 0.0
    %530 = vmatpush1.msra.mxu0 0.0
    %531 = vmatprep.subr.mxu0 0.0
    %532 = vmatpush1.msra.mxu0 0.0
    %533 = vmatprep.subr.mxu0 0.0
    %534 = vmatpush1.msra.mxu0 0.0
    %535 = vmatprep.subr.mxu0 0.0
    %536 = vmatpush1.msra.mxu0 0.0
    %537 = vmatprep.subr.mxu0 0.0
    %538 = vmatpush1.msra.mxu0 0.0
    %539 = vmatprep.subr.mxu0 0.0
    %540 = vmatpush1.msra.mxu0 0.0
    %541 = vmatprep.subr.mxu0 0.0
    %542 = vmatpush1.msra.mxu0 0.0
    %543 = vmatprep.subr.mxu0 0.0
    %544 = vmatpush1.msra.mxu0 0.0
    %545 = vmatprep.subr.mxu0 0.0
    %546 = vmatpush1.msra.mxu0 0.0
    %547 = vmatprep.subr.mxu0 0.0
    %548 = vmatpush1.msra.mxu0 0.0
    %549 = vmatprep.subr.mxu0 0.0
    %550 = vmatpush1.msra.mxu0 0.0
    %551 = vmatprep.subr.mxu0 0.0
    %552 = vmatpush1.msra.mxu0 0.0
    %553 = vmatprep.subr.mxu0 0.0
    %554 = vmatpush1.msra.mxu0 0.0
    %555 = vmatprep.subr.mxu0 0.0
    %556 = vmatpush1.msra.mxu0 0.0
    %557 = vmatprep.subr.mxu0 0.0
    %558 = vmatpush1.msra.mxu0 0.0
    %559 = vmatprep.subr.mxu0 0.0
    %560 = vmatpush1.msra.mxu0 0.0
    %561 = vmatprep.subr.mxu0 0.0
    %562 = vmatpush1.msra.mxu0 0.0
    %563 = vmatprep.subr.mxu0 0.0
    %564 = vmatpush1.msra.mxu0 0.0
    %565 = vmatprep.subr.mxu0 0.0
    %566 = vmatpush1.msra.mxu0 0.0
    %567 = vmatprep.subr.mxu0 0.0
    %568 = vmatpush1.msra.mxu0 0.0
    %569 = vmatprep.mubr.f32.mxu0 0.0
    %570 = vmatmul.mubr.f32.gmra.mrb[0].mxu0 %v500
    %v571 = vpop.f32.mrb[0].mxu0
    %v572 = vadd.f32 0.0, %v571
    %v573 = vpop.f32.mrb[0].mxu0
    %574 = vmatprep.mubr.f32.mxu0 0.0
    %575 = vmatmul.mubr.f32.gmra.mrb[0].mxu0 %v503
    %v576 = vpop.f32.mrb[0].mxu0
    %v577 = vadd.f32 0.0, %v576
    %v578 = vpop.f32.mrb[0].mxu0
    %579 = vdwg.mxu0
    %v580 = vld [vmem:[%s8] sm:$0xff]
    %s581 = scalar_lea.vmem %s2, 32
    %v582 = vld [vmem:[%s581] sm:$0xff]
    %v583 = vld [vmem:[%s581 + $0x8] sm:$0xff]
    %v584 = vld [vmem:[%s581 + $0x10] sm:$0xff]
    %v585 = vld [vmem:[%s581 + $0x18] sm:$0xff]
    %586 = vmatprep.subr.mxu0 0.0
    %587 = vmatpush1.msra.mxu0 %v582
    %588 = vmatprep.subr.mxu0 0.0
    %589 = vmatpush1.msra.mxu0 %v583
    %590 = vmatprep.subr.mxu0 0.0
    %591 = vmatpush1.msra.mxu0 %v584
    %592 = vmatprep.subr.mxu0 0.0
    %593 = vmatpush1.msra.mxu0 %v585
    %594 = vmatprep.subr.mxu0 0.0
    %595 = vmatpush1.msra.mxu0 0.0
    %596 = vmatprep.subr.mxu0 0.0
    %597 = vmatpush1.msra.mxu0 0.0
    %598 = vmatprep.subr.mxu0 0.0
    %599 = vmatpush1.msra.mxu0 0.0
    %600 = vmatprep.subr.mxu0 0.0
    %601 = vmatpush1.msra.mxu0 0.0
    %602 = vmatprep.subr.mxu0 0.0
    %603 = vmatpush1.msra.mxu0 0.0
    %604 = vmatprep.subr.mxu0 0.0
    %605 = vmatpush1.msra.mxu0 0.0
    %606 = vmatprep.subr.mxu0 0.0
    %607 = vmatpush1.msra.mxu0 0.0
    %608 = vmatprep.subr.mxu0 0.0
    %609 = vmatpush1.msra.mxu0 0.0
    %610 = vmatprep.subr.mxu0 0.0
    %611 = vmatpush1.msra.mxu0 0.0
    %612 = vmatprep.subr.mxu0 0.0
    %613 = vmatpush1.msra.mxu0 0.0
    %614 = vmatprep.subr.mxu0 0.0
    %615 = vmatpush1.msra.mxu0 0.0
    %616 = vmatprep.subr.mxu0 0.0
    %617 = vmatpush1.msra.mxu0 0.0
    %618 = vmatprep.subr.mxu0 0.0
    %619 = vmatpush1.msra.mxu0 0.0
    %620 = vmatprep.subr.mxu0 0.0
    %621 = vmatpush1.msra.mxu0 0.0
    %622 = vmatprep.subr.mxu0 0.0
    %623 = vmatpush1.msra.mxu0 0.0
    %624 = vmatprep.subr.mxu0 0.0
    %625 = vmatpush1.msra.mxu0 0.0
    %626 = vmatprep.subr.mxu0 0.0
    %627 = vmatpush1.msra.mxu0 0.0
    %628 = vmatprep.subr.mxu0 0.0
    %629 = vmatpush1.msra.mxu0 0.0
    %630 = vmatprep.subr.mxu0 0.0
    %631 = vmatpush1.msra.mxu0 0.0
    %632 = vmatprep.subr.mxu0 0.0
    %633 = vmatpush1.msra.mxu0 0.0
    %634 = vmatprep.subr.mxu0 0.0
    %635 = vmatpush1.msra.mxu0 0.0
    %636 = vmatprep.subr.mxu0 0.0
    %637 = vmatpush1.msra.mxu0 0.0
    %638 = vmatprep.subr.mxu0 0.0
    %639 = vmatpush1.msra.mxu0 0.0
    %640 = vmatprep.subr.mxu0 0.0
    %641 = vmatpush1.msra.mxu0 0.0
    %642 = vmatprep.subr.mxu0 0.0
    %643 = vmatpush1.msra.mxu0 0.0
    %644 = vmatprep.subr.mxu0 0.0
    %645 = vmatpush1.msra.mxu0 0.0
    %646 = vmatprep.subr.mxu0 0.0
    %647 = vmatpush1.msra.mxu0 0.0
    %648 = vmatprep.subr.mxu0 0.0
    %649 = vmatpush1.msra.mxu0 0.0
    %650 = vmatprep.mubr.f32.mxu0 0.0
    %651 = vmatmul.mubr.f32.gmra.mrb[0].mxu0 %v85
    %v652 = vpop.f32.mrb[0].mxu0
    %v653 = vadd.f32 0.0, %v652
    %v654 = vpop.f32.mrb[0].mxu0
    %655 = vmatprep.mubr.f32.mxu0 0.0
    %656 = vmatmul.mubr.f32.gmra.mrb[0].mxu0 %v88
    %v657 = vpop.f32.mrb[0].mxu0
    %v658 = vadd.f32 0.0, %v657
    %v659 = vpop.f32.mrb[0].mxu0
    %660 = vdwg.mxu0
    %v661 = vmul.f32 %v653, %v74
    %v662 = vmul.f32 %v658, %v75
    %663 = vrot.lane.b32.xlu0 %v653, 8
    %v664 = vpop.permute.xlu0 %663
    %v665 = vsel %vm167, %v664, %v653
    %666 = vrot.lane.b32.xlu0 %v658, 8
    %v667 = vpop.permute.xlu0 %666
    %v668 = vsel %vm167, %v667, %v658
    %669 = vrot.lane.b32.xlu0 %v665, 8
    %v670 = vpop.permute.xlu0 %669
    %671 = vrot.lane.b32.xlu0 %v668, 8
    %v672 = vpop.permute.xlu0 %671
    %v673 = vsel %vm167, %v670, %v653
    %v674 = vsel %vm167, %v672, %v658
    %v675 = vmul.f32 %v673, %v183
    %v676 = vmul.f32 %v674, %v185
    %679 = vrot.lane.b32.xlu0 %v675, 124
    %v680 = vpop.permute.xlu0 %679
    %681 = vrot.lane.b32.xlu0 %v676, 124
    %v682 = vpop.permute.xlu0 %681
    %v685 = vadd.f32 %v661, %v680
    %v686 = vadd.f32 %v662, %v682
    %s687 = scalar_lea.vmem %s3, 32
    %v688 = vld [vmem:[%s687] sm:$0xff]
    %v689 = vld [vmem:[%s687 + $0x8] sm:$0xff]
    %v690 = vld [vmem:[%s687 + $0x10] sm:$0xff]
    %v691 = vld [vmem:[%s687 + $0x18] sm:$0xff]
    %692 = vmatprep.subr.mxu0 0.0
    %693 = vmatpush1.msra.mxu0 %v688
    %694 = vmatprep.subr.mxu0 0.0
    %695 = vmatpush1.msra.mxu0 %v689
    %696 = vmatprep.subr.mxu0 0.0
    %697 = vmatpush1.msra.mxu0 %v690
    %698 = vmatprep.subr.mxu0 0.0
    %699 = vmatpush1.msra.mxu0 %v691
    %700 = vmatprep.subr.mxu0 0.0
    %701 = vmatpush1.msra.mxu0 0.0
    %702 = vmatprep.subr.mxu0 0.0
    %703 = vmatpush1.msra.mxu0 0.0
    %704 = vmatprep.subr.mxu0 0.0
    %705 = vmatpush1.msra.mxu0 0.0
    %706 = vmatprep.subr.mxu0 0.0
    %707 = vmatpush1.msra.mxu0 0.0
    %708 = vmatprep.subr.mxu0 0.0
    %709 = vmatpush1.msra.mxu0 0.0
    %710 = vmatprep.subr.mxu0 0.0
    %711 = vmatpush1.msra.mxu0 0.0
    %712 = vmatprep.subr.mxu0 0.0
    %713 = vmatpush1.msra.mxu0 0.0
    %714 = vmatprep.subr.mxu0 0.0
    %715 = vmatpush1.msra.mxu0 0.0
    %716 = vmatprep.subr.mxu0 0.0
    %717 = vmatpush1.msra.mxu0 0.0
    %718 = vmatprep.subr.mxu0 0.0
    %719 = vmatpush1.msra.mxu0 0.0
    %720 = vmatprep.subr.mxu0 0.0
    %721 = vmatpush1.msra.mxu0 0.0
    %722 = vmatprep.subr.mxu0 0.0
    %723 = vmatpush1.msra.mxu0 0.0
    %724 = vmatprep.subr.mxu0 0.0
    %725 = vmatpush1.msra.mxu0 0.0
    %726 = vmatprep.subr.mxu0 0.0
    %727 = vmatpush1.msra.mxu0 0.0
    %728 = vmatprep.subr.mxu0 0.0
    %729 = vmatpush1.msra.mxu0 0.0
    %730 = vmatprep.subr.mxu0 0.0
    %731 = vmatpush1.msra.mxu0 0.0
    %732 = vmatprep.subr.mxu0 0.0
    %733 = vmatpush1.msra.mxu0 0.0
    %734 = vmatprep.subr.mxu0 0.0
    %735 = vmatpush1.msra.mxu0 0.0
    %736 = vmatprep.subr.mxu0 0.0
    %737 = vmatpush1.msra.mxu0 0.0
    %738 = vmatprep.subr.mxu0 0.0
    %739 = vmatpush1.msra.mxu0 0.0
    %740 = vmatprep.subr.mxu0 0.0
    %741 = vmatpush1.msra.mxu0 0.0
    %742 = vmatprep.subr.mxu0 0.0
    %743 = vmatpush1.msra.mxu0 0.0
    %744 = vmatprep.subr.mxu0 0.0
    %745 = vmatpush1.msra.mxu0 0.0
    %746 = vmatprep.subr.mxu0 0.0
    %747 = vmatpush1.msra.mxu0 0.0
    %748 = vmatprep.subr.mxu0 0.0
    %749 = vmatpush1.msra.mxu0 0.0
    %750 = vmatprep.subr.mxu0 0.0
    %751 = vmatpush1.msra.mxu0 0.0
    %752 = vmatprep.subr.mxu0 0.0
    %753 = vmatpush1.msra.mxu0 0.0
    %754 = vmatprep.subr.mxu0 0.0
    %755 = vmatpush1.msra.mxu0 0.0
    %756 = vmatprep.mubr.f32.mxu0 0.0
    %757 = vmatmul.mubr.f32.gmra.mrb[0].mxu0 %v85
    %v758 = vpop.f32.mrb[0].mxu0
    %v759 = vadd.f32 0.0, %v758
    %v760 = vpop.f32.mrb[0].mxu0
    %761 = vmatprep.mubr.f32.mxu0 0.0
    %762 = vmatmul.mubr.f32.gmra.mrb[0].mxu0 %v88
    %v763 = vpop.f32.mrb[0].mxu0
    %v764 = vadd.f32 0.0, %v763
    %v765 = vpop.f32.mrb[0].mxu0
    %766 = vdwg.mxu0
    %v767 = vmul.f32 %v759, %v74
    %v768 = vmul.f32 %v764, %v75
    %769 = vrot.lane.b32.xlu0 %v759, 8
    %v770 = vpop.permute.xlu0 %769
    %v771 = vsel %vm167, %v770, %v759
    %772 = vrot.lane.b32.xlu0 %v764, 8
    %v773 = vpop.permute.xlu0 %772
    %v774 = vsel %vm167, %v773, %v764
    %775 = vrot.lane.b32.xlu0 %v771, 8
    %v776 = vpop.permute.xlu0 %775
    %777 = vrot.lane.b32.xlu0 %v774, 8
    %v778 = vpop.permute.xlu0 %777
    %v779 = vsel %vm167, %v776, %v759
    %v780 = vsel %vm167, %v778, %v764
    %v781 = vmul.f32 %v779, %v183
    %v782 = vmul.f32 %v780, %v185
    %785 = vrot.lane.b32.xlu0 %v781, 124
    %v786 = vpop.permute.xlu0 %785
    %787 = vrot.lane.b32.xlu0 %v782, 124
    %v788 = vpop.permute.xlu0 %787
    %v791 = vadd.f32 %v767, %v786
    %v792 = vadd.f32 %v768, %v788
    %s793 = scalar_lea.vmem %s4, 32
    %v794 = vld [vmem:[%s793] sm:$0xff]
    %v795 = vld [vmem:[%s793 + $0x8] sm:$0xff]
    %v796 = vld [vmem:[%s793 + $0x10] sm:$0xff]
    %v797 = vld [vmem:[%s793 + $0x18] sm:$0xff]
    %798 = vmatprep.subr.mxu0 0.0
    %799 = vmatpush1.msra.mxu0 %v794
    %800 = vmatprep.subr.mxu0 0.0
    %801 = vmatpush1.msra.mxu0 %v795
    %802 = vmatprep.subr.mxu0 0.0
    %803 = vmatpush1.msra.mxu0 %v796
    %804 = vmatprep.subr.mxu0 0.0
    %805 = vmatpush1.msra.mxu0 %v797
    %806 = vmatprep.subr.mxu0 0.0
    %807 = vmatpush1.msra.mxu0 0.0
    %808 = vmatprep.subr.mxu0 0.0
    %809 = vmatpush1.msra.mxu0 0.0
    %810 = vmatprep.subr.mxu0 0.0
    %811 = vmatpush1.msra.mxu0 0.0
    %812 = vmatprep.subr.mxu0 0.0
    %813 = vmatpush1.msra.mxu0 0.0
    %814 = vmatprep.subr.mxu0 0.0
    %815 = vmatpush1.msra.mxu0 0.0
    %816 = vmatprep.subr.mxu0 0.0
    %817 = vmatpush1.msra.mxu0 0.0
    %818 = vmatprep.subr.mxu0 0.0
    %819 = vmatpush1.msra.mxu0 0.0
    %820 = vmatprep.subr.mxu0 0.0
    %821 = vmatpush1.msra.mxu0 0.0
    %822 = vmatprep.subr.mxu0 0.0
    %823 = vmatpush1.msra.mxu0 0.0
    %824 = vmatprep.subr.mxu0 0.0
    %825 = vmatpush1.msra.mxu0 0.0
    %826 = vmatprep.subr.mxu0 0.0
    %827 = vmatpush1.msra.mxu0 0.0
    %828 = vmatprep.subr.mxu0 0.0
    %829 = vmatpush1.msra.mxu0 0.0
    %830 = vmatprep.subr.mxu0 0.0
    %831 = vmatpush1.msra.mxu0 0.0
    %832 = vmatprep.subr.mxu0 0.0
    %833 = vmatpush1.msra.mxu0 0.0
    %834 = vmatprep.subr.mxu0 0.0
    %835 = vmatpush1.msra.mxu0 0.0
    %836 = vmatprep.subr.mxu0 0.0
    %837 = vmatpush1.msra.mxu0 0.0
    %838 = vmatprep.subr.mxu0 0.0
    %839 = vmatpush1.msra.mxu0 0.0
    %840 = vmatprep.subr.mxu0 0.0
    %841 = vmatpush1.msra.mxu0 0.0
    %842 = vmatprep.subr.mxu0 0.0
    %843 = vmatpush1.msra.mxu0 0.0
    %844 = vmatprep.subr.mxu0 0.0
    %845 = vmatpush1.msra.mxu0 0.0
    %846 = vmatprep.subr.mxu0 0.0
    %847 = vmatpush1.msra.mxu0 0.0
    %848 = vmatprep.subr.mxu0 0.0
    %849 = vmatpush1.msra.mxu0 0.0
    %850 = vmatprep.subr.mxu0 0.0
    %851 = vmatpush1.msra.mxu0 0.0
    %852 = vmatprep.subr.mxu0 0.0
    %853 = vmatpush1.msra.mxu0 0.0
    %854 = vmatprep.subr.mxu0 0.0
    %855 = vmatpush1.msra.mxu0 0.0
    %856 = vmatprep.subr.mxu0 0.0
    %857 = vmatpush1.msra.mxu0 0.0
    %858 = vmatprep.subr.mxu0 0.0
    %859 = vmatpush1.msra.mxu0 0.0
    %860 = vmatprep.subr.mxu0 0.0
    %861 = vmatpush1.msra.mxu0 0.0
    %862 = vmatprep.mubr.f32.mxu0 0.0
    %863 = vmatmul.mubr.f32.gmra.mrb[0].mxu0 %v85
    %v864 = vpop.f32.mrb[0].mxu0
    %v865 = vadd.f32 0.0, %v864
    %v866 = vpop.f32.mrb[0].mxu0
    %867 = vmatprep.mubr.f32.mxu0 0.0
    %868 = vmatmul.mubr.f32.gmra.mrb[0].mxu0 %v88
    %v869 = vpop.f32.mrb[0].mxu0
    %v870 = vadd.f32 0.0, %v869
    %v871 = vpop.f32.mrb[0].mxu0
    %872 = vdwg.mxu0
    %v874 = vsel %vm384, %v685, 0
    %v877 = vsel %vm384, %v686, 0
    %v880 = vsel %vm384, %v791, 0
    %v883 = vsel %vm384, %v792, 0
    %885 = vmatprep.subr.mxu0 0.0
    %886 = vmatpush1.xpose.msra.mxu0 %v880
    %887 = vmatprep.subr.mxu0 0.0
    %888 = vmatpush1.xpose.msra.mxu0 %v883
    %889 = vmatprep.subr.mxu0 0.0
    %890 = vmatpush1.xpose.msra.mxu0 0.0
    %891 = vmatprep.subr.mxu0 0.0
    %892 = vmatpush1.xpose.msra.mxu0 0.0
    %893 = vmatprep.subr.mxu0 0.0
    %894 = vmatpush1.xpose.msra.mxu0 0.0
    %895 = vmatprep.subr.mxu0 0.0
    %896 = vmatpush1.xpose.msra.mxu0 0.0
    %897 = vmatprep.subr.mxu0 0.0
    %898 = vmatpush1.xpose.msra.mxu0 0.0
    %899 = vmatprep.subr.mxu0 0.0
    %900 = vmatpush1.xpose.msra.mxu0 0.0
    %901 = vmatprep.subr.mxu0 0.0
    %902 = vmatpush1.xpose.msra.mxu0 0.0
    %903 = vmatprep.subr.mxu0 0.0
    %904 = vmatpush1.xpose.msra.mxu0 0.0
    %905 = vmatprep.subr.mxu0 0.0
    %906 = vmatpush1.xpose.msra.mxu0 0.0
    %907 = vmatprep.subr.mxu0 0.0
    %908 = vmatpush1.xpose.msra.mxu0 0.0
    %909 = vmatprep.subr.mxu0 0.0
    %910 = vmatpush1.xpose.msra.mxu0 0.0
    %911 = vmatprep.subr.mxu0 0.0
    %912 = vmatpush1.xpose.msra.mxu0 0.0
    %913 = vmatprep.subr.mxu0 0.0
    %914 = vmatpush1.xpose.msra.mxu0 0.0
    %915 = vmatprep.subr.mxu0 0.0
    %916 = vmatpush1.xpose.msra.mxu0 0.0
    %917 = vmatprep.subr.mxu0 0.0
    %918 = vmatpush1.xpose.msra.mxu0 0.0
    %919 = vmatprep.subr.mxu0 0.0
    %920 = vmatpush1.xpose.msra.mxu0 0.0
    %921 = vmatprep.subr.mxu0 0.0
    %922 = vmatpush1.xpose.msra.mxu0 0.0
    %923 = vmatprep.subr.mxu0 0.0
    %924 = vmatpush1.xpose.msra.mxu0 0.0
    %925 = vmatprep.subr.mxu0 0.0
    %926 = vmatpush1.xpose.msra.mxu0 0.0
    %927 = vmatprep.subr.mxu0 0.0
    %928 = vmatpush1.xpose.msra.mxu0 0.0
    %929 = vmatprep.subr.mxu0 0.0
    %930 = vmatpush1.xpose.msra.mxu0 0.0
    %931 = vmatprep.subr.mxu0 0.0
    %932 = vmatpush1.xpose.msra.mxu0 0.0
    %933 = vmatprep.subr.mxu0 0.0
    %934 = vmatpush1.xpose.msra.mxu0 0.0
    %935 = vmatprep.subr.mxu0 0.0
    %936 = vmatpush1.xpose.msra.mxu0 0.0
    %937 = vmatprep.subr.mxu0 0.0
    %938 = vmatpush1.xpose.msra.mxu0 0.0
    %939 = vmatprep.subr.mxu0 0.0
    %940 = vmatpush1.xpose.msra.mxu0 0.0
    %941 = vmatprep.subr.mxu0 0.0
    %942 = vmatpush1.xpose.msra.mxu0 0.0
    %943 = vmatprep.subr.mxu0 0.0
    %944 = vmatpush1.xpose.msra.mxu0 0.0
    %945 = vmatprep.subr.mxu0 0.0
    %946 = vmatpush1.xpose.msra.mxu0 0.0
    %947 = vmatprep.subr.mxu0 0.0
    %948 = vmatpush1.xpose.msra.mxu0 0.0
    %949 = vmatprep.mubr.f32.mxu0 0.0
    %950 = vmatmul.mubr.f32.gmra.mrb[0].mxu0 %v874
    %v951 = vpop.f32.mrb[0].mxu0
    %v952 = vadd.f32 0.0, %v951
    %v953 = vpop.f32.mrb[0].mxu0
    %954 = vmatprep.mubr.f32.mxu0 0.0
    %955 = vmatmul.mubr.f32.gmra.mrb[0].mxu0 %v877
    %v956 = vpop.f32.mrb[0].mxu0
    %v957 = vadd.f32 0.0, %v956
    %v958 = vpop.f32.mrb[0].mxu0
    %959 = vdwg.mxu0
    %v960 = vmul.f32 %v952, 0.35355338
    %v961 = vmul.f32 %v957, 0.35355338
    %v962 = vadd.f32 %v960, %v78
    %v963 = vadd.f32 %v961, %v79
    %v964 = vsel %vm476, %v962, -inf
    %965 = vmax.xlane.f32.xlu0 %v964
    %v966 = vpop.xlane.xlu0 %965
    %v967 = vsel %vm476, %v963, -inf
    %968 = vmax.xlane.f32.xlu0 %v967
    %v969 = vpop.xlane.xlu0 %968
    %v970 = vsub.f32 %v962, %v966
    %v971 = vsub.f32 %v963, %v969
    %v972 = vmul.f32 %v970, 1.442695
    %v973 = vpow.pop %v972
    %v974 = vmul.f32 %v971, 1.442695
    %v975 = vpow.pop %v974
    %v976 = vsel %vm476, %v973, 0.0
    %977 = vadd.xlane.f32.xlu0 %v976
    %v978 = vpop.xlane.xlu0 %977
    %v979 = vsel %vm476, %v975, 0.0
    %980 = vadd.xlane.f32.xlu0 %v979
    %v981 = vpop.xlane.xlu0 %980
    %v982 = vrcp.pop %v978
    %v983 = vrcp.pop %v981
    %v984 = vmul.f32 %v973, %v982
    %v985 = vmul.f32 %v975, %v983
    %v987 = vsel %vm476, %v984, 0
    %v990 = vsel %vm476, %v985, 0
    %992 = vmatprep.subr.mxu0 0.0
    %993 = vmatpush1.msra.mxu0 %v865
    %994 = vmatprep.subr.mxu0 0.0
    %995 = vmatpush1.msra.mxu0 %v870
    %996 = vmatprep.subr.mxu0 0.0
    %997 = vmatpush1.msra.mxu0 0.0
    %998 = vmatprep.subr.mxu0 0.0
    %999 = vmatpush1.msra.mxu0 0.0
    %1000 = vmatprep.subr.mxu0 0.0
    %1001 = vmatpush1.msra.mxu0 0.0
    %1002 = vmatprep.subr.mxu0 0.0
    %1003 = vmatpush1.msra.mxu0 0.0
    %1004 = vmatprep.subr.mxu0 0.0
    %1005 = vmatpush1.msra.mxu0 0.0
    %1006 = vmatprep.subr.mxu0 0.0
    %1007 = vmatpush1.msra.mxu0 0.0
    %1008 = vmatprep.subr.mxu0 0.0
    %1009 = vmatpush1.msra.mxu0 0.0
    %1010 = vmatprep.subr.mxu0 0.0
    %1011 = vmatpush1.msra.mxu0 0.0
    %1012 = vmatprep.subr.mxu0 0.0
    %1013 = vmatpush1.msra.mxu0 0.0
    %1014 = vmatprep.subr.mxu0 0.0
    %1015 = vmatpush1.msra.mxu0 0.0
    %1016 = vmatprep.subr.mxu0 0.0
    %1017 = vmatpush1.msra.mxu0 0.0
    %1018 = vmatprep.subr.mxu0 0.0
    %1019 = vmatpush1.msra.mxu0 0.0
    %1020 = vmatprep.subr.mxu0 0.0
    %1021 = vmatpush1.msra.mxu0 0.0
    %1022 = vmatprep.subr.mxu0 0.0
    %1023 = vmatpush1.msra.mxu0 0.0
    %1024 = vmatprep.subr.mxu0 0.0
    %1025 = vmatpush1.msra.mxu0 0.0
    %1026 = vmatprep.subr.mxu0 0.0
    %1027 = vmatpush1.msra.mxu0 0.0
    %1028 = vmatprep.subr.mxu0 0.0
    %1029 = vmatpush1.msra.mxu0 0.0
    %1030 = vmatprep.subr.mxu0 0.0
    %1031 = vmatpush1.msra.mxu0 0.0
    %1032 = vmatprep.subr.mxu0 0.0
    %1033 = vmatpush1.msra.mxu0 0.0
    %1034 = vmatprep.subr.mxu0 0.0
    %1035 = vmatpush1.msra.mxu0 0.0
    %1036 = vmatprep.subr.mxu0 0.0
    %1037 = vmatpush1.msra.mxu0 0.0
    %1038 = vmatprep.subr.mxu0 0.0
    %1039 = vmatpush1.msra.mxu0 0.0
    %1040 = vmatprep.subr.mxu0 0.0
    %1041 = vmatpush1.msra.mxu0 0.0
    %1042 = vmatprep.subr.mxu0 0.0
    %1043 = vmatpush1.msra.mxu0 0.0
    %1044 = vmatprep.subr.mxu0 0.0
    %1045 = vmatpush1.msra.mxu0 0.0
    %1046 = vmatprep.subr.mxu0 0.0
    %1047 = vmatpush1.msra.mxu0 0.0
    %1048 = vmatprep.subr.mxu0 0.0
    %1049 = vmatpush1.msra.mxu0 0.0
    %1050 = vmatprep.subr.mxu0 0.0
    %1051 = vmatpush1.msra.mxu0 0.0
    %1052 = vmatprep.subr.mxu0 0.0
    %1053 = vmatpush1.msra.mxu0 0.0
    %1054 = vmatprep.subr.mxu0 0.0
    %1055 = vmatpush1.msra.mxu0 0.0
    %1056 = vmatprep.mubr.f32.mxu0 0.0
    %1057 = vmatmul.mubr.f32.gmra.mrb[0].mxu0 %v987
    %v1058 = vpop.f32.mrb[0].mxu0
    %v1059 = vadd.f32 0.0, %v1058
    %v1060 = vpop.f32.mrb[0].mxu0
    %1061 = vmatprep.mubr.f32.mxu0 0.0
    %1062 = vmatmul.mubr.f32.gmra.mrb[0].mxu0 %v990
    %v1063 = vpop.f32.mrb[0].mxu0
    %v1064 = vadd.f32 0.0, %v1063
    %v1065 = vpop.f32.mrb[0].mxu0
    %1066 = vdwg.mxu0
    %s1067 = scalar_lea.vmem %s8, 8
    %v1068 = vld [vmem:[%s1067] sm:$0xff]
    %v1070 = vsel %vm384, %v1059, 0
    %v1073 = vsel %vm384, %v1064, 0
    %1075 = vmatprep.subr.mxu0 0.0
    %1076 = vmatpush1.msra.mxu0 %v1068
    %1077 = vmatprep.subr.mxu0 0.0
    %1078 = vmatpush1.msra.mxu0 0.0
    %1079 = vmatprep.subr.mxu0 0.0
    %1080 = vmatpush1.msra.mxu0 0.0
    %1081 = vmatprep.subr.mxu0 0.0
    %1082 = vmatpush1.msra.mxu0 0.0
    %1083 = vmatprep.subr.mxu0 0.0
    %1084 = vmatpush1.msra.mxu0 0.0
    %1085 = vmatprep.subr.mxu0 0.0
    %1086 = vmatpush1.msra.mxu0 0.0
    %1087 = vmatprep.subr.mxu0 0.0
    %1088 = vmatpush1.msra.mxu0 0.0
    %1089 = vmatprep.subr.mxu0 0.0
    %1090 = vmatpush1.msra.mxu0 0.0
    %1091 = vmatprep.subr.mxu0 0.0
    %1092 = vmatpush1.msra.mxu0 0.0
    %1093 = vmatprep.subr.mxu0 0.0
    %1094 = vmatpush1.msra.mxu0 0.0
    %1095 = vmatprep.subr.mxu0 0.0
    %1096 = vmatpush1.msra.mxu0 0.0
    %1097 = vmatprep.subr.mxu0 0.0
    %1098 = vmatpush1.msra.mxu0 0.0
    %1099 = vmatprep.subr.mxu0 0.0
    %1100 = vmatpush1.msra.mxu0 0.0
    %1101 = vmatprep.subr.mxu0 0.0
    %1102 = vmatpush1.msra.mxu0 0.0
    %1103 = vmatprep.subr.mxu0 0.0
    %1104 = vmatpush1.msra.mxu0 0.0
    %1105 = vmatprep.subr.mxu0 0.0
    %1106 = vmatpush1.msra.mxu0 0.0
    %1107 = vmatprep.subr.mxu0 0.0
    %1108 = vmatpush1.msra.mxu0 0.0
    %1109 = vmatprep.subr.mxu0 0.0
    %1110 = vmatpush1.msra.mxu0 0.0
    %1111 = vmatprep.subr.mxu0 0.0
    %1112 = vmatpush1.msra.mxu0 0.0
    %1113 = vmatprep.subr.mxu0 0.0
    %1114 = vmatpush1.msra.mxu0 0.0
    %1115 = vmatprep.subr.mxu0 0.0
    %1116 = vmatpush1.msra.mxu0 0.0
    %1117 = vmatprep.subr.mxu0 0.0
    %1118 = vmatpush1.msra.mxu0 0.0
    %1119 = vmatprep.subr.mxu0 0.0
    %1120 = vmatpush1.msra.mxu0 0.0
    %1121 = vmatprep.subr.mxu0 0.0
    %1122 = vmatpush1.msra.mxu0 0.0
    %1123 = vmatprep.subr.mxu0 0.0
    %1124 = vmatpush1.msra.mxu0 0.0
    %1125 = vmatprep.subr.mxu0 0.0
    %1126 = vmatpush1.msra.mxu0 0.0
    %1127 = vmatprep.subr.mxu0 0.0
    %1128 = vmatpush1.msra.mxu0 0.0
    %1129 = vmatprep.subr.mxu0 0.0
    %1130 = vmatpush1.msra.mxu0 0.0
    %1131 = vmatprep.subr.mxu0 0.0
    %1132 = vmatpush1.msra.mxu0 0.0
    %1133 = vmatprep.subr.mxu0 0.0
    %1134 = vmatpush1.msra.mxu0 0.0
    %1135 = vmatprep.subr.mxu0 0.0
    %1136 = vmatpush1.msra.mxu0 0.0
    %1137 = vmatprep.subr.mxu0 0.0
    %1138 = vmatpush1.msra.mxu0 0.0
    %1139 = vmatprep.mubr.f32.mxu0 0.0
    %1140 = vmatmul.mubr.f32.gmra.mrb[0].mxu0 %v1070
    %v1141 = vpop.f32.mrb[0].mxu0
    %v1142 = vadd.f32 0.0, %v1141
    %v1143 = vpop.f32.mrb[0].mxu0
    %1144 = vmatprep.mubr.f32.mxu0 0.0
    %1145 = vmatmul.mubr.f32.gmra.mrb[0].mxu0 %v1073
    %v1146 = vpop.f32.mrb[0].mxu0
    %v1147 = vadd.f32 0.0, %v1146
    %v1148 = vpop.f32.mrb[0].mxu0
    %1149 = vdwg.mxu0
    %v1151 = vsel %vm384, %v572, 0
    %v1154 = vsel %vm384, %v577, 0
    %1156 = vmatprep.subr.mxu0 0.0
    %1157 = vmatpush1.msra.mxu0 %v580
    %1158 = vmatprep.subr.mxu0 0.0
    %1159 = vmatpush1.msra.mxu0 0.0
    %1160 = vmatprep.subr.mxu0 0.0
    %1161 = vmatpush1.msra.mxu0 0.0
    %1162 = vmatprep.subr.mxu0 0.0
    %1163 = vmatpush1.msra.mxu0 0.0
    %1164 = vmatprep.subr.mxu0 0.0
    %1165 = vmatpush1.msra.mxu0 0.0
    %1166 = vmatprep.subr.mxu0 0.0
    %1167 = vmatpush1.msra.mxu0 0.0
    %1168 = vmatprep.subr.mxu0 0.0
    %1169 = vmatpush1.msra.mxu0 0.0
    %1170 = vmatprep.subr.mxu0 0.0
    %1171 = vmatpush1.msra.mxu0 0.0
    %1172 = vmatprep.subr.mxu0 0.0
    %1173 = vmatpush1.msra.mxu0 0.0
    %1174 = vmatprep.subr.mxu0 0.0
    %1175 = vmatpush1.msra.mxu0 0.0
    %1176 = vmatprep.subr.mxu0 0.0
    %1177 = vmatpush1.msra.mxu0 0.0
    %1178 = vmatprep.subr.mxu0 0.0
    %1179 = vmatpush1.msra.mxu0 0.0
    %1180 = vmatprep.subr.mxu0 0.0
    %1181 = vmatpush1.msra.mxu0 0.0
    %1182 = vmatprep.subr.mxu0 0.0
    %1183 = vmatpush1.msra.mxu0 0.0
    %1184 = vmatprep.subr.mxu0 0.0
    %1185 = vmatpush1.msra.mxu0 0.0
    %1186 = vmatprep.subr.mxu0 0.0
    %1187 = vmatpush1.msra.mxu0 0.0
    %1188 = vmatprep.subr.mxu0 0.0
    %1189 = vmatpush1.msra.mxu0 0.0
    %1190 = vmatprep.subr.mxu0 0.0
    %1191 = vmatpush1.msra.mxu0 0.0
    %1192 = vmatprep.subr.mxu0 0.0
    %1193 = vmatpush1.msra.mxu0 0.0
    %1194 = vmatprep.subr.mxu0 0.0
    %1195 = vmatpush1.msra.mxu0 0.0
    %1196 = vmatprep.subr.mxu0 0.0
    %1197 = vmatpush1.msra.mxu0 0.0
    %1198 = vmatprep.subr.mxu0 0.0
    %1199 = vmatpush1.msra.mxu0 0.0
    %1200 = vmatprep.subr.mxu0 0.0
    %1201 = vmatpush1.msra.mxu0 0.0
    %1202 = vmatprep.subr.mxu0 0.0
    %1203 = vmatpush1.msra.mxu0 0.0
    %1204 = vmatprep.subr.mxu0 0.0
    %1205 = vmatpush1.msra.mxu0 0.0
    %1206 = vmatprep.subr.mxu0 0.0
    %1207 = vmatpush1.msra.mxu0 0.0
    %1208 = vmatprep.subr.mxu0 0.0
    %1209 = vmatpush1.msra.mxu0 0.0
    %1210 = vmatprep.subr.mxu0 0.0
    %1211 = vmatpush1.msra.mxu0 0.0
    %1212 = vmatprep.subr.mxu0 0.0
    %1213 = vmatpush1.msra.mxu0 0.0
    %1214 = vmatprep.subr.mxu0 0.0
    %1215 = vmatpush1.msra.mxu0 0.0
    %1216 = vmatprep.subr.mxu0 0.0
    %1217 = vmatpush1.msra.mxu0 0.0
    %1218 = vmatprep.subr.mxu0 0.0
    %1219 = vmatpush1.msra.mxu0 0.0
    %1220 = vmatprep.mubr.f32.mxu0 0.0
    %1221 = vmatmul.mubr.f32.gmra.mrb[0].mxu0 %v1151
    %v1222 = vpop.f32.mrb[0].mxu0
    %v1223 = vadd.f32 %v1142, %v1222
    %v1224 = vpop.f32.mrb[0].mxu0
    %1225 = vmatprep.mubr.f32.mxu0 0.0
    %1226 = vmatmul.mubr.f32.gmra.mrb[0].mxu0 %v1154
    %v1227 = vpop.f32.mrb[0].mxu0
    %v1228 = vadd.f32 %v1147, %v1227
    %v1229 = vpop.f32.mrb[0].mxu0
    %1230 = vdwg.mxu0
    %s1231 = scalar_lea.vmem %s2, 64
    %v1232 = vld [vmem:[%s1231] sm:$0xff]
    %v1233 = vld [vmem:[%s1231 + $0x8] sm:$0xff]
    %v1234 = vld [vmem:[%s1231 + $0x10] sm:$0xff]
    %v1235 = vld [vmem:[%s1231 + $0x18] sm:$0xff]
    %1236 = vmatprep.subr.mxu0 0.0
    %1237 = vmatpush1.msra.mxu0 %v1232
    %1238 = vmatprep.subr.mxu0 0.0
    %1239 = vmatpush1.msra.mxu0 %v1233
    %1240 = vmatprep.subr.mxu0 0.0
    %1241 = vmatpush1.msra.mxu0 %v1234
    %1242 = vmatprep.subr.mxu0 0.0
    %1243 = vmatpush1.msra.mxu0 %v1235
    %1244 = vmatprep.subr.mxu0 0.0
    %1245 = vmatpush1.msra.mxu0 0.0
    %1246 = vmatprep.subr.mxu0 0.0
    %1247 = vmatpush1.msra.mxu0 0.0
    %1248 = vmatprep.subr.mxu0 0.0
    %1249 = vmatpush1.msra.mxu0 0.0
    %1250 = vmatprep.subr.mxu0 0.0
    %1251 = vmatpush1.msra.mxu0 0.0
    %1252 = vmatprep.subr.mxu0 0.0
    %1253 = vmatpush1.msra.mxu0 0.0
    %1254 = vmatprep.subr.mxu0 0.0
    %1255 = vmatpush1.msra.mxu0 0.0
    %1256 = vmatprep.subr.mxu0 0.0
    %1257 = vmatpush1.msra.mxu0 0.0
    %1258 = vmatprep.subr.mxu0 0.0
    %1259 = vmatpush1.msra.mxu0 0.0
    %1260 = vmatprep.subr.mxu0 0.0
    %1261 = vmatpush1.msra.mxu0 0.0
    %1262 = vmatprep.subr.mxu0 0.0
    %1263 = vmatpush1.msra.mxu0 0.0
    %1264 = vmatprep.subr.mxu0 0.0
    %1265 = vmatpush1.msra.mxu0 0.0
    %1266 = vmatprep.subr.mxu0 0.0
    %1267 = vmatpush1.msra.mxu0 0.0
    %1268 = vmatprep.subr.mxu0 0.0
    %1269 = vmatpush1.msra.mxu0 0.0
    %1270 = vmatprep.subr.mxu0 0.0
    %1271 = vmatpush1.msra.mxu0 0.0
    %1272 = vmatprep.subr.mxu0 0.0
    %1273 = vmatpush1.msra.mxu0 0.0
    %1274 = vmatprep.subr.mxu0 0.0
    %1275 = vmatpush1.msra.mxu0 0.0
    %1276 = vmatprep.subr.mxu0 0.0
    %1277 = vmatpush1.msra.mxu0 0.0
    %1278 = vmatprep.subr.mxu0 0.0
    %1279 = vmatpush1.msra.mxu0 0.0
    %1280 = vmatprep.subr.mxu0 0.0
    %1281 = vmatpush1.msra.mxu0 0.0
    %1282 = vmatprep.subr.mxu0 0.0
    %1283 = vmatpush1.msra.mxu0 0.0
    %1284 = vmatprep.subr.mxu0 0.0
    %1285 = vmatpush1.msra.mxu0 0.0
    %1286 = vmatprep.subr.mxu0 0.0
    %1287 = vmatpush1.msra.mxu0 0.0
    %1288 = vmatprep.subr.mxu0 0.0
    %1289 = vmatpush1.msra.mxu0 0.0
    %1290 = vmatprep.subr.mxu0 0.0
    %1291 = vmatpush1.msra.mxu0 0.0
    %1292 = vmatprep.subr.mxu0 0.0
    %1293 = vmatpush1.msra.mxu0 0.0
    %1294 = vmatprep.subr.mxu0 0.0
    %1295 = vmatpush1.msra.mxu0 0.0
    %1296 = vmatprep.subr.mxu0 0.0
    %1297 = vmatpush1.msra.mxu0 0.0
    %1298 = vmatprep.subr.mxu0 0.0
    %1299 = vmatpush1.msra.mxu0 0.0
    %1300 = vmatprep.mubr.f32.mxu0 0.0
    %1301 = vmatmul.mubr.f32.gmra.mrb[0].mxu0 %v85
    %v1302 = vpop.f32.mrb[0].mxu0
    %v1303 = vadd.f32 0.0, %v1302
    %v1304 = vpop.f32.mrb[0].mxu0
    %1305 = vmatprep.mubr.f32.mxu0 0.0
    %1306 = vmatmul.mubr.f32.gmra.mrb[0].mxu0 %v88
    %v1307 = vpop.f32.mrb[0].mxu0
    %v1308 = vadd.f32 0.0, %v1307
    %v1309 = vpop.f32.mrb[0].mxu0
    %1310 = vdwg.mxu0
    %v1311 = vmul.f32 %v1303, %v74
    %v1312 = vmul.f32 %v1308, %v75
    %1313 = vrot.lane.b32.xlu0 %v1303, 8
    %v1314 = vpop.permute.xlu0 %1313
    %v1315 = vsel %vm167, %v1314, %v1303
    %1316 = vrot.lane.b32.xlu0 %v1308, 8
    %v1317 = vpop.permute.xlu0 %1316
    %v1318 = vsel %vm167, %v1317, %v1308
    %1319 = vrot.lane.b32.xlu0 %v1315, 8
    %v1320 = vpop.permute.xlu0 %1319
    %1321 = vrot.lane.b32.xlu0 %v1318, 8
    %v1322 = vpop.permute.xlu0 %1321
    %v1323 = vsel %vm167, %v1320, %v1303
    %v1324 = vsel %vm167, %v1322, %v1308
    %v1325 = vmul.f32 %v1323, %v183
    %v1326 = vmul.f32 %v1324, %v185
    %1329 = vrot.lane.b32.xlu0 %v1325, 124
    %v1330 = vpop.permute.xlu0 %1329
    %1331 = vrot.lane.b32.xlu0 %v1326, 124
    %v1332 = vpop.permute.xlu0 %1331
    %v1335 = vadd.f32 %v1311, %v1330
    %v1336 = vadd.f32 %v1312, %v1332
    %s1337 = scalar_lea.vmem %s3, 64
    %v1338 = vld [vmem:[%s1337] sm:$0xff]
    %v1339 = vld [vmem:[%s1337 + $0x8] sm:$0xff]
    %v1340 = vld [vmem:[%s1337 + $0x10] sm:$0xff]
    %v1341 = vld [vmem:[%s1337 + $0x18] sm:$0xff]
    %1342 = vmatprep.subr.mxu0 0.0
    %1343 = vmatpush1.msra.mxu0 %v1338
    %1344 = vmatprep.subr.mxu0 0.0
    %1345 = vmatpush1.msra.mxu0 %v1339
    %1346 = vmatprep.subr.mxu0 0.0
    %1347 = vmatpush1.msra.mxu0 %v1340
    %1348 = vmatprep.subr.mxu0 0.0
    %1349 = vmatpush1.msra.mxu0 %v1341
    %1350 = vmatprep.subr.mxu0 0.0
    %1351 = vmatpush1.msra.mxu0 0.0
    %1352 = vmatprep.subr.mxu0 0.0
    %1353 = vmatpush1.msra.mxu0 0.0
    %1354 = vmatprep.subr.mxu0 0.0
    %1355 = vmatpush1.msra.mxu0 0.0
    %1356 = vmatprep.subr.mxu0 0.0
    %1357 = vmatpush1.msra.mxu0 0.0
    %1358 = vmatprep.subr.mxu0 0.0
    %1359 = vmatpush1.msra.mxu0 0.0
    %1360 = vmatprep.subr.mxu0 0.0
    %1361 = vmatpush1.msra.mxu0 0.0
    %1362 = vmatprep.subr.mxu0 0.0
    %1363 = vmatpush1.msra.mxu0 0.0
    %1364 = vmatprep.subr.mxu0 0.0
    %1365 = vmatpush1.msra.mxu0 0.0
    %1366 = vmatprep.subr.mxu0 0.0
    %1367 = vmatpush1.msra.mxu0 0.0
    %1368 = vmatprep.subr.mxu0 0.0
    %1369 = vmatpush1.msra.mxu0 0.0
    %1370 = vmatprep.subr.mxu0 0.0
    %1371 = vmatpush1.msra.mxu0 0.0
    %1372 = vmatprep.subr.mxu0 0.0
    %1373 = vmatpush1.msra.mxu0 0.0
    %1374 = vmatprep.subr.mxu0 0.0
    %1375 = vmatpush1.msra.mxu0 0.0
    %1376 = vmatprep.subr.mxu0 0.0
    %1377 = vmatpush1.msra.mxu0 0.0
    %1378 = vmatprep.subr.mxu0 0.0
    %1379 = vmatpush1.msra.mxu0 0.0
    %1380 = vmatprep.subr.mxu0 0.0
    %1381 = vmatpush1.msra.mxu0 0.0
    %1382 = vmatprep.subr.mxu0 0.0
    %1383 = vmatpush1.msra.mxu0 0.0
    %1384 = vmatprep.subr.mxu0 0.0
    %1385 = vmatpush1.msra.mxu0 0.0
    %1386 = vmatprep.subr.mxu0 0.0
    %1387 = vmatpush1.msra.mxu0 0.0
    %1388 = vmatprep.subr.mxu0 0.0
    %1389 = vmatpush1.msra.mxu0 0.0
    %1390 = vmatprep.subr.mxu0 0.0
    %1391 = vmatpush1.msra.mxu0 0.0
    %1392 = vmatprep.subr.mxu0 0.0
    %1393 = vmatpush1.msra.mxu0 0.0
    %1394 = vmatprep.subr.mxu0 0.0
    %1395 = vmatpush1.msra.mxu0 0.0
    %1396 = vmatprep.subr.mxu0 0.0
    %1397 = vmatpush1.msra.mxu0 0.0
    %1398 = vmatprep.subr.mxu0 0.0
    %1399 = vmatpush1.msra.mxu0 0.0
    %1400 = vmatprep.subr.mxu0 0.0
    %1401 = vmatpush1.msra.mxu0 0.0
    %1402 = vmatprep.subr.mxu0 0.0
    %1403 = vmatpush1.msra.mxu0 0.0
    %1404 = vmatprep.subr.mxu0 0.0
    %1405 = vmatpush1.msra.mxu0 0.0
    %1406 = vmatprep.mubr.f32.mxu0 0.0
    %1407 = vmatmul.mubr.f32.gmra.mrb[0].mxu0 %v85
    %v1408 = vpop.f32.mrb[0].mxu0
    %v1409 = vadd.f32 0.0, %v1408
    %v1410 = vpop.f32.mrb[0].mxu0
    %1411 = vmatprep.mubr.f32.mxu0 0.0
    %1412 = vmatmul.mubr.f32.gmra.mrb[0].mxu0 %v88
    %v1413 = vpop.f32.mrb[0].mxu0
    %v1414 = vadd.f32 0.0, %v1413
    %v1415 = vpop.f32.mrb[0].mxu0
    %1416 = vdwg.mxu0
    %v1417 = vmul.f32 %v1409, %v74
    %v1418 = vmul.f32 %v1414, %v75
    %1419 = vrot.lane.b32.xlu0 %v1409, 8
    %v1420 = vpop.permute.xlu0 %1419
    %v1421 = vsel %vm167, %v1420, %v1409
    %1422 = vrot.lane.b32.xlu0 %v1414, 8
    %v1423 = vpop.permute.xlu0 %1422
    %v1424 = vsel %vm167, %v1423, %v1414
    %1425 = vrot.lane.b32.xlu0 %v1421, 8
    %v1426 = vpop.permute.xlu0 %1425
    %1427 = vrot.lane.b32.xlu0 %v1424, 8
    %v1428 = vpop.permute.xlu0 %1427
    %v1429 = vsel %vm167, %v1426, %v1409
    %v1430 = vsel %vm167, %v1428, %v1414
    %v1431 = vmul.f32 %v1429, %v183
    %v1432 = vmul.f32 %v1430, %v185
    %1435 = vrot.lane.b32.xlu0 %v1431, 124
    %v1436 = vpop.permute.xlu0 %1435
    %1437 = vrot.lane.b32.xlu0 %v1432, 124
    %v1438 = vpop.permute.xlu0 %1437
    %v1441 = vadd.f32 %v1417, %v1436
    %v1442 = vadd.f32 %v1418, %v1438
    %s1443 = scalar_lea.vmem %s4, 64
    %v1444 = vld [vmem:[%s1443] sm:$0xff]
    %v1445 = vld [vmem:[%s1443 + $0x8] sm:$0xff]
    %v1446 = vld [vmem:[%s1443 + $0x10] sm:$0xff]
    %v1447 = vld [vmem:[%s1443 + $0x18] sm:$0xff]
    %1448 = vmatprep.subr.mxu0 0.0
    %1449 = vmatpush1.msra.mxu0 %v1444
    %1450 = vmatprep.subr.mxu0 0.0
    %1451 = vmatpush1.msra.mxu0 %v1445
    %1452 = vmatprep.subr.mxu0 0.0
    %1453 = vmatpush1.msra.mxu0 %v1446
    %1454 = vmatprep.subr.mxu0 0.0
    %1455 = vmatpush1.msra.mxu0 %v1447
    %1456 = vmatprep.subr.mxu0 0.0
    %1457 = vmatpush1.msra.mxu0 0.0
    %1458 = vmatprep.subr.mxu0 0.0
    %1459 = vmatpush1.msra.mxu0 0.0
    %1460 = vmatprep.subr.mxu0 0.0
    %1461 = vmatpush1.msra.mxu0 0.0
    %1462 = vmatprep.subr.mxu0 0.0
    %1463 = vmatpush1.msra.mxu0 0.0
    %1464 = vmatprep.subr.mxu0 0.0
    %1465 = vmatpush1.msra.mxu0 0.0
    %1466 = vmatprep.subr.mxu0 0.0
    %1467 = vmatpush1.msra.mxu0 0.0
    %1468 = vmatprep.subr.mxu0 0.0
    %1469 = vmatpush1.msra.mxu0 0.0
    %1470 = vmatprep.subr.mxu0 0.0
    %1471 = vmatpush1.msra.mxu0 0.0
    %1472 = vmatprep.subr.mxu0 0.0
    %1473 = vmatpush1.msra.mxu0 0.0
    %1474 = vmatprep.subr.mxu0 0.0
    %1475 = vmatpush1.msra.mxu0 0.0
    %1476 = vmatprep.subr.mxu0 0.0
    %1477 = vmatpush1.msra.mxu0 0.0
    %1478 = vmatprep.subr.mxu0 0.0
    %1479 = vmatpush1.msra.mxu0 0.0
    %1480 = vmatprep.subr.mxu0 0.0
    %1481 = vmatpush1.msra.mxu0 0.0
    %1482 = vmatprep.subr.mxu0 0.0
    %1483 = vmatpush1.msra.mxu0 0.0
    %1484 = vmatprep.subr.mxu0 0.0
    %1485 = vmatpush1.msra.mxu0 0.0
    %1486 = vmatprep.subr.mxu0 0.0
    %1487 = vmatpush1.msra.mxu0 0.0
    %1488 = vmatprep.subr.mxu0 0.0
    %1489 = vmatpush1.msra.mxu0 0.0
    %1490 = vmatprep.subr.mxu0 0.0
    %1491 = vmatpush1.msra.mxu0 0.0
    %1492 = vmatprep.subr.mxu0 0.0
    %1493 = vmatpush1.msra.mxu0 0.0
    %1494 = vmatprep.subr.mxu0 0.0
    %1495 = vmatpush1.msra.mxu0 0.0
    %1496 = vmatprep.subr.mxu0 0.0
    %1497 = vmatpush1.msra.mxu0 0.0
    %1498 = vmatprep.subr.mxu0 0.0
    %1499 = vmatpush1.msra.mxu0 0.0
    %1500 = vmatprep.subr.mxu0 0.0
    %1501 = vmatpush1.msra.mxu0 0.0
    %1502 = vmatprep.subr.mxu0 0.0
    %1503 = vmatpush1.msra.mxu0 0.0
    %1504 = vmatprep.subr.mxu0 0.0
    %1505 = vmatpush1.msra.mxu0 0.0
    %1506 = vmatprep.subr.mxu0 0.0
    %1507 = vmatpush1.msra.mxu0 0.0
    %1508 = vmatprep.subr.mxu0 0.0
    %1509 = vmatpush1.msra.mxu0 0.0
    %1510 = vmatprep.subr.mxu0 0.0
    %1511 = vmatpush1.msra.mxu0 0.0
    %1512 = vmatprep.mubr.f32.mxu0 0.0
    %1513 = vmatmul.mubr.f32.gmra.mrb[0].mxu0 %v85
    %v1514 = vpop.f32.mrb[0].mxu0
    %v1515 = vadd.f32 0.0, %v1514
    %v1516 = vpop.f32.mrb[0].mxu0
    %1517 = vmatprep.mubr.f32.mxu0 0.0
    %1518 = vmatmul.mubr.f32.gmra.mrb[0].mxu0 %v88
    %v1519 = vpop.f32.mrb[0].mxu0
    %v1520 = vadd.f32 0.0, %v1519
    %v1521 = vpop.f32.mrb[0].mxu0
    %1522 = vdwg.mxu0
    %v1524 = vsel %vm384, %v1335, 0
    %v1527 = vsel %vm384, %v1336, 0
    %v1530 = vsel %vm384, %v1441, 0
    %v1533 = vsel %vm384, %v1442, 0
    %1535 = vmatprep.subr.mxu0 0.0
    %1536 = vmatpush1.xpose.msra.mxu0 %v1530
    %1537 = vmatprep.subr.mxu0 0.0
    %1538 = vmatpush1.xpose.msra.mxu0 %v1533
    %1539 = vmatprep.subr.mxu0 0.0
    %1540 = vmatpush1.xpose.msra.mxu0 0.0
    %1541 = vmatprep.subr.mxu0 0.0
    %1542 = vmatpush1.xpose.msra.mxu0 0.0
    %1543 = vmatprep.subr.mxu0 0.0
    %1544 = vmatpush1.xpose.msra.mxu0 0.0
    %1545 = vmatprep.subr.mxu0 0.0
    %1546 = vmatpush1.xpose.msra.mxu0 0.0
    %1547 = vmatprep.subr.mxu0 0.0
    %1548 = vmatpush1.xpose.msra.mxu0 0.0
    %1549 = vmatprep.subr.mxu0 0.0
    %1550 = vmatpush1.xpose.msra.mxu0 0.0
    %1551 = vmatprep.subr.mxu0 0.0
    %1552 = vmatpush1.xpose.msra.mxu0 0.0
    %1553 = vmatprep.subr.mxu0 0.0
    %1554 = vmatpush1.xpose.msra.mxu0 0.0
    %1555 = vmatprep.subr.mxu0 0.0
    %1556 = vmatpush1.xpose.msra.mxu0 0.0
    %1557 = vmatprep.subr.mxu0 0.0
    %1558 = vmatpush1.xpose.msra.mxu0 0.0
    %1559 = vmatprep.subr.mxu0 0.0
    %1560 = vmatpush1.xpose.msra.mxu0 0.0
    %1561 = vmatprep.subr.mxu0 0.0
    %1562 = vmatpush1.xpose.msra.mxu0 0.0
    %1563 = vmatprep.subr.mxu0 0.0
    %1564 = vmatpush1.xpose.msra.mxu0 0.0
    %1565 = vmatprep.subr.mxu0 0.0
    %1566 = vmatpush1.xpose.msra.mxu0 0.0
    %1567 = vmatprep.subr.mxu0 0.0
    %1568 = vmatpush1.xpose.msra.mxu0 0.0
    %1569 = vmatprep.subr.mxu0 0.0
    %1570 = vmatpush1.xpose.msra.mxu0 0.0
    %1571 = vmatprep.subr.mxu0 0.0
    %1572 = vmatpush1.xpose.msra.mxu0 0.0
    %1573 = vmatprep.subr.mxu0 0.0
    %1574 = vmatpush1.xpose.msra.mxu0 0.0
    %1575 = vmatprep.subr.mxu0 0.0
    %1576 = vmatpush1.xpose.msra.mxu0 0.0
    %1577 = vmatprep.subr.mxu0 0.0
    %1578 = vmatpush1.xpose.msra.mxu0 0.0
    %1579 = vmatprep.subr.mxu0 0.0
    %1580 = vmatpush1.xpose.msra.mxu0 0.0
    %1581 = vmatprep.subr.mxu0 0.0
    %1582 = vmatpush1.xpose.msra.mxu0 0.0
    %1583 = vmatprep.subr.mxu0 0.0
    %1584 = vmatpush1.xpose.msra.mxu0 0.0
    %1585 = vmatprep.subr.mxu0 0.0
    %1586 = vmatpush1.xpose.msra.mxu0 0.0
    %1587 = vmatprep.subr.mxu0 0.0
    %1588 = vmatpush1.xpose.msra.mxu0 0.0
    %1589 = vmatprep.subr.mxu0 0.0
    %1590 = vmatpush1.xpose.msra.mxu0 0.0
    %1591 = vmatprep.subr.mxu0 0.0
    %1592 = vmatpush1.xpose.msra.mxu0 0.0
    %1593 = vmatprep.subr.mxu0 0.0
    %1594 = vmatpush1.xpose.msra.mxu0 0.0
    %1595 = vmatprep.subr.mxu0 0.0
    %1596 = vmatpush1.xpose.msra.mxu0 0.0
    %1597 = vmatprep.subr.mxu0 0.0
    %1598 = vmatpush1.xpose.msra.mxu0 0.0
    %1599 = vmatprep.mubr.f32.mxu0 0.0
    %1600 = vmatmul.mubr.f32.gmra.mrb[0].mxu0 %v1524
    %v1601 = vpop.f32.mrb[0].mxu0
    %v1602 = vadd.f32 0.0, %v1601
    %v1603 = vpop.f32.mrb[0].mxu0
    %1604 = vmatprep.mubr.f32.mxu0 0.0
    %1605 = vmatmul.mubr.f32.gmra.mrb[0].mxu0 %v1527
    %v1606 = vpop.f32.mrb[0].mxu0
    %v1607 = vadd.f32 0.0, %v1606
    %v1608 = vpop.f32.mrb[0].mxu0
    %1609 = vdwg.mxu0
    %v1610 = vmul.f32 %v1602, 0.35355338
    %v1611 = vmul.f32 %v1607, 0.35355338
    %v1612 = vadd.f32 %v1610, %v78
    %v1613 = vadd.f32 %v1611, %v79
    %v1614 = vsel %vm476, %v1612, -inf
    %1615 = vmax.xlane.f32.xlu0 %v1614
    %v1616 = vpop.xlane.xlu0 %1615
    %v1617 = vsel %vm476, %v1613, -inf
    %1618 = vmax.xlane.f32.xlu0 %v1617
    %v1619 = vpop.xlane.xlu0 %1618
    %v1620 = vsub.f32 %v1612, %v1616
    %v1621 = vsub.f32 %v1613, %v1619
    %v1622 = vmul.f32 %v1620, 1.442695
    %v1623 = vpow.pop %v1622
    %v1624 = vmul.f32 %v1621, 1.442695
    %v1625 = vpow.pop %v1624
    %v1626 = vsel %vm476, %v1623, 0.0
    %1627 = vadd.xlane.f32.xlu0 %v1626
    %v1628 = vpop.xlane.xlu0 %1627
    %v1629 = vsel %vm476, %v1625, 0.0
    %1630 = vadd.xlane.f32.xlu0 %v1629
    %v1631 = vpop.xlane.xlu0 %1630
    %v1632 = vrcp.pop %v1628
    %v1633 = vrcp.pop %v1631
    %v1634 = vmul.f32 %v1623, %v1632
    %v1635 = vmul.f32 %v1625, %v1633
    %v1637 = vsel %vm476, %v1634, 0
    %v1640 = vsel %vm476, %v1635, 0
    %1642 = vmatprep.subr.mxu0 0.0
    %1643 = vmatpush1.msra.mxu0 %v1515
    %1644 = vmatprep.subr.mxu0 0.0
    %1645 = vmatpush1.msra.mxu0 %v1520
    %1646 = vmatprep.subr.mxu0 0.0
    %1647 = vmatpush1.msra.mxu0 0.0
    %1648 = vmatprep.subr.mxu0 0.0
    %1649 = vmatpush1.msra.mxu0 0.0
    %1650 = vmatprep.subr.mxu0 0.0
    %1651 = vmatpush1.msra.mxu0 0.0
    %1652 = vmatprep.subr.mxu0 0.0
    %1653 = vmatpush1.msra.mxu0 0.0
    %1654 = vmatprep.subr.mxu0 0.0
    %1655 = vmatpush1.msra.mxu0 0.0
    %1656 = vmatprep.subr.mxu0 0.0
    %1657 = vmatpush1.msra.mxu0 0.0
    %1658 = vmatprep.subr.mxu0 0.0
    %1659 = vmatpush1.msra.mxu0 0.0
    %1660 = vmatprep.subr.mxu0 0.0
    %1661 = vmatpush1.msra.mxu0 0.0
    %1662 = vmatprep.subr.mxu0 0.0
    %1663 = vmatpush1.msra.mxu0 0.0
    %1664 = vmatprep.subr.mxu0 0.0
    %1665 = vmatpush1.msra.mxu0 0.0
    %1666 = vmatprep.subr.mxu0 0.0
    %1667 = vmatpush1.msra.mxu0 0.0
    %1668 = vmatprep.subr.mxu0 0.0
    %1669 = vmatpush1.msra.mxu0 0.0
    %1670 = vmatprep.subr.mxu0 0.0
    %1671 = vmatpush1.msra.mxu0 0.0
    %1672 = vmatprep.subr.mxu0 0.0
    %1673 = vmatpush1.msra.mxu0 0.0
    %1674 = vmatprep.subr.mxu0 0.0
    %1675 = vmatpush1.msra.mxu0 0.0
    %1676 = vmatprep.subr.mxu0 0.0
    %1677 = vmatpush1.msra.mxu0 0.0
    %1678 = vmatprep.subr.mxu0 0.0
    %1679 = vmatpush1.msra.mxu0 0.0
    %1680 = vmatprep.subr.mxu0 0.0
    %1681 = vmatpush1.msra.mxu0 0.0
    %1682 = vmatprep.subr.mxu0 0.0
    %1683 = vmatpush1.msra.mxu0 0.0
    %1684 = vmatprep.subr.mxu0 0.0
    %1685 = vmatpush1.msra.mxu0 0.0
    %1686 = vmatprep.subr.mxu0 0.0
    %1687 = vmatpush1.msra.mxu0 0.0
    %1688 = vmatprep.subr.mxu0 0.0
    %1689 = vmatpush1.msra.mxu0 0.0
    %1690 = vmatprep.subr.mxu0 0.0
    %1691 = vmatpush1.msra.mxu0 0.0
    %1692 = vmatprep.subr.mxu0 0.0
    %1693 = vmatpush1.msra.mxu0 0.0
    %1694 = vmatprep.subr.mxu0 0.0
    %1695 = vmatpush1.msra.mxu0 0.0
    %1696 = vmatprep.subr.mxu0 0.0
    %1697 = vmatpush1.msra.mxu0 0.0
    %1698 = vmatprep.subr.mxu0 0.0
    %1699 = vmatpush1.msra.mxu0 0.0
    %1700 = vmatprep.subr.mxu0 0.0
    %1701 = vmatpush1.msra.mxu0 0.0
    %1702 = vmatprep.subr.mxu0 0.0
    %1703 = vmatpush1.msra.mxu0 0.0
    %1704 = vmatprep.subr.mxu0 0.0
    %1705 = vmatpush1.msra.mxu0 0.0
    %1706 = vmatprep.mubr.f32.mxu0 0.0
    %1707 = vmatmul.mubr.f32.gmra.mrb[0].mxu0 %v1637
    %v1708 = vpop.f32.mrb[0].mxu0
    %v1709 = vadd.f32 0.0, %v1708
    %v1710 = vpop.f32.mrb[0].mxu0
    %1711 = vmatprep.mubr.f32.mxu0 0.0
    %1712 = vmatmul.mubr.f32.gmra.mrb[0].mxu0 %v1640
    %v1713 = vpop.f32.mrb[0].mxu0
    %v1714 = vadd.f32 0.0, %v1713
    %v1715 = vpop.f32.mrb[0].mxu0
    %1716 = vdwg.mxu0
    %s1717 = scalar_lea.vmem %s8, 16
    %v1718 = vld [vmem:[%s1717] sm:$0xff]
    %v1720 = vsel %vm384, %v1709, 0
    %v1723 = vsel %vm384, %v1714, 0
    %1725 = vmatprep.subr.mxu0 0.0
    %1726 = vmatpush1.msra.mxu0 %v1718
    %1727 = vmatprep.subr.mxu0 0.0
    %1728 = vmatpush1.msra.mxu0 0.0
    %1729 = vmatprep.subr.mxu0 0.0
    %1730 = vmatpush1.msra.mxu0 0.0
    %1731 = vmatprep.subr.mxu0 0.0
    %1732 = vmatpush1.msra.mxu0 0.0
    %1733 = vmatprep.subr.mxu0 0.0
    %1734 = vmatpush1.msra.mxu0 0.0
    %1735 = vmatprep.subr.mxu0 0.0
    %1736 = vmatpush1.msra.mxu0 0.0
    %1737 = vmatprep.subr.mxu0 0.0
    %1738 = vmatpush1.msra.mxu0 0.0
    %1739 = vmatprep.subr.mxu0 0.0
    %1740 = vmatpush1.msra.mxu0 0.0
    %1741 = vmatprep.subr.mxu0 0.0
    %1742 = vmatpush1.msra.mxu0 0.0
    %1743 = vmatprep.subr.mxu0 0.0
    %1744 = vmatpush1.msra.mxu0 0.0
    %1745 = vmatprep.subr.mxu0 0.0
    %1746 = vmatpush1.msra.mxu0 0.0
    %1747 = vmatprep.subr.mxu0 0.0
    %1748 = vmatpush1.msra.mxu0 0.0
    %1749 = vmatprep.subr.mxu0 0.0
    %1750 = vmatpush1.msra.mxu0 0.0
    %1751 = vmatprep.subr.mxu0 0.0
    %1752 = vmatpush1.msra.mxu0 0.0
    %1753 = vmatprep.subr.mxu0 0.0
    %1754 = vmatpush1.msra.mxu0 0.0
    %1755 = vmatprep.subr.mxu0 0.0
    %1756 = vmatpush1.msra.mxu0 0.0
    %1757 = vmatprep.subr.mxu0 0.0
    %1758 = vmatpush1.msra.mxu0 0.0
    %1759 = vmatprep.subr.mxu0 0.0
    %1760 = vmatpush1.msra.mxu0 0.0
    %1761 = vmatprep.subr.mxu0 0.0
    %1762 = vmatpush1.msra.mxu0 0.0
    %1763 = vmatprep.subr.mxu0 0.0
    %1764 = vmatpush1.msra.mxu0 0.0
    %1765 = vmatprep.subr.mxu0 0.0
    %1766 = vmatpush1.msra.mxu0 0.0
    %1767 = vmatprep.subr.mxu0 0.0
    %1768 = vmatpush1.msra.mxu0 0.0
    %1769 = vmatprep.subr.mxu0 0.0
    %1770 = vmatpush1.msra.mxu0 0.0
    %1771 = vmatprep.subr.mxu0 0.0
    %1772 = vmatpush1.msra.mxu0 0.0
    %1773 = vmatprep.subr.mxu0 0.0
    %1774 = vmatpush1.msra.mxu0 0.0
    %1775 = vmatprep.subr.mxu0 0.0
    %1776 = vmatpush1.msra.mxu0 0.0
    %1777 = vmatprep.subr.mxu0 0.0
    %1778 = vmatpush1.msra.mxu0 0.0
    %1779 = vmatprep.subr.mxu0 0.0
    %1780 = vmatpush1.msra.mxu0 0.0
    %1781 = vmatprep.subr.mxu0 0.0
    %1782 = vmatpush1.msra.mxu0 0.0
    %1783 = vmatprep.subr.mxu0 0.0
    %1784 = vmatpush1.msra.mxu0 0.0
    %1785 = vmatprep.subr.mxu0 0.0
    %1786 = vmatpush1.msra.mxu0 0.0
    %1787 = vmatprep.subr.mxu0 0.0
    %1788 = vmatpush1.msra.mxu0 0.0
    %1789 = vmatprep.mubr.f32.mxu0 0.0
    %1790 = vmatmul.mubr.f32.gmra.mrb[0].mxu0 %v1720
    %v1791 = vpop.f32.mrb[0].mxu0
    %v1792 = vadd.f32 0.0, %v1791
    %v1793 = vpop.f32.mrb[0].mxu0
    %1794 = vmatprep.mubr.f32.mxu0 0.0
    %1795 = vmatmul.mubr.f32.gmra.mrb[0].mxu0 %v1723
    %v1796 = vpop.f32.mrb[0].mxu0
    %v1797 = vadd.f32 0.0, %v1796
    %v1798 = vpop.f32.mrb[0].mxu0
    %1799 = vdwg.mxu0
    %v1800 = vadd.f32 %v1223, %v1792
    %v1801 = vadd.f32 %v1228, %v1797
    %s1802 = scalar_lea.vmem %s2, 96
    %v1803 = vld [vmem:[%s1802] sm:$0xff]
    %v1804 = vld [vmem:[%s1802 + $0x8] sm:$0xff]
    %v1805 = vld [vmem:[%s1802 + $0x10] sm:$0xff]
    %v1806 = vld [vmem:[%s1802 + $0x18] sm:$0xff]
    %1807 = vmatprep.subr.mxu0 0.0
    %1808 = vmatpush1.msra.mxu0 %v1803
    %1809 = vmatprep.subr.mxu0 0.0
    %1810 = vmatpush1.msra.mxu0 %v1804
    %1811 = vmatprep.subr.mxu0 0.0
    %1812 = vmatpush1.msra.mxu0 %v1805
    %1813 = vmatprep.subr.mxu0 0.0
    %1814 = vmatpush1.msra.mxu0 %v1806
    %1815 = vmatprep.subr.mxu0 0.0
    %1816 = vmatpush1.msra.mxu0 0.0
    %1817 = vmatprep.subr.mxu0 0.0
    %1818 = vmatpush1.msra.mxu0 0.0
    %1819 = vmatprep.subr.mxu0 0.0
    %1820 = vmatpush1.msra.mxu0 0.0
    %1821 = vmatprep.subr.mxu0 0.0
    %1822 = vmatpush1.msra.mxu0 0.0
    %1823 = vmatprep.subr.mxu0 0.0
    %1824 = vmatpush1.msra.mxu0 0.0
    %1825 = vmatprep.subr.mxu0 0.0
    %1826 = vmatpush1.msra.mxu0 0.0
    %1827 = vmatprep.subr.mxu0 0.0
    %1828 = vmatpush1.msra.mxu0 0.0
    %1829 = vmatprep.subr.mxu0 0.0
    %1830 = vmatpush1.msra.mxu0 0.0
    %1831 = vmatprep.subr.mxu0 0.0
    %1832 = vmatpush1.msra.mxu0 0.0
    %1833 = vmatprep.subr.mxu0 0.0
    %1834 = vmatpush1.msra.mxu0 0.0
    %1835 = vmatprep.subr.mxu0 0.0
    %1836 = vmatpush1.msra.mxu0 0.0
    %1837 = vmatprep.subr.mxu0 0.0
    %1838 = vmatpush1.msra.mxu0 0.0
    %1839 = vmatprep.subr.mxu0 0.0
    %1840 = vmatpush1.msra.mxu0 0.0
    %1841 = vmatprep.subr.mxu0 0.0
    %1842 = vmatpush1.msra.mxu0 0.0
    %1843 = vmatprep.subr.mxu0 0.0
    %1844 = vmatpush1.msra.mxu0 0.0
    %1845 = vmatprep.subr.mxu0 0.0
    %1846 = vmatpush1.msra.mxu0 0.0
    %1847 = vmatprep.subr.mxu0 0.0
    %1848 = vmatpush1.msra.mxu0 0.0
    %1849 = vmatprep.subr.mxu0 0.0
    %1850 = vmatpush1.msra.mxu0 0.0
    %1851 = vmatprep.subr.mxu0 0.0
    %1852 = vmatpush1.msra.mxu0 0.0
    %1853 = vmatprep.subr.mxu0 0.0
    %1854 = vmatpush1.msra.mxu0 0.0
    %1855 = vmatprep.subr.mxu0 0.0
    %1856 = vmatpush1.msra.mxu0 0.0
    %1857 = vmatprep.subr.mxu0 0.0
    %1858 = vmatpush1.msra.mxu0 0.0
    %1859 = vmatprep.subr.mxu0 0.0
    %1860 = vmatpush1.msra.mxu0 0.0
    %1861 = vmatprep.subr.mxu0 0.0
    %1862 = vmatpush1.msra.mxu0 0.0
    %1863 = vmatprep.subr.mxu0 0.0
    %1864 = vmatpush1.msra.mxu0 0.0
    %1865 = vmatprep.subr.mxu0 0.0
    %1866 = vmatpush1.msra.mxu0 0.0
    %1867 = vmatprep.subr.mxu0 0.0
    %1868 = vmatpush1.msra.mxu0 0.0
    %1869 = vmatprep.subr.mxu0 0.0
    %1870 = vmatpush1.msra.mxu0 0.0
    %1871 = vmatprep.mubr.f32.mxu0 0.0
    %1872 = vmatmul.mubr.f32.gmra.mrb[0].mxu0 %v85
    %v1873 = vpop.f32.mrb[0].mxu0
    %v1874 = vadd.f32 0.0, %v1873
    %v1875 = vpop.f32.mrb[0].mxu0
    %1876 = vmatprep.mubr.f32.mxu0 0.0
    %1877 = vmatmul.mubr.f32.gmra.mrb[0].mxu0 %v88
    %v1878 = vpop.f32.mrb[0].mxu0
    %v1879 = vadd.f32 0.0, %v1878
    %v1880 = vpop.f32.mrb[0].mxu0
    %1881 = vdwg.mxu0
    %v1882 = vmul.f32 %v1874, %v74
    %v1883 = vmul.f32 %v1879, %v75
    %1884 = vrot.lane.b32.xlu0 %v1874, 8
    %v1885 = vpop.permute.xlu0 %1884
    %v1886 = vsel %vm167, %v1885, %v1874
    %1887 = vrot.lane.b32.xlu0 %v1879, 8
    %v1888 = vpop.permute.xlu0 %1887
    %v1889 = vsel %vm167, %v1888, %v1879
    %1890 = vrot.lane.b32.xlu0 %v1886, 8
    %v1891 = vpop.permute.xlu0 %1890
    %1892 = vrot.lane.b32.xlu0 %v1889, 8
    %v1893 = vpop.permute.xlu0 %1892
    %v1894 = vsel %vm167, %v1891, %v1874
    %v1895 = vsel %vm167, %v1893, %v1879
    %v1896 = vmul.f32 %v1894, %v183
    %v1897 = vmul.f32 %v1895, %v185
    %1900 = vrot.lane.b32.xlu0 %v1896, 124
    %v1901 = vpop.permute.xlu0 %1900
    %1902 = vrot.lane.b32.xlu0 %v1897, 124
    %v1903 = vpop.permute.xlu0 %1902
    %v1906 = vadd.f32 %v1882, %v1901
    %v1907 = vadd.f32 %v1883, %v1903
    %s1908 = scalar_lea.vmem %s3, 96
    %v1909 = vld [vmem:[%s1908] sm:$0xff]
    %v1910 = vld [vmem:[%s1908 + $0x8] sm:$0xff]
    %v1911 = vld [vmem:[%s1908 + $0x10] sm:$0xff]
    %v1912 = vld [vmem:[%s1908 + $0x18] sm:$0xff]
    %1913 = vmatprep.subr.mxu0 0.0
    %1914 = vmatpush1.msra.mxu0 %v1909
    %1915 = vmatprep.subr.mxu0 0.0
    %1916 = vmatpush1.msra.mxu0 %v1910
    %1917 = vmatprep.subr.mxu0 0.0
    %1918 = vmatpush1.msra.mxu0 %v1911
    %1919 = vmatprep.subr.mxu0 0.0
    %1920 = vmatpush1.msra.mxu0 %v1912
    %1921 = vmatprep.subr.mxu0 0.0
    %1922 = vmatpush1.msra.mxu0 0.0
    %1923 = vmatprep.subr.mxu0 0.0
    %1924 = vmatpush1.msra.mxu0 0.0
    %1925 = vmatprep.subr.mxu0 0.0
    %1926 = vmatpush1.msra.mxu0 0.0
    %1927 = vmatprep.subr.mxu0 0.0
    %1928 = vmatpush1.msra.mxu0 0.0
    %1929 = vmatprep.subr.mxu0 0.0
    %1930 = vmatpush1.msra.mxu0 0.0
    %1931 = vmatprep.subr.mxu0 0.0
    %1932 = vmatpush1.msra.mxu0 0.0
    %1933 = vmatprep.subr.mxu0 0.0
    %1934 = vmatpush1.msra.mxu0 0.0
    %1935 = vmatprep.subr.mxu0 0.0
    %1936 = vmatpush1.msra.mxu0 0.0
    %1937 = vmatprep.subr.mxu0 0.0
    %1938 = vmatpush1.msra.mxu0 0.0
    %1939 = vmatprep.subr.mxu0 0.0
    %1940 = vmatpush1.msra.mxu0 0.0
    %1941 = vmatprep.subr.mxu0 0.0
    %1942 = vmatpush1.msra.mxu0 0.0
    %1943 = vmatprep.subr.mxu0 0.0
    %1944 = vmatpush1.msra.mxu0 0.0
    %1945 = vmatprep.subr.mxu0 0.0
    %1946 = vmatpush1.msra.mxu0 0.0
    %1947 = vmatprep.subr.mxu0 0.0
    %1948 = vmatpush1.msra.mxu0 0.0
    %1949 = vmatprep.subr.mxu0 0.0
    %1950 = vmatpush1.msra.mxu0 0.0
    %1951 = vmatprep.subr.mxu0 0.0
    %1952 = vmatpush1.msra.mxu0 0.0
    %1953 = vmatprep.subr.mxu0 0.0
    %1954 = vmatpush1.msra.mxu0 0.0
    %1955 = vmatprep.subr.mxu0 0.0
    %1956 = vmatpush1.msra.mxu0 0.0
    %1957 = vmatprep.subr.mxu0 0.0
    %1958 = vmatpush1.msra.mxu0 0.0
    %1959 = vmatprep.subr.mxu0 0.0
    %1960 = vmatpush1.msra.mxu0 0.0
    %1961 = vmatprep.subr.mxu0 0.0
    %1962 = vmatpush1.msra.mxu0 0.0
    %1963 = vmatprep.subr.mxu0 0.0
    %1964 = vmatpush1.msra.mxu0 0.0
    %1965 = vmatprep.subr.mxu0 0.0
    %1966 = vmatpush1.msra.mxu0 0.0
    %1967 = vmatprep.subr.mxu0 0.0
    %1968 = vmatpush1.msra.mxu0 0.0
    %1969 = vmatprep.subr.mxu0 0.0
    %1970 = vmatpush1.msra.mxu0 0.0
    %1971 = vmatprep.subr.mxu0 0.0
    %1972 = vmatpush1.msra.mxu0 0.0
    %1973 = vmatprep.subr.mxu0 0.0
    %1974 = vmatpush1.msra.mxu0 0.0
    %1975 = vmatprep.subr.mxu0 0.0
    %1976 = vmatpush1.msra.mxu0 0.0
    %1977 = vmatprep.mubr.f32.mxu0 0.0
    %1978 = vmatmul.mubr.f32.gmra.mrb[0].mxu0 %v85
    %v1979 = vpop.f32.mrb[0].mxu0
    %v1980 = vadd.f32 0.0, %v1979
    %v1981 = vpop.f32.mrb[0].mxu0
    %1982 = vmatprep.mubr.f32.mxu0 0.0
    %1983 = vmatmul.mubr.f32.gmra.mrb[0].mxu0 %v88
    %v1984 = vpop.f32.mrb[0].mxu0
    %v1985 = vadd.f32 0.0, %v1984
    %v1986 = vpop.f32.mrb[0].mxu0
    %1987 = vdwg.mxu0
    %v1988 = vmul.f32 %v1980, %v74
    %v1989 = vmul.f32 %v1985, %v75
    %1990 = vrot.lane.b32.xlu0 %v1980, 8
    %v1991 = vpop.permute.xlu0 %1990
    %v1992 = vsel %vm167, %v1991, %v1980
    %1993 = vrot.lane.b32.xlu0 %v1985, 8
    %v1994 = vpop.permute.xlu0 %1993
    %v1995 = vsel %vm167, %v1994, %v1985
    %1996 = vrot.lane.b32.xlu0 %v1992, 8
    %v1997 = vpop.permute.xlu0 %1996
    %1998 = vrot.lane.b32.xlu0 %v1995, 8
    %v1999 = vpop.permute.xlu0 %1998
    %v2000 = vsel %vm167, %v1997, %v1980
    %v2001 = vsel %vm167, %v1999, %v1985
    %v2002 = vmul.f32 %v2000, %v183
    %v2003 = vmul.f32 %v2001, %v185
    %2006 = vrot.lane.b32.xlu0 %v2002, 124
    %v2007 = vpop.permute.xlu0 %2006
    %2008 = vrot.lane.b32.xlu0 %v2003, 124
    %v2009 = vpop.permute.xlu0 %2008
    %v2012 = vadd.f32 %v1988, %v2007
    %v2013 = vadd.f32 %v1989, %v2009
    %s2014 = scalar_lea.vmem %s4, 96
    %v2015 = vld [vmem:[%s2014] sm:$0xff]
    %v2016 = vld [vmem:[%s2014 + $0x8] sm:$0xff]
    %v2017 = vld [vmem:[%s2014 + $0x10] sm:$0xff]
    %v2018 = vld [vmem:[%s2014 + $0x18] sm:$0xff]
    %2019 = vmatprep.subr.mxu0 0.0
    %2020 = vmatpush1.msra.mxu0 %v2015
    %2021 = vmatprep.subr.mxu0 0.0
    %2022 = vmatpush1.msra.mxu0 %v2016
    %2023 = vmatprep.subr.mxu0 0.0
    %2024 = vmatpush1.msra.mxu0 %v2017
    %2025 = vmatprep.subr.mxu0 0.0
    %2026 = vmatpush1.msra.mxu0 %v2018
    %2027 = vmatprep.subr.mxu0 0.0
    %2028 = vmatpush1.msra.mxu0 0.0
    %2029 = vmatprep.subr.mxu0 0.0
    %2030 = vmatpush1.msra.mxu0 0.0
    %2031 = vmatprep.subr.mxu0 0.0
    %2032 = vmatpush1.msra.mxu0 0.0
    %2033 = vmatprep.subr.mxu0 0.0
    %2034 = vmatpush1.msra.mxu0 0.0
    %2035 = vmatprep.subr.mxu0 0.0
    %2036 = vmatpush1.msra.mxu0 0.0
    %2037 = vmatprep.subr.mxu0 0.0
    %2038 = vmatpush1.msra.mxu0 0.0
    %2039 = vmatprep.subr.mxu0 0.0
    %2040 = vmatpush1.msra.mxu0 0.0
    %2041 = vmatprep.subr.mxu0 0.0
    %2042 = vmatpush1.msra.mxu0 0.0
    %2043 = vmatprep.subr.mxu0 0.0
    %2044 = vmatpush1.msra.mxu0 0.0
    %2045 = vmatprep.subr.mxu0 0.0
    %2046 = vmatpush1.msra.mxu0 0.0
    %2047 = vmatprep.subr.mxu0 0.0
    %2048 = vmatpush1.msra.mxu0 0.0
    %2049 = vmatprep.subr.mxu0 0.0
    %2050 = vmatpush1.msra.mxu0 0.0
    %2051 = vmatprep.subr.mxu0 0.0
    %2052 = vmatpush1.msra.mxu0 0.0
    %2053 = vmatprep.subr.mxu0 0.0
    %2054 = vmatpush1.msra.mxu0 0.0
    %2055 = vmatprep.subr.mxu0 0.0
    %2056 = vmatpush1.msra.mxu0 0.0
    %2057 = vmatprep.subr.mxu0 0.0
    %2058 = vmatpush1.msra.mxu0 0.0
    %2059 = vmatprep.subr.mxu0 0.0
    %2060 = vmatpush1.msra.mxu0 0.0
    %2061 = vmatprep.subr.mxu0 0.0
    %2062 = vmatpush1.msra.mxu0 0.0
    %2063 = vmatprep.subr.mxu0 0.0
    %2064 = vmatpush1.msra.mxu0 0.0
    %2065 = vmatprep.subr.mxu0 0.0
    %2066 = vmatpush1.msra.mxu0 0.0
    %2067 = vmatprep.subr.mxu0 0.0
    %2068 = vmatpush1.msra.mxu0 0.0
    %2069 = vmatprep.subr.mxu0 0.0
    %2070 = vmatpush1.msra.mxu0 0.0
    %2071 = vmatprep.subr.mxu0 0.0
    %2072 = vmatpush1.msra.mxu0 0.0
    %2073 = vmatprep.subr.mxu0 0.0
    %2074 = vmatpush1.msra.mxu0 0.0
    %2075 = vmatprep.subr.mxu0 0.0
    %2076 = vmatpush1.msra.mxu0 0.0
    %2077 = vmatprep.subr.mxu0 0.0
    %2078 = vmatpush1.msra.mxu0 0.0
    %2079 = vmatprep.subr.mxu0 0.0
    %2080 = vmatpush1.msra.mxu0 0.0
    %2081 = vmatprep.subr.mxu0 0.0
    %2082 = vmatpush1.msra.mxu0 0.0
    %2083 = vmatprep.mubr.f32.mxu0 0.0
    %2084 = vmatmul.mubr.f32.gmra.mrb[0].mxu0 %v85
    %v2085 = vpop.f32.mrb[0].mxu0
    %v2086 = vadd.f32 0.0, %v2085
    %v2087 = vpop.f32.mrb[0].mxu0
    %2088 = vmatprep.mubr.f32.mxu0 0.0
    %2089 = vmatmul.mubr.f32.gmra.mrb[0].mxu0 %v88
    %v2090 = vpop.f32.mrb[0].mxu0
    %v2091 = vadd.f32 0.0, %v2090
    %v2092 = vpop.f32.mrb[0].mxu0
    %2093 = vdwg.mxu0
    %v2095 = vsel %vm384, %v1906, 0
    %v2098 = vsel %vm384, %v1907, 0
    %v2101 = vsel %vm384, %v2012, 0
    %v2104 = vsel %vm384, %v2013, 0
    %2106 = vmatprep.subr.mxu0 0.0
    %2107 = vmatpush1.xpose.msra.mxu0 %v2101
    %2108 = vmatprep.subr.mxu0 0.0
    %2109 = vmatpush1.xpose.msra.mxu0 %v2104
    %2110 = vmatprep.subr.mxu0 0.0
    %2111 = vmatpush1.xpose.msra.mxu0 0.0
    %2112 = vmatprep.subr.mxu0 0.0
    %2113 = vmatpush1.xpose.msra.mxu0 0.0
    %2114 = vmatprep.subr.mxu0 0.0
    %2115 = vmatpush1.xpose.msra.mxu0 0.0
    %2116 = vmatprep.subr.mxu0 0.0
    %2117 = vmatpush1.xpose.msra.mxu0 0.0
    %2118 = vmatprep.subr.mxu0 0.0
    %2119 = vmatpush1.xpose.msra.mxu0 0.0
    %2120 = vmatprep.subr.mxu0 0.0
    %2121 = vmatpush1.xpose.msra.mxu0 0.0
    %2122 = vmatprep.subr.mxu0 0.0
    %2123 = vmatpush1.xpose.msra.mxu0 0.0
    %2124 = vmatprep.subr.mxu0 0.0
    %2125 = vmatpush1.xpose.msra.mxu0 0.0
    %2126 = vmatprep.subr.mxu0 0.0
    %2127 = vmatpush1.xpose.msra.mxu0 0.0
    %2128 = vmatprep.subr.mxu0 0.0
    %2129 = vmatpush1.xpose.msra.mxu0 0.0
    %2130 = vmatprep.subr.mxu0 0.0
    %2131 = vmatpush1.xpose.msra.mxu0 0.0
    %2132 = vmatprep.subr.mxu0 0.0
    %2133 = vmatpush1.xpose.msra.mxu0 0.0
    %2134 = vmatprep.subr.mxu0 0.0
    %2135 = vmatpush1.xpose.msra.mxu0 0.0
    %2136 = vmatprep.subr.mxu0 0.0
    %2137 = vmatpush1.xpose.msra.mxu0 0.0
    %2138 = vmatprep.subr.mxu0 0.0
    %2139 = vmatpush1.xpose.msra.mxu0 0.0
    %2140 = vmatprep.subr.mxu0 0.0
    %2141 = vmatpush1.xpose.msra.mxu0 0.0
    %2142 = vmatprep.subr.mxu0 0.0
    %2143 = vmatpush1.xpose.msra.mxu0 0.0
    %2144 = vmatprep.subr.mxu0 0.0
    %2145 = vmatpush1.xpose.msra.mxu0 0.0
    %2146 = vmatprep.subr.mxu0 0.0
    %2147 = vmatpush1.xpose.msra.mxu0 0.0
    %2148 = vmatprep.subr.mxu0 0.0
    %2149 = vmatpush1.xpose.msra.mxu0 0.0
    %2150 = vmatprep.subr.mxu0 0.0
    %2151 = vmatpush1.xpose.msra.mxu0 0.0
    %2152 = vmatprep.subr.mxu0 0.0
    %2153 = vmatpush1.xpose.msra.mxu0 0.0
    %2154 = vmatprep.subr.mxu0 0.0
    %2155 = vmatpush1.xpose.msra.mxu0 0.0
    %2156 = vmatprep.subr.mxu0 0.0
    %2157 = vmatpush1.xpose.msra.mxu0 0.0
    %2158 = vmatprep.subr.mxu0 0.0
    %2159 = vmatpush1.xpose.msra.mxu0 0.0
    %2160 = vmatprep.subr.mxu0 0.0
    %2161 = vmatpush1.xpose.msra.mxu0 0.0
    %2162 = vmatprep.subr.mxu0 0.0
    %2163 = vmatpush1.xpose.msra.mxu0 0.0
    %2164 = vmatprep.subr.mxu0 0.0
    %2165 = vmatpush1.xpose.msra.mxu0 0.0
    %2166 = vmatprep.subr.mxu0 0.0
    %2167 = vmatpush1.xpose.msra.mxu0 0.0
    %2168 = vmatprep.subr.mxu0 0.0
    %2169 = vmatpush1.xpose.msra.mxu0 0.0
    %2170 = vmatprep.mubr.f32.mxu0 0.0
    %2171 = vmatmul.mubr.f32.gmra.mrb[0].mxu0 %v2095
    %v2172 = vpop.f32.mrb[0].mxu0
    %v2173 = vadd.f32 0.0, %v2172
    %v2174 = vpop.f32.mrb[0].mxu0
    %2175 = vmatprep.mubr.f32.mxu0 0.0
    %2176 = vmatmul.mubr.f32.gmra.mrb[0].mxu0 %v2098
    %v2177 = vpop.f32.mrb[0].mxu0
    %v2178 = vadd.f32 0.0, %v2177
    %v2179 = vpop.f32.mrb[0].mxu0
    %2180 = vdwg.mxu0
    %v2181 = vmul.f32 %v2173, 0.35355338
    %v2182 = vmul.f32 %v2178, 0.35355338
    %v2183 = vadd.f32 %v2181, %v78
    %v2184 = vadd.f32 %v2182, %v79
    %v2185 = vsel %vm476, %v2183, -inf
    %2186 = vmax.xlane.f32.xlu0 %v2185
    %v2187 = vpop.xlane.xlu0 %2186
    %v2188 = vsel %vm476, %v2184, -inf
    %2189 = vmax.xlane.f32.xlu0 %v2188
    %v2190 = vpop.xlane.xlu0 %2189
    %v2191 = vsub.f32 %v2183, %v2187
    %v2192 = vsub.f32 %v2184, %v2190
    %v2193 = vmul.f32 %v2191, 1.442695
    %v2194 = vpow.pop %v2193
    %v2195 = vmul.f32 %v2192, 1.442695
    %v2196 = vpow.pop %v2195
    %v2197 = vsel %vm476, %v2194, 0.0
    %2198 = vadd.xlane.f32.xlu0 %v2197
    %v2199 = vpop.xlane.xlu0 %2198
    %v2200 = vsel %vm476, %v2196, 0.0
    %2201 = vadd.xlane.f32.xlu0 %v2200
    %v2202 = vpop.xlane.xlu0 %2201
    %v2203 = vrcp.pop %v2199
    %v2204 = vrcp.pop %v2202
    %v2205 = vmul.f32 %v2194, %v2203
    %v2206 = vmul.f32 %v2196, %v2204
    %v2208 = vsel %vm476, %v2205, 0
    %v2211 = vsel %vm476, %v2206, 0
    %2213 = vmatprep.subr.mxu0 0.0
    %2214 = vmatpush1.msra.mxu0 %v2086
    %2215 = vmatprep.subr.mxu0 0.0
    %2216 = vmatpush1.msra.mxu0 %v2091
    %2217 = vmatprep.subr.mxu0 0.0
    %2218 = vmatpush1.msra.mxu0 0.0
    %2219 = vmatprep.subr.mxu0 0.0
    %2220 = vmatpush1.msra.mxu0 0.0
    %2221 = vmatprep.subr.mxu0 0.0
    %2222 = vmatpush1.msra.mxu0 0.0
    %2223 = vmatprep.subr.mxu0 0.0
    %2224 = vmatpush1.msra.mxu0 0.0
    %2225 = vmatprep.subr.mxu0 0.0
    %2226 = vmatpush1.msra.mxu0 0.0
    %2227 = vmatprep.subr.mxu0 0.0
    %2228 = vmatpush1.msra.mxu0 0.0
    %2229 = vmatprep.subr.mxu0 0.0
    %2230 = vmatpush1.msra.mxu0 0.0
    %2231 = vmatprep.subr.mxu0 0.0
    %2232 = vmatpush1.msra.mxu0 0.0
    %2233 = vmatprep.subr.mxu0 0.0
    %2234 = vmatpush1.msra.mxu0 0.0
    %2235 = vmatprep.subr.mxu0 0.0
    %2236 = vmatpush1.msra.mxu0 0.0
    %2237 = vmatprep.subr.mxu0 0.0
    %2238 = vmatpush1.msra.mxu0 0.0
    %2239 = vmatprep.subr.mxu0 0.0
    %2240 = vmatpush1.msra.mxu0 0.0
    %2241 = vmatprep.subr.mxu0 0.0
    %2242 = vmatpush1.msra.mxu0 0.0
    %2243 = vmatprep.subr.mxu0 0.0
    %2244 = vmatpush1.msra.mxu0 0.0
    %2245 = vmatprep.subr.mxu0 0.0
    %2246 = vmatpush1.msra.mxu0 0.0
    %2247 = vmatprep.subr.mxu0 0.0
    %2248 = vmatpush1.msra.mxu0 0.0
    %2249 = vmatprep.subr.mxu0 0.0
    %2250 = vmatpush1.msra.mxu0 0.0
    %2251 = vmatprep.subr.mxu0 0.0
    %2252 = vmatpush1.msra.mxu0 0.0
    %2253 = vmatprep.subr.mxu0 0.0
    %2254 = vmatpush1.msra.mxu0 0.0
    %2255 = vmatprep.subr.mxu0 0.0
    %2256 = vmatpush1.msra.mxu0 0.0
    %2257 = vmatprep.subr.mxu0 0.0
    %2258 = vmatpush1.msra.mxu0 0.0
    %2259 = vmatprep.subr.mxu0 0.0
    %2260 = vmatpush1.msra.mxu0 0.0
    %2261 = vmatprep.subr.mxu0 0.0
    %2262 = vmatpush1.msra.mxu0 0.0
    %2263 = vmatprep.subr.mxu0 0.0
    %2264 = vmatpush1.msra.mxu0 0.0
    %2265 = vmatprep.subr.mxu0 0.0
    %2266 = vmatpush1.msra.mxu0 0.0
    %2267 = vmatprep.subr.mxu0 0.0
    %2268 = vmatpush1.msra.mxu0 0.0
    %2269 = vmatprep.subr.mxu0 0.0
    %2270 = vmatpush1.msra.mxu0 0.0
    %2271 = vmatprep.subr.mxu0 0.0
    %2272 = vmatpush1.msra.mxu0 0.0
    %2273 = vmatprep.subr.mxu0 0.0
    %2274 = vmatpush1.msra.mxu0 0.0
    %2275 = vmatprep.subr.mxu0 0.0
    %2276 = vmatpush1.msra.mxu0 0.0
    %2277 = vmatprep.mubr.f32.mxu0 0.0
    %2278 = vmatmul.mubr.f32.gmra.mrb[0].mxu0 %v2208
    %v2279 = vpop.f32.mrb[0].mxu0
    %v2280 = vadd.f32 0.0, %v2279
    %v2281 = vpop.f32.mrb[0].mxu0
    %2282 = vmatprep.mubr.f32.mxu0 0.0
    %2283 = vmatmul.mubr.f32.gmra.mrb[0].mxu0 %v2211
    %v2284 = vpop.f32.mrb[0].mxu0
    %v2285 = vadd.f32 0.0, %v2284
    %v2286 = vpop.f32.mrb[0].mxu0
    %2287 = vdwg.mxu0
    %s2288 = scalar_lea.vmem %s8, 24
    %v2289 = vld [vmem:[%s2288] sm:$0xff]
    %v2291 = vsel %vm384, %v2280, 0
    %v2294 = vsel %vm384, %v2285, 0
    %2296 = vmatprep.subr.mxu0 0.0
    %2297 = vmatpush1.msra.mxu0 %v2289
    %2298 = vmatprep.subr.mxu0 0.0
    %2299 = vmatpush1.msra.mxu0 0.0
    %2300 = vmatprep.subr.mxu0 0.0
    %2301 = vmatpush1.msra.mxu0 0.0
    %2302 = vmatprep.subr.mxu0 0.0
    %2303 = vmatpush1.msra.mxu0 0.0
    %2304 = vmatprep.subr.mxu0 0.0
    %2305 = vmatpush1.msra.mxu0 0.0
    %2306 = vmatprep.subr.mxu0 0.0
    %2307 = vmatpush1.msra.mxu0 0.0
    %2308 = vmatprep.subr.mxu0 0.0
    %2309 = vmatpush1.msra.mxu0 0.0
    %2310 = vmatprep.subr.mxu0 0.0
    %2311 = vmatpush1.msra.mxu0 0.0
    %2312 = vmatprep.subr.mxu0 0.0
    %2313 = vmatpush1.msra.mxu0 0.0
    %2314 = vmatprep.subr.mxu0 0.0
    %2315 = vmatpush1.msra.mxu0 0.0
    %2316 = vmatprep.subr.mxu0 0.0
    %2317 = vmatpush1.msra.mxu0 0.0
    %2318 = vmatprep.subr.mxu0 0.0
    %2319 = vmatpush1.msra.mxu0 0.0
    %2320 = vmatprep.subr.mxu0 0.0
    %2321 = vmatpush1.msra.mxu0 0.0
    %2322 = vmatprep.subr.mxu0 0.0
    %2323 = vmatpush1.msra.mxu0 0.0
    %2324 = vmatprep.subr.mxu0 0.0
    %2325 = vmatpush1.msra.mxu0 0.0
    %2326 = vmatprep.subr.mxu0 0.0
    %2327 = vmatpush1.msra.mxu0 0.0
    %2328 = vmatprep.subr.mxu0 0.0
    %2329 = vmatpush1.msra.mxu0 0.0
    %2330 = vmatprep.subr.mxu0 0.0
    %2331 = vmatpush1.msra.mxu0 0.0
    %2332 = vmatprep.subr.mxu0 0.0
    %2333 = vmatpush1.msra.mxu0 0.0
    %2334 = vmatprep.subr.mxu0 0.0
    %2335 = vmatpush1.msra.mxu0 0.0
    %2336 = vmatprep.subr.mxu0 0.0
    %2337 = vmatpush1.msra.mxu0 0.0
    %2338 = vmatprep.subr.mxu0 0.0
    %2339 = vmatpush1.msra.mxu0 0.0
    %2340 = vmatprep.subr.mxu0 0.0
    %2341 = vmatpush1.msra.mxu0 0.0
    %2342 = vmatprep.subr.mxu0 0.0
    %2343 = vmatpush1.msra.mxu0 0.0
    %2344 = vmatprep.subr.mxu0 0.0
    %2345 = vmatpush1.msra.mxu0 0.0
    %2346 = vmatprep.subr.mxu0 0.0
    %2347 = vmatpush1.msra.mxu0 0.0
    %2348 = vmatprep.subr.mxu0 0.0
    %2349 = vmatpush1.msra.mxu0 0.0
    %2350 = vmatprep.subr.mxu0 0.0
    %2351 = vmatpush1.msra.mxu0 0.0
    %2352 = vmatprep.subr.mxu0 0.0
    %2353 = vmatpush1.msra.mxu0 0.0
    %2354 = vmatprep.subr.mxu0 0.0
    %2355 = vmatpush1.msra.mxu0 0.0
    %2356 = vmatprep.subr.mxu0 0.0
    %2357 = vmatpush1.msra.mxu0 0.0
    %2358 = vmatprep.subr.mxu0 0.0
    %2359 = vmatpush1.msra.mxu0 0.0
    %2360 = vmatprep.mubr.f32.mxu0 0.0
    %2361 = vmatmul.mubr.f32.gmra.mrb[0].mxu0 %v2291
    %v2362 = vpop.f32.mrb[0].mxu0
    %v2363 = vadd.f32 0.0, %v2362
    %v2364 = vpop.f32.mrb[0].mxu0
    %2365 = vmatprep.mubr.f32.mxu0 0.0
    %2366 = vmatmul.mubr.f32.gmra.mrb[0].mxu0 %v2294
    %v2367 = vpop.f32.mrb[0].mxu0
    %v2368 = vadd.f32 0.0, %v2367
    %v2369 = vpop.f32.mrb[0].mxu0
    %2370 = vdwg.mxu0
    %v2371 = vadd.f32 %v1800, %v2363
    %v2372 = vadd.f32 %v1801, %v2368
    %v2373 = vadd.f32 %v45, %v2371
    %v2374 = vadd.f32 %v46, %v2372
    %v2375 = vld [vmem:[%s9] sm:$0x1]
    %v2376 = vmul.f32 %v2373, %v2373
    %v2377 = vmul.f32 %v2374, %v2374
    %v2378 = vsel %vm50, %v2376, 0.0
    %2379 = vadd.xlane.f32.xlu0 %v2378
    %v2380 = vpop.xlane.xlu0 %2379
    %v2381 = vsel %vm50, %v2377, 0.0
    %2382 = vadd.xlane.f32.xlu0 %v2381
    %v2383 = vpop.xlane.xlu0 %2382
    %v2384 = vmul.f32 %v2380, %v57
    %v2385 = vmul.f32 %v2383, %v57
    %v2386 = vadd.f32 %v2384, 1e-06
    %v2387 = vadd.f32 %v2385, 1e-06
    %v2388 = vrsqrt.pop %v2386
    %v2389 = vrsqrt.pop %v2387
    %v2390 = vmul.f32 %v2373, %v2388
    %v2391 = vmul.f32 %v2374, %v2389
    %v2393 = vlaneseq
    %v2394 = vshrl.u32 %v2393, 7
    %v2395 = vsub.s32 0, %v2394
    %v2396 = vrot.slane %v2375, %v2395
    %v2398 = vmul.f32 %v2390, %v2396
    %v2399 = vmul.f32 %v2391, %v2396
    %v2400 = vld [vmem:[%s10] sm:$0xff]
    %v2401 = vld [vmem:[%s10 + $0x8] sm:$0xff]
    %v2402 = vld [vmem:[%s10 + $0x10] sm:$0xff]
    %v2403 = vld [vmem:[%s10 + $0x18] sm:$0xff]
    %v2405 = vsel %vm50, %v2398, 0
    %v2408 = vsel %vm50, %v2399, 0
    %2410 = vmatprep.subr.mxu0 0.0
    %2411 = vmatpush1.msra.mxu0 %v2400
    %2412 = vmatprep.subr.mxu0 0.0
    %2413 = vmatpush1.msra.mxu0 %v2401
    %2414 = vmatprep.subr.mxu0 0.0
    %2415 = vmatpush1.msra.mxu0 %v2402
    %2416 = vmatprep.subr.mxu0 0.0
    %2417 = vmatpush1.msra.mxu0 %v2403
    %2418 = vmatprep.subr.mxu0 0.0
    %2419 = vmatpush1.msra.mxu0 0.0
    %2420 = vmatprep.subr.mxu0 0.0
    %2421 = vmatpush1.msra.mxu0 0.0
    %2422 = vmatprep.subr.mxu0 0.0
    %2423 = vmatpush1.msra.mxu0 0.0
    %2424 = vmatprep.subr.mxu0 0.0
    %2425 = vmatpush1.msra.mxu0 0.0
    %2426 = vmatprep.subr.mxu0 0.0
    %2427 = vmatpush1.msra.mxu0 0.0
    %2428 = vmatprep.subr.mxu0 0.0
    %2429 = vmatpush1.msra.mxu0 0.0
    %2430 = vmatprep.subr.mxu0 0.0
    %2431 = vmatpush1.msra.mxu0 0.0
    %2432 = vmatprep.subr.mxu0 0.0
    %2433 = vmatpush1.msra.mxu0 0.0
    %2434 = vmatprep.subr.mxu0 0.0
    %2435 = vmatpush1.msra.mxu0 0.0
    %2436 = vmatprep.subr.mxu0 0.0
    %2437 = vmatpush1.msra.mxu0 0.0
    %2438 = vmatprep.subr.mxu0 0.0
    %2439 = vmatpush1.msra.mxu0 0.0
    %2440 = vmatprep.subr.mxu0 0.0
    %2441 = vmatpush1.msra.mxu0 0.0
    %2442 = vmatprep.subr.mxu0 0.0
    %2443 = vmatpush1.msra.mxu0 0.0
    %2444 = vmatprep.subr.mxu0 0.0
    %2445 = vmatpush1.msra.mxu0 0.0
    %2446 = vmatprep.subr.mxu0 0.0
    %2447 = vmatpush1.msra.mxu0 0.0
    %2448 = vmatprep.subr.mxu0 0.0
    %2449 = vmatpush1.msra.mxu0 0.0
    %2450 = vmatprep.subr.mxu0 0.0
    %2451 = vmatpush1.msra.mxu0 0.0
    %2452 = vmatprep.subr.mxu0 0.0
    %2453 = vmatpush1.msra.mxu0 0.0
    %2454 = vmatprep.subr.mxu0 0.0
    %2455 = vmatpush1.msra.mxu0 0.0
    %2456 = vmatprep.subr.mxu0 0.0
    %2457 = vmatpush1.msra.mxu0 0.0
    %2458 = vmatprep.subr.mxu0 0.0
    %2459 = vmatpush1.msra.mxu0 0.0
    %2460 = vmatprep.subr.mxu0 0.0
    %2461 = vmatpush1.msra.mxu0 0.0
    %2462 = vmatprep.subr.mxu0 0.0
    %2463 = vmatpush1.msra.mxu0 0.0
    %2464 = vmatprep.subr.mxu0 0.0
    %2465 = vmatpush1.msra.mxu0 0.0
    %2466 = vmatprep.subr.mxu0 0.0
    %2467 = vmatpush1.msra.mxu0 0.0
    %2468 = vmatprep.subr.mxu0 0.0
    %2469 = vmatpush1.msra.mxu0 0.0
    %2470 = vmatprep.subr.mxu0 0.0
    %2471 = vmatpush1.msra.mxu0 0.0
    %2472 = vmatprep.subr.mxu0 0.0
    %2473 = vmatpush1.msra.mxu0 0.0
    %2474 = vmatprep.mubr.f32.mxu0 0.0
    %2475 = vmatmul.mubr.f32.gmra.mrb[0].mxu0 %v2405
    %v2476 = vpop.f32.mrb[0].mxu0
    %v2477 = vadd.f32 0.0, %v2476
    %v2478 = vpop.f32.mrb[0].mxu0
    %2479 = vmatprep.mubr.f32.mxu0 0.0
    %2480 = vmatmul.mubr.f32.gmra.mrb[0].mxu0 %v2408
    %v2481 = vpop.f32.mrb[0].mxu0
    %v2482 = vadd.f32 0.0, %v2481
    %v2483 = vpop.f32.mrb[0].mxu0
    %2484 = vdwg.mxu0
    %v2485 = vld [vmem:[%s11] sm:$0xff]
    %v2486 = vld [vmem:[%s11 + $0x8] sm:$0xff]
    %v2487 = vld [vmem:[%s11 + $0x10] sm:$0xff]
    %v2488 = vld [vmem:[%s11 + $0x18] sm:$0xff]
    %2489 = vmatprep.subr.mxu0 0.0
    %2490 = vmatpush1.msra.mxu0 %v2485
    %2491 = vmatprep.subr.mxu0 0.0
    %2492 = vmatpush1.msra.mxu0 %v2486
    %2493 = vmatprep.subr.mxu0 0.0
    %2494 = vmatpush1.msra.mxu0 %v2487
    %2495 = vmatprep.subr.mxu0 0.0
    %2496 = vmatpush1.msra.mxu0 %v2488
    %2497 = vmatprep.subr.mxu0 0.0
    %2498 = vmatpush1.msra.mxu0 0.0
    %2499 = vmatprep.subr.mxu0 0.0
    %2500 = vmatpush1.msra.mxu0 0.0
    %2501 = vmatprep.subr.mxu0 0.0
    %2502 = vmatpush1.msra.mxu0 0.0
    %2503 = vmatprep.subr.mxu0 0.0
    %2504 = vmatpush1.msra.mxu0 0.0
    %2505 = vmatprep.subr.mxu0 0.0
    %2506 = vmatpush1.msra.mxu0 0.0
    %2507 = vmatprep.subr.mxu0 0.0
    %2508 = vmatpush1.msra.mxu0 0.0
    %2509 = vmatprep.subr.mxu0 0.0
    %2510 = vmatpush1.msra.mxu0 0.0
    %2511 = vmatprep.subr.mxu0 0.0
    %2512 = vmatpush1.msra.mxu0 0.0
    %2513 = vmatprep.subr.mxu0 0.0
    %2514 = vmatpush1.msra.mxu0 0.0
    %2515 = vmatprep.subr.mxu0 0.0
    %2516 = vmatpush1.msra.mxu0 0.0
    %2517 = vmatprep.subr.mxu0 0.0
    %2518 = vmatpush1.msra.mxu0 0.0
    %2519 = vmatprep.subr.mxu0 0.0
    %2520 = vmatpush1.msra.mxu0 0.0
    %2521 = vmatprep.subr.mxu0 0.0
    %2522 = vmatpush1.msra.mxu0 0.0
    %2523 = vmatprep.subr.mxu0 0.0
    %2524 = vmatpush1.msra.mxu0 0.0
    %2525 = vmatprep.subr.mxu0 0.0
    %2526 = vmatpush1.msra.mxu0 0.0
    %2527 = vmatprep.subr.mxu0 0.0
    %2528 = vmatpush1.msra.mxu0 0.0
    %2529 = vmatprep.subr.mxu0 0.0
    %2530 = vmatpush1.msra.mxu0 0.0
    %2531 = vmatprep.subr.mxu0 0.0
    %2532 = vmatpush1.msra.mxu0 0.0
    %2533 = vmatprep.subr.mxu0 0.0
    %2534 = vmatpush1.msra.mxu0 0.0
    %2535 = vmatprep.subr.mxu0 0.0
    %2536 = vmatpush1.msra.mxu0 0.0
    %2537 = vmatprep.subr.mxu0 0.0
    %2538 = vmatpush1.msra.mxu0 0.0
    %2539 = vmatprep.subr.mxu0 0.0
    %2540 = vmatpush1.msra.mxu0 0.0
    %2541 = vmatprep.subr.mxu0 0.0
    %2542 = vmatpush1.msra.mxu0 0.0
    %2543 = vmatprep.subr.mxu0 0.0
    %2544 = vmatpush1.msra.mxu0 0.0
    %2545 = vmatprep.subr.mxu0 0.0
    %2546 = vmatpush1.msra.mxu0 0.0
    %2547 = vmatprep.subr.mxu0 0.0
    %2548 = vmatpush1.msra.mxu0 0.0
    %2549 = vmatprep.subr.mxu0 0.0
    %2550 = vmatpush1.msra.mxu0 0.0
    %2551 = vmatprep.subr.mxu0 0.0
    %2552 = vmatpush1.msra.mxu0 0.0
    %2553 = vmatprep.mubr.f32.mxu0 0.0
    %2554 = vmatmul.mubr.f32.gmra.mrb[0].mxu0 %v2405
    %v2555 = vpop.f32.mrb[0].mxu0
    %v2556 = vadd.f32 0.0, %v2555
    %v2557 = vpop.f32.mrb[0].mxu0
    %2558 = vmatprep.mubr.f32.mxu0 0.0
    %2559 = vmatmul.mubr.f32.gmra.mrb[0].mxu0 %v2408
    %v2560 = vpop.f32.mrb[0].mxu0
    %v2561 = vadd.f32 0.0, %v2560
    %v2562 = vpop.f32.mrb[0].mxu0
    %2563 = vdwg.mxu0
    %v2564 = vxor.u32 %v2477, 2147483648
    %v2565 = vxor.u32 %v2482, 2147483648
    %v2566 = vmul.f32 %v2564, 1.442695
    %v2567 = vpow.pop %v2566
    %v2568 = vmul.f32 %v2565, 1.442695
    %v2569 = vpow.pop %v2568
    %v2570 = vadd.f32 %v2567, 1.0
    %v2571 = vadd.f32 %v2569, 1.0
    %v2572 = vrcp.pop %v2570
    %v2573 = vmul.f32 1.0, %v2572
    %v2574 = vrcp.pop %v2571
    %v2575 = vmul.f32 1.0, %v2574
    %v2576 = vmul.f32 %v2477, %v2573
    %v2577 = vmul.f32 %v2482, %v2575
    %v2578 = vmul.f32 %v2576, %v2556
    %v2579 = vmul.f32 %v2577, %v2561
    %v2580 = vld [vmem:[%s12] sm:$0xff]
    %v2581 = vld [vmem:[%s12 + $0x8] sm:$0xff]
    %v2582 = vld [vmem:[%s12 + $0x10] sm:$0xff]
    %v2583 = vld [vmem:[%s12 + $0x18] sm:$0xff]
    %v2584 = vld [vmem:[%s12 + $0x20] sm:$0xff]
    %v2585 = vld [vmem:[%s12 + $0x28] sm:$0xff]
    %v2586 = vld [vmem:[%s12 + $0x30] sm:$0xff]
    %v2587 = vld [vmem:[%s12 + $0x38] sm:$0xff]
    %vm2588 = vcmask 523264
    %v2590 = vsel %vm2588, %v2578, 0
    %v2593 = vsel %vm2588, %v2579, 0
    %2595 = vmatprep.subr.mxu0 0.0
    %2596 = vmatpush1.msra.mxu0 %v2580
    %2597 = vmatprep.subr.mxu0 0.0
    %2598 = vmatpush1.msra.mxu0 %v2581
    %2599 = vmatprep.subr.mxu0 0.0
    %2600 = vmatpush1.msra.mxu0 %v2582
    %2601 = vmatprep.subr.mxu0 0.0
    %2602 = vmatpush1.msra.mxu0 %v2583
    %2603 = vmatprep.subr.mxu0 0.0
    %2604 = vmatpush1.msra.mxu0 %v2584
    %2605 = vmatprep.subr.mxu0 0.0
    %2606 = vmatpush1.msra.mxu0 %v2585
    %2607 = vmatprep.subr.mxu0 0.0
    %2608 = vmatpush1.msra.mxu0 %v2586
    %2609 = vmatprep.subr.mxu0 0.0
    %2610 = vmatpush1.msra.mxu0 %v2587
    %2611 = vmatprep.subr.mxu0 0.0
    %2612 = vmatpush1.msra.mxu0 0.0
    %2613 = vmatprep.subr.mxu0 0.0
    %2614 = vmatpush1.msra.mxu0 0.0
    %2615 = vmatprep.subr.mxu0 0.0
    %2616 = vmatpush1.msra.mxu0 0.0
    %2617 = vmatprep.subr.mxu0 0.0
    %2618 = vmatpush1.msra.mxu0 0.0
    %2619 = vmatprep.subr.mxu0 0.0
    %2620 = vmatpush1.msra.mxu0 0.0
    %2621 = vmatprep.subr.mxu0 0.0
    %2622 = vmatpush1.msra.mxu0 0.0
    %2623 = vmatprep.subr.mxu0 0.0
    %2624 = vmatpush1.msra.mxu0 0.0
    %2625 = vmatprep.subr.mxu0 0.0
    %2626 = vmatpush1.msra.mxu0 0.0
    %2627 = vmatprep.subr.mxu0 0.0
    %2628 = vmatpush1.msra.mxu0 0.0
    %2629 = vmatprep.subr.mxu0 0.0
    %2630 = vmatpush1.msra.mxu0 0.0
    %2631 = vmatprep.subr.mxu0 0.0
    %2632 = vmatpush1.msra.mxu0 0.0
    %2633 = vmatprep.subr.mxu0 0.0
    %2634 = vmatpush1.msra.mxu0 0.0
    %2635 = vmatprep.subr.mxu0 0.0
    %2636 = vmatpush1.msra.mxu0 0.0
    %2637 = vmatprep.subr.mxu0 0.0
    %2638 = vmatpush1.msra.mxu0 0.0
    %2639 = vmatprep.subr.mxu0 0.0
    %2640 = vmatpush1.msra.mxu0 0.0
    %2641 = vmatprep.subr.mxu0 0.0
    %2642 = vmatpush1.msra.mxu0 0.0
    %2643 = vmatprep.subr.mxu0 0.0
    %2644 = vmatpush1.msra.mxu0 0.0
    %2645 = vmatprep.subr.mxu0 0.0
    %2646 = vmatpush1.msra.mxu0 0.0
    %2647 = vmatprep.subr.mxu0 0.0
    %2648 = vmatpush1.msra.mxu0 0.0
    %2649 = vmatprep.subr.mxu0 0.0
    %2650 = vmatpush1.msra.mxu0 0.0
    %2651 = vmatprep.subr.mxu0 0.0
    %2652 = vmatpush1.msra.mxu0 0.0
    %2653 = vmatprep.subr.mxu0 0.0
    %2654 = vmatpush1.msra.mxu0 0.0
    %2655 = vmatprep.subr.mxu0 0.0
    %2656 = vmatpush1.msra.mxu0 0.0
    %2657 = vmatprep.subr.mxu0 0.0
    %2658 = vmatpush1.msra.mxu0 0.0
    %2659 = vmatprep.mubr.f32.mxu0 0.0
    %2660 = vmatmul.mubr.f32.gmra.mrb[0].mxu0 %v2590
    %v2661 = vpop.f32.mrb[0].mxu0
    %v2662 = vadd.f32 0.0, %v2661
    %v2663 = vpop.f32.mrb[0].mxu0
    %2664 = vmatprep.mubr.f32.mxu0 0.0
    %2665 = vmatmul.mubr.f32.gmra.mrb[0].mxu0 %v2593
    %v2666 = vpop.f32.mrb[0].mxu0
    %v2667 = vadd.f32 0.0, %v2666
    %v2668 = vpop.f32.mrb[0].mxu0
    %2669 = vdwg.mxu0
    %v2670 = vadd.f32 %v2373, %v2662
    %v2671 = vadd.f32 %v2374, %v2667
    %2672 = vst.msk [vmem:[#allocation2] sm:$0xff] %vm50, %v2670
    %2673 = vst.msk [vmem:[#allocation2 + $0x8] sm:$0xff] %vm50, %v2671
    // Predicated region
    $region54: #{block_pallas.1} parent=1 // pred_check
      _
    $region55: #{block_pallas.1} parent=1 // pred_check_branch
      %2675 = sbr.rel (0) target = $region57
    $region56: #{block_pallas.1} parent=1 // pred_region
      %s2677 = ssub.s32 256, 256
      %2678 = vsyncadd [#allocation3], %s2677
      %s2679 = sshll.u32 [#allocation2], 4
      %s2680 = int_to_ptr.vmem [resolvable:$true] %s2679
      %2685 = dma.vmem_to_hbm [thread:$0]  %s2680, 256, %s13, [#allocation3], 128, 128, 8
    $region57: #{block_pallas.1} parent=1 // pred_fallthru
      _
    // Predicated region
    $region58: #{block_pallas.1} parent=1 // pred_check
      _
    $region59: #{block_pallas.1} parent=1 // pred_check_branch
      %2687 = sbr.rel (0) target = $region61
    $region60: #{block_pallas.1} parent=1 // pred_region
      %2688 = dma.done [#allocation3], 256
    $region61: #{block_pallas.1} parent=1 // pred_fallthru
      _
    %2689 = vsyncpa [#allocation3], 1

</llo_original>
